<compile_context>
chip_gen: v6e
topology: v6e:2x2x1
jax: 0.10.0
libtpu: 0.0.40
codegen_flags: <defaults>
</compile_context>

<pallas_src>
import functools

import jax
import jax.numpy as jnp
from jax import lax
from jax.experimental import pallas as pl
from jax.experimental.pallas import tpu as pltpu

NEG_SLOPE = 0.2
BN_EPS = 1e-5
KW = 4        # kernel size
PAD = 2       # int(ceil((4 - 1) / 2))

# Scoped-VMEM budget: safe on every generation (v7x has 64 MiB/TC).  On
# v5e/v6e (128 MiB) this can be raised together with 1024-lane tiles for
# production-size inputs.
VMEM_LIMIT_BYTES = 32 * 1024 * 1024
P_TILE_MAX = 512


def _round_up(x, m):
    return (x + m - 1) // m * m


def _pick_tile(p_rows):
    """Lane tile and padded P.  P is padded up to a multiple of the tile so we
    never fall back to narrow 128-lane tiles; zero-padded columns stay exactly
    zero through the no-bias convs, so BN statistics remain correct."""
    p128 = _round_up(p_rows, 128)
    if p128 <= P_TILE_MAX:
        return p128, p128
    return P_TILE_MAX, _round_up(p_rows, P_TILE_MAX)


# ---------------------------------------------------------------------------
# Pallas kernels
# ---------------------------------------------------------------------------
def _conv_bias_kernel(p_ref, w_ref, b_ref, o_ref, *, apply_lrelu):
    """[Cout,K] @ [K,P_tile] on the MXU (bf16 in, f32 acc) + bias (+LeakyReLU)."""
    acc = jnp.dot(w_ref[...], p_ref[...], preferred_element_type=jnp.float32)
    acc = acc + b_ref[...]                      # bias broadcast over lanes (P)
    if apply_lrelu:
        acc = jnp.where(acc >= 0, acc, NEG_SLOPE * acc)
    o_ref[...] = acc.astype(o_ref.dtype)


def _conv_bn_lrelu_kernel(p_ref, w_ref, g_ref, b_ref, o_ref,
                          y_vmem, sum_ref, sq_ref, scale_ref, shift_ref,
                          *, inv_count):
    """Fused no-bias conv + training-mode BatchNorm + LeakyReLU.

    grid = (2, J): phase 0 runs the MXU matmul per P tile, parks the f32 result
    in VMEM scratch and accumulates per-channel sum / sum-of-squares; phase 1
    computes scale/shift once (j == 0) and normalizes + activates every tile.
    """
    ph = pl.program_id(0)
    j = pl.program_id(1)

    @pl.when((ph == 0) & (j == 0))
    def _init():
        sum_ref[...] = jnp.zeros_like(sum_ref)
        sq_ref[...] = jnp.zeros_like(sq_ref)

    @pl.when(ph == 0)
    def _conv_and_stats():
        acc = jnp.dot(w_ref[...], p_ref[...], preferred_element_type=jnp.float32)
        y_vmem[j] = acc
        sum_ref[...] += jnp.sum(acc, axis=1, keepdims=True)
        sq_ref[...] += jnp.sum(acc * acc, axis=1, keepdims=True)

    @pl.when((ph == 1) & (j == 0))
    def _finalize_stats():
        mean = sum_ref[...] * inv_count
        var = jnp.maximum(sq_ref[...] * inv_count - mean * mean, 0.0)  # biased
        scale = g_ref[...] * lax.rsqrt(var + BN_EPS)
        scale_ref[...] = scale
        shift_ref[...] = b_ref[...] - mean * scale

    @pl.when(ph == 1)
    def _normalize():
        y = y_vmem[j] * scale_ref[...] + shift_ref[...]
        o_ref[...] = jnp.where(y >= 0, y, NEG_SLOPE * y).astype(o_ref.dtype)


# ---------------------------------------------------------------------------
# Glue: channel-major im2col (no transposes) + pallas_call wrappers
# ---------------------------------------------------------------------------
def _im2col_cp(a_cp, spatial, stride, p_pad):
    """[C, >=N*H*W] -> [C*KW*KW, P_pad] with K index = c*16 + ki*4 + kj
    (matches the OIHW weight reshape).  No transposes; padded P columns = 0."""
    n, h, w = spatial
    c = a_cp.shape[0]
    a = a_cp[:, : n * h * w].reshape(c, n, h, w)
    a = jnp.pad(a, ((0, 0), (0, 0), (PAD, PAD), (PAD, PAD)))
    ho = (h + 2 * PAD - KW) // stride + 1
    wo = (w + 2 * PAD - KW) // stride + 1
    views = []
    for ki in range(KW):
        for kj in range(KW):
            views.append(a[:, :, ki:ki + stride * ho:stride,
                            kj:kj + stride * wo:stride])
    patches = jnp.stack(views, axis=1).reshape(c * KW * KW, n * ho * wo)
    p_rows = n * ho * wo
    if p_pad > p_rows:
        patches = jnp.pad(patches, ((0, 0), (0, p_pad - p_rows)))
    return patches


def _conv_bias_layer(a_cp, spatial, w_oihw, bias, *, stride, apply_lrelu,
                     out_dtype):
    """Conv2d (with bias) as a P-tiled MXU matmul, lane-dense [Cout, P_pad]."""
    cout, cin, kh, kw = w_oihw.shape
    n, h, w = spatial
    ho = (h + 2 * PAD - kh) // stride + 1
    wo = (w + 2 * PAD - kw) // stride + 1
    p_rows = n * ho * wo
    p_tile, p_pad = _pick_tile(p_rows)
    k = cin * kh * kw

    # TODO(synk): stream the 16 conv windows from HBM inside the kernel
    # (memory_space=pl.ANY + reduction grid axis over (kh,kw)) instead of
    # materializing the [K, P] patch matrix (16x activation-read amplification
    # at production pix2pix sizes).
    patches = _im2col_cp(a_cp.astype(jnp.bfloat16), spatial, stride, p_pad)
    w_mat = w_oihw.reshape(cout, k).astype(jnp.bfloat16)
    b_mat = bias.reshape(cout, 1).astype(jnp.float32)

    cost = pl.CostEstimate(
        flops=int(2 * p_pad * k * cout), transcendentals=0,
        bytes_accessed=int(patches.size * 2 + w_mat.size * 2
                           + cout * p_pad * jnp.dtype(out_dtype).itemsize))
    y = pl.pallas_call(
        functools.partial(_conv_bias_kernel, apply_lrelu=apply_lrelu),
        grid=(p_pad // p_tile,),
        in_specs=[pl.BlockSpec((k, p_tile), lambda j: (0, j)),
                  pl.BlockSpec((cout, k), lambda j: (0, 0)),   # resident weights
                  pl.BlockSpec((cout, 1), lambda j: (0, 0))],  # resident bias
        out_specs=pl.BlockSpec((cout, p_tile), lambda j: (0, j)),
        out_shape=jax.ShapeDtypeStruct((cout, p_pad), out_dtype),
        compiler_params=pltpu.CompilerParams(
            dimension_semantics=("parallel",),    # megacore-shardable (v7x)
            vmem_limit_bytes=VMEM_LIMIT_BYTES),
        cost_estimate=cost,
    )(patches, w_mat, b_mat)
    return y, (n, ho, wo)


def _conv_bn_lrelu_layer(a_cp, spatial, w_oihw, gamma, beta, *, stride):
    """Fused no-bias Conv2d + BatchNorm(batch stats) + LeakyReLU in ONE call."""
    cout, cin, kh, kw = w_oihw.shape
    n, h, w = spatial
    ho = (h + 2 * PAD - kh) // stride + 1
    wo = (w + 2 * PAD - kw) // stride + 1
    p_rows = n * ho * wo
    p_tile, p_pad = _pick_tile(p_rows)
    jt = p_pad // p_tile
    k = cin * kh * kw

    patches = _im2col_cp(a_cp.astype(jnp.bfloat16), spatial, stride, p_pad)
    w_mat = w_oihw.reshape(cout, k).astype(jnp.bfloat16)
    g_mat = gamma.reshape(cout, 1).astype(jnp.float32)
    b_mat = beta.reshape(cout, 1).astype(jnp.float32)

    cost = pl.CostEstimate(
        flops=int(2 * p_pad * k * cout + 6 * p_pad * cout),
        transcendentals=int(cout),
        bytes_accessed=int(patches.size * 2 + w_mat.size * 2 + cout * p_pad * 2))

    # TODO(synk): on v7x, split the stats phase across the two TensorCores
    # (per-core partial sums combined in phase 1); irrelevant at 1-2 grid steps.
    # TODO(synk): for very large P where the f32 y scratch would overflow VMEM,
    # fall back to recomputing the matmul in phase 1 instead of caching it.
    y = pl.pallas_call(
        functools.partial(_conv_bn_lrelu_kernel, inv_count=1.0 / float(p_rows)),
        grid=(2, jt),
        in_specs=[
            # phase 1 does not need patches: pin them to block 0 (one DMA).
            pl.BlockSpec((k, p_tile), lambda ph, j: (0, j * (1 - ph))),
            pl.BlockSpec((cout, k), lambda ph, j: (0, 0)),
            pl.BlockSpec((cout, 1), lambda ph, j: (0, 0)),
            pl.BlockSpec((cout, 1), lambda ph, j: (0, 0)),
        ],
        # phase 0 never touches the output: keep it pinned to block 0 so no
        # garbage tile is ever written back; phase 1 walks the P tiles.
        out_specs=pl.BlockSpec((cout, p_tile), lambda ph, j: (0, j * ph)),
        out_shape=jax.ShapeDtypeStruct((cout, p_pad), jnp.bfloat16),
        scratch_shapes=[pltpu.VMEM((jt, cout, p_tile), jnp.float32),  # y cache
                        pltpu.VMEM((cout, 1), jnp.float32),           # sum
                        pltpu.VMEM((cout, 1), jnp.float32),           # sumsq
                        pltpu.VMEM((cout, 1), jnp.float32),           # scale
                        pltpu.VMEM((cout, 1), jnp.float32)],          # shift
        compiler_params=pltpu.CompilerParams(
            dimension_semantics=("arbitrary", "arbitrary"),
            vmem_limit_bytes=VMEM_LIMIT_BYTES),
        cost_estimate=cost,
    )(patches, w_mat, g_mat, b_mat)
    return y, (n, ho, wo)


# ---------------------------------------------------------------------------
# Forward pass (NCHW in / NCHW out, like the PyTorch module)
# ---------------------------------------------------------------------------
def nlayer_discriminator_forward(x_nchw, params):
    n, cin, h, w = x_nchw.shape
    # One tiny input transpose into the channel-major [C, N*H*W] working layout
    # used by every kernel (lane-dense P axis); no per-layer NHWC plumbing.
    a = jnp.transpose(x_nchw, (1, 0, 2, 3)).reshape(cin, n * h * w)
    spatial = (n, h, w)

    # layer 0: Conv(s2, bias) + LeakyReLU (fused epilogue), bf16 activation out
    a, spatial = _conv_bias_layer(a, spatial, params["w0"], params["b0"],
                                  stride=2, apply_lrelu=True,
                                  out_dtype=jnp.bfloat16)

    # layers 1..3: fused Conv(no bias) + BatchNorm(batch stats) + LeakyReLU
    for wk, gk, bk, s in (("w1", "g1", "be1", 2),
                          ("w2", "g2", "be2", 2),
                          ("w3", "g3", "be3", 1)):
        a, spatial = _conv_bn_lrelu_layer(a, spatial, params[wk], params[gk],
                                          params[bk], stride=s)

    # layer 4: Conv(s1, bias) -> 1 channel, no activation (use_sigmoid=False)
    y, (n4, ho, wo) = _conv_bias_layer(a, spatial, params["w4"], params["b4"],
                                       stride=1, apply_lrelu=False,
                                       out_dtype=jnp.float32)
    out = y[:, :n4 * ho * wo].reshape(1, n4, ho, wo)
    return jnp.transpose(out, (1, 0, 2, 3))                           # NCHW


# ---------------------------------------------------------------------------
# Pure-JAX f32 reference (for correctness check)
# ---------------------------------------------------------------------------
def _ref_conv(x, w, b, stride, pad):
    y = lax.conv_general_dilated(
        x, w, (stride, stride), [(pad, pad), (pad, pad)],
        dimension_numbers=("NCHW", "OIHW", "NCHW"))
    return y + b.reshape(1, -1, 1, 1)


def _ref_lrelu(x):
    return jnp.where(x >= 0, x, NEG_SLOPE * x)


def _ref_bn_lrelu(x, g, b):
    m = jnp.mean(x, axis=(0, 2, 3), keepdims=True)
    v = jnp.mean(jnp.square(x - m), axis=(0, 2, 3), keepdims=True)
    y = (x - m) * lax.rsqrt(v + BN_EPS) * g.reshape(1, -1, 1, 1) + b.reshape(1, -1, 1, 1)
    return _ref_lrelu(y)


def reference_forward(x, p):
    z = jnp.zeros
    y = _ref_lrelu(_ref_conv(x, p["w0"], p["b0"], 2, 2))
    y = _ref_bn_lrelu(_ref_conv(y, p["w1"], z((p["w1"].shape[0],)), 2, 2), p["g1"], p["be1"])
    y = _ref_bn_lrelu(_ref_conv(y, p["w2"], z((p["w2"].shape[0],)), 2, 2), p["g2"], p["be2"])
    y = _ref_bn_lrelu(_ref_conv(y, p["w3"], z((p["w3"].shape[0],)), 1, 2), p["g3"], p["be3"])
    return _ref_conv(y, p["w4"], p["b4"], 1, 2)


# ---------------------------------------------------------------------------
# Deterministic parameter init (shapes from NLayerDiscriminator.__init__)
# ---------------------------------------------------------------------------
def init_params(key, input_nc=4, ndf=8):
    ks = jax.random.split(key, 16)
    f32 = jnp.float32

    def cw(k, cout, cin):
        return (0.05 * jax.random.normal(k, (cout, cin, 4, 4))).astype(f32)

    p = {}
    p["w0"] = cw(ks[0], ndf, input_nc)
    p["b0"] = (0.05 * jax.random.normal(ks[1], (ndf,))).astype(f32)
    p["w1"] = cw(ks[2], ndf * 2, ndf)
    p["g1"] = (1.0 + 0.1 * jax.random.normal(ks[3], (ndf * 2,))).astype(f32)
    p["be1"] = (0.1 * jax.random.normal(ks[4], (ndf * 2,))).astype(f32)
    p["w2"] = cw(ks[5], ndf * 4, ndf * 2)
    p["g2"] = (1.0 + 0.1 * jax.random.normal(ks[6], (ndf * 4,))).astype(f32)
    p["be2"] = (0.1 * jax.random.normal(ks[7], (ndf * 4,))).astype(f32)
    p["w3"] = cw(ks[8], ndf * 8, ndf * 4)
    p["g3"] = (1.0 + 0.1 * jax.random.normal(ks[9], (ndf * 8,))).astype(f32)
    p["be3"] = (0.1 * jax.random.normal(ks[10], (ndf * 8,))).astype(f32)
    p["w4"] = cw(ks[11], 1, ndf * 8)
    p["b4"] = (0.05 * jax.random.normal(ks[12], (1,))).astype(f32)
    return p


if __name__ == "__main__":
    key = jax.random.PRNGKey(0)
    k_x, k_p = jax.random.split(key)

    N, C_IN, H, W = 2, 4, 16, 16
    x = jax.random.normal(k_x, (N, C_IN, H, W), dtype=jnp.float32)
    params = init_params(k_p, input_nc=C_IN, ndf=8)

    fwd = jax.jit(nlayer_discriminator_forward)
    out = jax.block_until_ready(fwd(x, params))

    ref = jax.block_until_ready(reference_forward(x, params))
    assert out.shape == ref.shape == (N, 1, 5, 5), (out.shape, ref.shape)
    max_err = float(jnp.max(jnp.abs(out - ref)))
    # bf16 MXU operands / bf16 inter-layer activations vs pure-f32 reference.
    tol = 5e-2 * (1.0 + float(jnp.max(jnp.abs(ref))))
    assert max_err < tol, f"mismatch: max_err={max_err} tol={tol}"

    print("KERNEL_OK")
</pallas_src>

<mosaic_0001>
module attributes {stable_mosaic.version = 11 : i64} {
  func.func @_conv_bias_kernel(%arg0: i32, %arg1: memref<64x256xbf16, #tpu.memory_space<vmem>>, %arg2: memref<8x64xbf16, #tpu.memory_space<vmem>>, %arg3: memref<8x1xf32, #tpu.memory_space<vmem>>, %arg4: memref<8x256xbf16, #tpu.memory_space<vmem>>) attributes {dimension_semantics = [#tpu.dimension_semantics<parallel>], iteration_bounds = array<i64: 1>, scalar_prefetch = 0 : i64, scratch_operands = 0 : i64, tpu.core_type = #tpu.core_type<tc>, window_params = [{transform_indices = @transform_0, window_bounds = array<i64: 64, 256>}, {pipeline_mode = #tpu.pipeline_mode<synchronous>, transform_indices = @transform_1, window_bounds = array<i64: 8, 64>}, {pipeline_mode = #tpu.pipeline_mode<synchronous>, transform_indices = @transform_2, window_bounds = array<i64: 8, 1>}, {transform_indices = @transform_3, window_bounds = array<i64: 8, 256>}]} {
    %c0 = arith.constant 0 : index
    %c0_0 = arith.constant 0 : index
    %0 = vector.load %arg2[%c0, %c0_0] : memref<8x64xbf16, #tpu.memory_space<vmem>>, vector<8x64xbf16>
    %c0_1 = arith.constant 0 : index
    %c0_2 = arith.constant 0 : index
    %1 = vector.load %arg1[%c0_1, %c0_2] : memref<64x256xbf16, #tpu.memory_space<vmem>>, vector<64x256xbf16>
    %cst = arith.constant dense<0.000000e+00> : vector<8x256xf32>
    %2 = tpu.matmul %0, %1, %cst {dimension_numbers = #tpu.dot_dimension_numbers<[1], [0], [0], [1], [0, 0, 1, 1], [], []>} : vector<8x64xbf16>, vector<64x256xbf16>, vector<8x256xf32> -> vector<8x256xf32>
    %c0_3 = arith.constant 0 : index
    %c0_4 = arith.constant 0 : index
    %3 = vector.load %arg3[%c0_3, %c0_4] : memref<8x1xf32, #tpu.memory_space<vmem>>, vector<8x1xf32>
    %4 = vector.broadcast %3 : vector<8x1xf32> to vector<8x256xf32>
    %5 = arith.addf %2, %4 : vector<8x256xf32>
    %cst_5 = arith.constant 0.000000e+00 : f32
    %6 = vector.broadcast %cst_5 : f32 to vector<8x256xf32>
    %7 = arith.cmpf oge, %5, %6 : vector<8x256xf32>
    %cst_6 = arith.constant 2.000000e-01 : f32
    %8 = vector.broadcast %cst_6 : f32 to vector<8x256xf32>
    %9 = arith.mulf %8, %5 : vector<8x256xf32>
    %10 = arith.select %7, %5, %9 : vector<8x256xi1>, vector<8x256xf32>
    %11 = arith.truncf %10 : vector<8x256xf32> to vector<8x256xbf16>
    %c0_7 = arith.constant 0 : index
    %c0_8 = arith.constant 0 : index
    %12 = vector.load %arg4[%c0_7, %c0_8] : memref<8x256xbf16, #tpu.memory_space<vmem>>, vector<8x256xbf16>
    tpu.vector_store %arg4[%c0_7, %c0_8], %11 {strides = array<i32>} : memref<8x256xbf16, #tpu.memory_space<vmem>>, vector<8x256xbf16>,
    return
  }
  func.func @transform_0(%arg0: i32) -> (i32, i32) {
    %c0_i32 = arith.constant 0 : i32
    %c0_i32_0 = arith.constant 0 : i32
    return %c0_i32, %arg0 : i32, i32
  }
  func.func @transform_1(%arg0: i32) -> (i32, i32) {
    %c0_i32 = arith.constant 0 : i32
    %c0_i32_0 = arith.constant 0 : i32
    %c0_i32_1 = arith.constant 0 : i32
    return %c0_i32, %c0_i32_0 : i32, i32
  }
  func.func @transform_2(%arg0: i32) -> (i32, i32) {
    %c0_i32 = arith.constant 0 : i32
    %c0_i32_0 = arith.constant 0 : i32
    %c0_i32_1 = arith.constant 0 : i32
    return %c0_i32, %c0_i32_0 : i32, i32
  }
  func.func @transform_3(%arg0: i32) -> (i32, i32) {
    %c0_i32 = arith.constant 0 : i32
    %c0_i32_0 = arith.constant 0 : i32
    return %c0_i32, %arg0 : i32, i32
  }
}

module attributes {stable_mosaic.version = 11 : i64} {
  func.func @_conv_bn_lrelu_kernel(%arg0: i32, %arg1: i32, %arg2: memref<128x128xbf16, #tpu.memory_space<vmem>>, %arg3: memref<16x128xbf16, #tpu.memory_space<vmem>>, %arg4: memref<16x1xf32, #tpu.memory_space<vmem>>, %arg5: memref<16x1xf32, #tpu.memory_space<vmem>>, %arg6: memref<16x128xbf16, #tpu.memory_space<vmem>>, %arg7: memref<1x16x128xf32, #tpu.memory_space<vmem>>, %arg8: memref<16x1xf32, #tpu.memory_space<vmem>>, %arg9: memref<16x1xf32, #tpu.memory_space<vmem>>, %arg10: memref<16x1xf32, #tpu.memory_space<vmem>>, %arg11: memref<16x1xf32, #tpu.memory_space<vmem>>) attributes {dimension_semantics = [#tpu.dimension_semantics<arbitrary>, #tpu.dimension_semantics<arbitrary>], iteration_bounds = array<i64: 2, 1>, scalar_prefetch = 0 : i64, scratch_operands = 5 : i64, tpu.core_type = #tpu.core_type<tc>, window_params = [{transform_indices = @transform_0, window_bounds = array<i64: 128, 128>}, {pipeline_mode = #tpu.pipeline_mode<synchronous>, transform_indices = @transform_1, window_bounds = array<i64: 16, 128>}, {pipeline_mode = #tpu.pipeline_mode<synchronous>, transform_indices = @transform_2, window_bounds = array<i64: 16, 1>}, {pipeline_mode = #tpu.pipeline_mode<synchronous>, transform_indices = @transform_3, window_bounds = array<i64: 16, 1>}, {transform_indices = @transform_4, window_bounds = array<i64: 16, 128>}]} {
    %c0_i32 = arith.constant 0 : i32
    %0 = arith.cmpi eq, %arg0, %c0_i32 : i32
    %c0_i32_0 = arith.constant 0 : i32
    %1 = arith.cmpi eq, %arg1, %c0_i32_0 : i32
    %2 = arith.andi %0, %1 : i1
    %3 = arith.extui %2 : i1 to i32
    %c0_i32_1 = arith.constant 0 : i32
    %4 = arith.cmpi ne, %3, %c0_i32_1 : i32
    scf.if %4 {
      %cst = arith.constant 0.000000e+00 : f32
      %16 = vector.broadcast %cst : f32 to vector<16x1xf32>
      %c0 = arith.constant 0 : index
      %c0_8 = arith.constant 0 : index
      %17 = vector.load %arg8[%c0, %c0_8] : memref<16x1xf32, #tpu.memory_space<vmem>>, vector<16x1xf32>
      tpu.vector_store %arg8[%c0, %c0_8], %16 {strides = array<i32>} : memref<16x1xf32, #tpu.memory_space<vmem>>, vector<16x1xf32>,
      %cst_9 = arith.constant 0.000000e+00 : f32
      %18 = vector.broadcast %cst_9 : f32 to vector<16x1xf32>
      %c0_10 = arith.constant 0 : index
      %c0_11 = arith.constant 0 : index
      %19 = vector.load %arg9[%c0_10, %c0_11] : memref<16x1xf32, #tpu.memory_space<vmem>>, vector<16x1xf32>
      tpu.vector_store %arg9[%c0_10, %c0_11], %18 {strides = array<i32>} : memref<16x1xf32, #tpu.memory_space<vmem>>, vector<16x1xf32>,
    } else {
    }
    %c0_i32_2 = arith.constant 0 : i32
    %5 = arith.cmpi eq, %arg0, %c0_i32_2 : i32
    %6 = arith.extui %5 : i1 to i32
    %c0_i32_3 = arith.constant 0 : i32
    %7 = arith.cmpi ne, %6, %c0_i32_3 : i32
    scf.if %7 {
      %c0 = arith.constant 0 : index
      %c0_8 = arith.constant 0 : index
      %16 = vector.load %arg3[%c0, %c0_8] : memref<16x128xbf16, #tpu.memory_space<vmem>>, vector<16x128xbf16>
      %c0_9 = arith.constant 0 : index
      %c0_10 = arith.constant 0 : index
      %17 = vector.load %arg2[%c0_9, %c0_10] : memref<128x128xbf16, #tpu.memory_space<vmem>>, vector<128x128xbf16>
      %cst = arith.constant dense<0.000000e+00> : vector<16x128xf32>
      %18 = tpu.matmul %16, %17, %cst {dimension_numbers = #tpu.dot_dimension_numbers<[1], [0], [0], [1], [0, 0, 1, 1], [], []>} : vector<16x128xbf16>, vector<128x128xbf16>, vector<16x128xf32> -> vector<16x128xf32>
      %19 = arith.index_cast %arg1 : i32 to index
      %c0_11 = arith.constant 0 : index
      %c0_12 = arith.constant 0 : index
      %20 = vector.load %arg7[%19, %c0_11, %c0_12] : memref<1x16x128xf32, #tpu.memory_space<vmem>>, vector<1x16x128xf32>
      %21 = vector.shape_cast %20 : vector<1x16x128xf32> to vector<16x128xf32>
      %22 = vector.shape_cast %18 : vector<16x128xf32> to vector<1x16x128xf32>
      tpu.vector_store %arg7[%19, %c0_11, %c0_12], %22 {strides = array<i32>} : memref<1x16x128xf32, #tpu.memory_space<vmem>>, vector<1x16x128xf32>,
      %c0_13 = arith.constant 0 : index
      %c0_14 = arith.constant 0 : index
      %23 = vector.load %arg8[%c0_13, %c0_14] : memref<16x1xf32, #tpu.memory_space<vmem>>, vector<16x1xf32>
      %cst_15 = arith.constant dense<0.000000e+00> : vector<16xf32>
      %24 = vector.multi_reduction <add>, %18, %cst_15 [1] : vector<16x128xf32> to vector<16xf32>
      %25 = vector.shape_cast %24 : vector<16xf32> to vector<16x1xf32>
      %26 = arith.addf %23, %25 : vector<16x1xf32>
      %c0_16 = arith.constant 0 : index
      %c0_17 = arith.constant 0 : index
      %27 = vector.load %arg8[%c0_16, %c0_17] : memref<16x1xf32, #tpu.memory_space<vmem>>, vector<16x1xf32>
      tpu.vector_store %arg8[%c0_16, %c0_17], %26 {strides = array<i32>} : memref<16x1xf32, #tpu.memory_space<vmem>>, vector<16x1xf32>,
      %c0_18 = arith.constant 0 : index
      %c0_19 = arith.constant 0 : index
      %28 = vector.load %arg9[%c0_18, %c0_19] : memref<16x1xf32, #tpu.memory_space<vmem>>, vector<16x1xf32>
      %29 = arith.mulf %18, %18 : vector<16x128xf32>
      %cst_20 = arith.constant dense<0.000000e+00> : vector<16xf32>
      %30 = vector.multi_reduction <add>, %29, %cst_20 [1] : vector<16x128xf32> to vector<16xf32>
      %31 = vector.shape_cast %30 : vector<16xf32> to vector<16x1xf32>
      %32 = arith.addf %28, %31 : vector<16x1xf32>
      %c0_21 = arith.constant 0 : index
      %c0_22 = arith.constant 0 : index
      %33 = vector.load %arg9[%c0_21, %c0_22] : memref<16x1xf32, #tpu.memory_space<vmem>>, vector<16x1xf32>
      tpu.vector_store %arg9[%c0_21, %c0_22], %32 {strides = array<i32>} : memref<16x1xf32, #tpu.memory_space<vmem>>, vector<16x1xf32>,
    } else {
    }
    %c1_i32 = arith.constant 1 : i32
    %8 = arith.cmpi eq, %arg0, %c1_i32 : i32
    %c0_i32_4 = arith.constant 0 : i32
    %9 = arith.cmpi eq, %arg1, %c0_i32_4 : i32
    %10 = arith.andi %8, %9 : i1
    %11 = arith.extui %10 : i1 to i32
    %c0_i32_5 = arith.constant 0 : i32
    %12 = arith.cmpi ne, %11, %c0_i32_5 : i32
    scf.if %12 {
      %c0 = arith.constant 0 : index
      %c0_8 = arith.constant 0 : index
      %16 = vector.load %arg8[%c0, %c0_8] : memref<16x1xf32, #tpu.memory_space<vmem>>, vector<16x1xf32>
      %cst = arith.constant 2.000000e-02 : f32
      %17 = vector.broadcast %cst : f32 to vector<16x1xf32>
      %18 = arith.mulf %16, %17 : vector<16x1xf32>
      %c0_9 = arith.constant 0 : index
      %c0_10 = arith.constant 0 : index
      %19 = vector.load %arg9[%c0_9, %c0_10] : memref<16x1xf32, #tpu.memory_space<vmem>>, vector<16x1xf32>
      %cst_11 = arith.constant 2.000000e-02 : f32
      %20 = vector.broadcast %cst_11 : f32 to vector<16x1xf32>
      %21 = arith.mulf %19, %20 : vector<16x1xf32>
      %22 = arith.mulf %18, %18 : vector<16x1xf32>
      %23 = arith.subf %21, %22 : vector<16x1xf32>
      %cst_12 = arith.constant 0.000000e+00 : f32
      %24 = vector.broadcast %cst_12 : f32 to vector<16x1xf32>
      %25 = arith.maximumf %23, %24 : vector<16x1xf32>
      %c0_13 = arith.constant 0 : index
      %c0_14 = arith.constant 0 : index
      %26 = vector.load %arg4[%c0_13, %c0_14] : memref<16x1xf32, #tpu.memory_space<vmem>>, vector<16x1xf32>
      %cst_15 = arith.constant 9.99999974E-6 : f32
      %27 = vector.broadcast %cst_15 : f32 to vector<16x1xf32>
      %28 = arith.addf %25, %27 : vector<16x1xf32>
      %29 = math.rsqrt %28 : vector<16x1xf32>
      %30 = arith.mulf %26, %29 : vector<16x1xf32>
      %c0_16 = arith.constant 0 : index
      %c0_17 = arith.constant 0 : index
      %31 = vector.load %arg10[%c0_16, %c0_17] : memref<16x1xf32, #tpu.memory_space<vmem>>, vector<16x1xf32>
      tpu.vector_store %arg10[%c0_16, %c0_17], %30 {strides = array<i32>} : memref<16x1xf32, #tpu.memory_space<vmem>>, vector<16x1xf32>,
      %c0_18 = arith.constant 0 : index
      %c0_19 = arith.constant 0 : index
      %32 = vector.load %arg5[%c0_18, %c0_19] : memref<16x1xf32, #tpu.memory_space<vmem>>, vector<16x1xf32>
      %33 = arith.mulf %18, %30 : vector<16x1xf32>
      %34 = arith.subf %32, %33 : vector<16x1xf32>
      %c0_20 = arith.constant 0 : index
      %c0_21 = arith.constant 0 : index
      %35 = vector.load %arg11[%c0_20, %c0_21] : memref<16x1xf32, #tpu.memory_space<vmem>>, vector<16x1xf32>
      tpu.vector_store %arg11[%c0_20, %c0_21], %34 {strides = array<i32>} : memref<16x1xf32, #tpu.memory_space<vmem>>, vector<16x1xf32>,
    } else {
    }
    %c1_i32_6 = arith.constant 1 : i32
    %13 = arith.cmpi eq, %arg0, %c1_i32_6 : i32
    %14 = arith.extui %13 : i1 to i32
    %c0_i32_7 = arith.constant 0 : i32
    %15 = arith.cmpi ne, %14, %c0_i32_7 : i32
    scf.if %15 {
      %16 = arith.index_cast %arg1 : i32 to index
      %c0 = arith.constant 0 : index
      %c0_8 = arith.constant 0 : index
      %17 = vector.load %arg7[%16, %c0, %c0_8] : memref<1x16x128xf32, #tpu.memory_space<vmem>>, vector<1x16x128xf32>
      %18 = vector.shape_cast %17 : vector<1x16x128xf32> to vector<16x128xf32>
      %c0_9 = arith.constant 0 : index
      %c0_10 = arith.constant 0 : index
      %19 = vector.load %arg10[%c0_9, %c0_10] : memref<16x1xf32, #tpu.memory_space<vmem>>, vector<16x1xf32>
      %20 = vector.broadcast %19 : vector<16x1xf32> to vector<16x128xf32>
      %21 = arith.mulf %18, %20 : vector<16x128xf32>
      %c0_11 = arith.constant 0 : index
      %c0_12 = arith.constant 0 : index
      %22 = vector.load %arg11[%c0_11, %c0_12] : memref<16x1xf32, #tpu.memory_space<vmem>>, vector<16x1xf32>
      %23 = vector.broadcast %22 : vector<16x1xf32> to vector<16x128xf32>
      %24 = arith.addf %21, %23 : vector<16x128xf32>
      %cst = arith.constant 0.000000e+00 : f32
      %25 = vector.broadcast %cst : f32 to vector<16x128xf32>
      %26 = arith.cmpf oge, %24, %25 : vector<16x128xf32>
      %cst_13 = arith.constant 2.000000e-01 : f32
      %27 = vector.broadcast %cst_13 : f32 to vector<16x128xf32>
      %28 = arith.mulf %27, %24 : vector<16x128xf32>
      %29 = arith.select %26, %24, %28 : vector<16x128xi1>, vector<16x128xf32>
      %30 = arith.truncf %29 : vector<16x128xf32> to vector<16x128xbf16>
      %c0_14 = arith.constant 0 : index
      %c0_15 = arith.constant 0 : index
      %31 = vector.load %arg6[%c0_14, %c0_15] : memref<16x128xbf16, #tpu.memory_space<vmem>>, vector<16x128xbf16>
      tpu.vector_store %arg6[%c0_14, %c0_15], %30 {strides = array<i32>} : memref<16x128xbf16, #tpu.memory_space<vmem>>, vector<16x128xbf16>,
    } else {
    }
    return
  }
  func.func @transform_0(%arg0: i32, %arg1: i32) -> (i32, i32) {
    %c1_i32 = arith.constant 1 : i32
    %0 = arith.subi %c1_i32, %arg0 : i32
    %1 = arith.muli %arg1, %0 : i32
    %c0_i32 = arith.constant 0 : i32
    %c0_i32_0 = arith.constant 0 : i32
    return %c0_i32, %1 : i32, i32
  }
  func.func @transform_1(%arg0: i32, %arg1: i32) -> (i32, i32) {
    %c0_i32 = arith.constant 0 : i32
    %c0_i32_0 = arith.constant 0 : i32
    %c0_i32_1 = arith.constant 0 : i32
    return %c0_i32, %c0_i32_0 : i32, i32
  }
  func.func @transform_2(%arg0: i32, %arg1: i32) -> (i32, i32) {
    %c0_i32 = arith.constant 0 : i32
    %c0_i32_0 = arith.constant 0 : i32
    %c0_i32_1 = arith.constant 0 : i32
    return %c0_i32, %c0_i32_0 : i32, i32
  }
  func.func @transform_3(%arg0: i32, %arg1: i32) -> (i32, i32) {
    %c0_i32 = arith.constant 0 : i32
    %c0_i32_0 = arith.constant 0 : i32
    %c0_i32_1 = arith.constant 0 : i32
    return %c0_i32, %c0_i32_0 : i32, i32
  }
  func.func @transform_4(%arg0: i32, %arg1: i32) -> (i32, i32) {
    %0 = arith.muli %arg1, %arg0 : i32
    %c0_i32 = arith.constant 0 : i32
    %c0_i32_0 = arith.constant 0 : i32
    return %c0_i32, %0 : i32, i32
  }
}

module attributes {stable_mosaic.version = 11 : i64} {
  func.func @_conv_bn_lrelu_kernel(%arg0: i32, %arg1: i32, %arg2: memref<256x128xbf16, #tpu.memory_space<vmem>>, %arg3: memref<32x256xbf16, #tpu.memory_space<vmem>>, %arg4: memref<32x1xf32, #tpu.memory_space<vmem>>, %arg5: memref<32x1xf32, #tpu.memory_space<vmem>>, %arg6: memref<32x128xbf16, #tpu.memory_space<vmem>>, %arg7: memref<1x32x128xf32, #tpu.memory_space<vmem>>, %arg8: memref<32x1xf32, #tpu.memory_space<vmem>>, %arg9: memref<32x1xf32, #tpu.memory_space<vmem>>, %arg10: memref<32x1xf32, #tpu.memory_space<vmem>>, %arg11: memref<32x1xf32, #tpu.memory_space<vmem>>) attributes {dimension_semantics = [#tpu.dimension_semantics<arbitrary>, #tpu.dimension_semantics<arbitrary>], iteration_bounds = array<i64: 2, 1>, scalar_prefetch = 0 : i64, scratch_operands = 5 : i64, tpu.core_type = #tpu.core_type<tc>, window_params = [{transform_indices = @transform_0, window_bounds = array<i64: 256, 128>}, {pipeline_mode = #tpu.pipeline_mode<synchronous>, transform_indices = @transform_1, window_bounds = array<i64: 32, 256>}, {pipeline_mode = #tpu.pipeline_mode<synchronous>, transform_indices = @transform_2, window_bounds = array<i64: 32, 1>}, {pipeline_mode = #tpu.pipeline_mode<synchronous>, transform_indices = @transform_3, window_bounds = array<i64: 32, 1>}, {transform_indices = @transform_4, window_bounds = array<i64: 32, 128>}]} {
    %c0_i32 = arith.constant 0 : i32
    %0 = arith.cmpi eq, %arg0, %c0_i32 : i32
    %c0_i32_0 = arith.constant 0 : i32
    %1 = arith.cmpi eq, %arg1, %c0_i32_0 : i32
    %2 = arith.andi %0, %1 : i1
    %3 = arith.extui %2 : i1 to i32
    %c0_i32_1 = arith.constant 0 : i32
    %4 = arith.cmpi ne, %3, %c0_i32_1 : i32
    scf.if %4 {
      %cst = arith.constant 0.000000e+00 : f32
      %16 = vector.broadcast %cst : f32 to vector<32x1xf32>
      %c0 = arith.constant 0 : index
      %c0_8 = arith.constant 0 : index
      %17 = vector.load %arg8[%c0, %c0_8] : memref<32x1xf32, #tpu.memory_space<vmem>>, vector<32x1xf32>
      tpu.vector_store %arg8[%c0, %c0_8], %16 {strides = array<i32>} : memref<32x1xf32, #tpu.memory_space<vmem>>, vector<32x1xf32>,
      %cst_9 = arith.constant 0.000000e+00 : f32
      %18 = vector.broadcast %cst_9 : f32 to vector<32x1xf32>
      %c0_10 = arith.constant 0 : index
      %c0_11 = arith.constant 0 : index
      %19 = vector.load %arg9[%c0_10, %c0_11] : memref<32x1xf32, #tpu.memory_space<vmem>>, vector<32x1xf32>
      tpu.vector_store %arg9[%c0_10, %c0_11], %18 {strides = array<i32>} : memref<32x1xf32, #tpu.memory_space<vmem>>, vector<32x1xf32>,
    } else {
    }
    %c0_i32_2 = arith.constant 0 : i32
    %5 = arith.cmpi eq, %arg0, %c0_i32_2 : i32
    %6 = arith.extui %5 : i1 to i32
    %c0_i32_3 = arith.constant 0 : i32
    %7 = arith.cmpi ne, %6, %c0_i32_3 : i32
    scf.if %7 {
      %c0 = arith.constant 0 : index
      %c0_8 = arith.constant 0 : index
      %16 = vector.load %arg3[%c0, %c0_8] : memref<32x256xbf16, #tpu.memory_space<vmem>>, vector<32x256xbf16>
      %c0_9 = arith.constant 0 : index
      %c0_10 = arith.constant 0 : index
      %17 = vector.load %arg2[%c0_9, %c0_10] : memref<256x128xbf16, #tpu.memory_space<vmem>>, vector<256x128xbf16>
      %cst = arith.constant dense<0.000000e+00> : vector<32x128xf32>
      %18 = tpu.matmul %16, %17, %cst {dimension_numbers = #tpu.dot_dimension_numbers<[1], [0], [0], [1], [0, 0, 1, 1], [], []>} : vector<32x256xbf16>, vector<256x128xbf16>, vector<32x128xf32> -> vector<32x128xf32>
      %19 = arith.index_cast %arg1 : i32 to index
      %c0_11 = arith.constant 0 : index
      %c0_12 = arith.constant 0 : index
      %20 = vector.load %arg7[%19, %c0_11, %c0_12] : memref<1x32x128xf32, #tpu.memory_space<vmem>>, vector<1x32x128xf32>
      %21 = vector.shape_cast %20 : vector<1x32x128xf32> to vector<32x128xf32>
      %22 = vector.shape_cast %18 : vector<32x128xf32> to vector<1x32x128xf32>
      tpu.vector_store %arg7[%19, %c0_11, %c0_12], %22 {strides = array<i32>} : memref<1x32x128xf32, #tpu.memory_space<vmem>>, vector<1x32x128xf32>,
      %c0_13 = arith.constant 0 : index
      %c0_14 = arith.constant 0 : index
      %23 = vector.load %arg8[%c0_13, %c0_14] : memref<32x1xf32, #tpu.memory_space<vmem>>, vector<32x1xf32>
      %cst_15 = arith.constant dense<0.000000e+00> : vector<32xf32>
      %24 = vector.multi_reduction <add>, %18, %cst_15 [1] : vector<32x128xf32> to vector<32xf32>
      %25 = vector.shape_cast %24 : vector<32xf32> to vector<32x1xf32>
      %26 = arith.addf %23, %25 : vector<32x1xf32>
      %c0_16 = arith.constant 0 : index
      %c0_17 = arith.constant 0 : index
      %27 = vector.load %arg8[%c0_16, %c0_17] : memref<32x1xf32, #tpu.memory_space<vmem>>, vector<32x1xf32>
      tpu.vector_store %arg8[%c0_16, %c0_17], %26 {strides = array<i32>} : memref<32x1xf32, #tpu.memory_space<vmem>>, vector<32x1xf32>,
      %c0_18 = arith.constant 0 : index
      %c0_19 = arith.constant 0 : index
      %28 = vector.load %arg9[%c0_18, %c0_19] : memref<32x1xf32, #tpu.memory_space<vmem>>, vector<32x1xf32>
      %29 = arith.mulf %18, %18 : vector<32x128xf32>
      %cst_20 = arith.constant dense<0.000000e+00> : vector<32xf32>
      %30 = vector.multi_reduction <add>, %29, %cst_20 [1] : vector<32x128xf32> to vector<32xf32>
      %31 = vector.shape_cast %30 : vector<32xf32> to vector<32x1xf32>
      %32 = arith.addf %28, %31 : vector<32x1xf32>
      %c0_21 = arith.constant 0 : index
      %c0_22 = arith.constant 0 : index
      %33 = vector.load %arg9[%c0_21, %c0_22] : memref<32x1xf32, #tpu.memory_space<vmem>>, vector<32x1xf32>
      tpu.vector_store %arg9[%c0_21, %c0_22], %32 {strides = array<i32>} : memref<32x1xf32, #tpu.memory_space<vmem>>, vector<32x1xf32>,
    } else {
    }
    %c1_i32 = arith.constant 1 : i32
    %8 = arith.cmpi eq, %arg0, %c1_i32 : i32
    %c0_i32_4 = arith.constant 0 : i32
    %9 = arith.cmpi eq, %arg1, %c0_i32_4 : i32
    %10 = arith.andi %8, %9 : i1
    %11 = arith.extui %10 : i1 to i32
    %c0_i32_5 = arith.constant 0 : i32
    %12 = arith.cmpi ne, %11, %c0_i32_5 : i32
    scf.if %12 {
      %c0 = arith.constant 0 : index
      %c0_8 = arith.constant 0 : index
      %16 = vector.load %arg8[%c0, %c0_8] : memref<32x1xf32, #tpu.memory_space<vmem>>, vector<32x1xf32>
      %cst = arith.constant 0.055555556 : f32
      %17 = vector.broadcast %cst : f32 to vector<32x1xf32>
      %18 = arith.mulf %16, %17 : vector<32x1xf32>
      %c0_9 = arith.constant 0 : index
      %c0_10 = arith.constant 0 : index
      %19 = vector.load %arg9[%c0_9, %c0_10] : memref<32x1xf32, #tpu.memory_space<vmem>>, vector<32x1xf32>
      %cst_11 = arith.constant 0.055555556 : f32
      %20 = vector.broadcast %cst_11 : f32 to vector<32x1xf32>
      %21 = arith.mulf %19, %20 : vector<32x1xf32>
      %22 = arith.mulf %18, %18 : vector<32x1xf32>
      %23 = arith.subf %21, %22 : vector<32x1xf32>
      %cst_12 = arith.constant 0.000000e+00 : f32
      %24 = vector.broadcast %cst_12 : f32 to vector<32x1xf32>
      %25 = arith.maximumf %23, %24 : vector<32x1xf32>
      %c0_13 = arith.constant 0 : index
      %c0_14 = arith.constant 0 : index
      %26 = vector.load %arg4[%c0_13, %c0_14] : memref<32x1xf32, #tpu.memory_space<vmem>>, vector<32x1xf32>
      %cst_15 = arith.constant 9.99999974E-6 : f32
      %27 = vector.broadcast %cst_15 : f32 to vector<32x1xf32>
      %28 = arith.addf %25, %27 : vector<32x1xf32>
      %29 = math.rsqrt %28 : vector<32x1xf32>
      %30 = arith.mulf %26, %29 : vector<32x1xf32>
      %c0_16 = arith.constant 0 : index
      %c0_17 = arith.constant 0 : index
      %31 = vector.load %arg10[%c0_16, %c0_17] : memref<32x1xf32, #tpu.memory_space<vmem>>, vector<32x1xf32>
      tpu.vector_store %arg10[%c0_16, %c0_17], %30 {strides = array<i32>} : memref<32x1xf32, #tpu.memory_space<vmem>>, vector<32x1xf32>,
      %c0_18 = arith.constant 0 : index
      %c0_19 = arith.constant 0 : index
      %32 = vector.load %arg5[%c0_18, %c0_19] : memref<32x1xf32, #tpu.memory_space<vmem>>, vector<32x1xf32>
      %33 = arith.mulf %18, %30 : vector<32x1xf32>
      %34 = arith.subf %32, %33 : vector<32x1xf32>
      %c0_20 = arith.constant 0 : index
      %c0_21 = arith.constant 0 : index
      %35 = vector.load %arg11[%c0_20, %c0_21] : memref<32x1xf32, #tpu.memory_space<vmem>>, vector<32x1xf32>
      tpu.vector_store %arg11[%c0_20, %c0_21], %34 {strides = array<i32>} : memref<32x1xf32, #tpu.memory_space<vmem>>, vector<32x1xf32>,
    } else {
    }
    %c1_i32_6 = arith.constant 1 : i32
    %13 = arith.cmpi eq, %arg0, %c1_i32_6 : i32
    %14 = arith.extui %13 : i1 to i32
    %c0_i32_7 = arith.constant 0 : i32
    %15 = arith.cmpi ne, %14, %c0_i32_7 : i32
    scf.if %15 {
      %16 = arith.index_cast %arg1 : i32 to index
      %c0 = arith.constant 0 : index
      %c0_8 = arith.constant 0 : index
      %17 = vector.load %arg7[%16, %c0, %c0_8] : memref<1x32x128xf32, #tpu.memory_space<vmem>>, vector<1x32x128xf32>
      %18 = vector.shape_cast %17 : vector<1x32x128xf32> to vector<32x128xf32>
      %c0_9 = arith.constant 0 : index
      %c0_10 = arith.constant 0 : index
      %19 = vector.load %arg10[%c0_9, %c0_10] : memref<32x1xf32, #tpu.memory_space<vmem>>, vector<32x1xf32>
      %20 = vector.broadcast %19 : vector<32x1xf32> to vector<32x128xf32>
      %21 = arith.mulf %18, %20 : vector<32x128xf32>
      %c0_11 = arith.constant 0 : index
      %c0_12 = arith.constant 0 : index
      %22 = vector.load %arg11[%c0_11, %c0_12] : memref<32x1xf32, #tpu.memory_space<vmem>>, vector<32x1xf32>
      %23 = vector.broadcast %22 : vector<32x1xf32> to vector<32x128xf32>
      %24 = arith.addf %21, %23 : vector<32x128xf32>
      %cst = arith.constant 0.000000e+00 : f32
      %25 = vector.broadcast %cst : f32 to vector<32x128xf32>
      %26 = arith.cmpf oge, %24, %25 : vector<32x128xf32>
      %cst_13 = arith.constant 2.000000e-01 : f32
      %27 = vector.broadcast %cst_13 : f32 to vector<32x128xf32>
      %28 = arith.mulf %27, %24 : vector<32x128xf32>
      %29 = arith.select %26, %24, %28 : vector<32x128xi1>, vector<32x128xf32>
      %30 = arith.truncf %29 : vector<32x128xf32> to vector<32x128xbf16>
      %c0_14 = arith.constant 0 : index
      %c0_15 = arith.constant 0 : index
      %31 = vector.load %arg6[%c0_14, %c0_15] : memref<32x128xbf16, #tpu.memory_space<vmem>>, vector<32x128xbf16>
      tpu.vector_store %arg6[%c0_14, %c0_15], %30 {strides = array<i32>} : memref<32x128xbf16, #tpu.memory_space<vmem>>, vector<32x128xbf16>,
    } else {
    }
    return
  }
  func.func @transform_0(%arg0: i32, %arg1: i32) -> (i32, i32) {
    %c1_i32 = arith.constant 1 : i32
    %0 = arith.subi %c1_i32, %arg0 : i32
    %1 = arith.muli %arg1, %0 : i32
    %c0_i32 = arith.constant 0 : i32
    %c0_i32_0 = arith.constant 0 : i32
    return %c0_i32, %1 : i32, i32
  }
  func.func @transform_1(%arg0: i32, %arg1: i32) -> (i32, i32) {
    %c0_i32 = arith.constant 0 : i32
    %c0_i32_0 = arith.constant 0 : i32
    %c0_i32_1 = arith.constant 0 : i32
    return %c0_i32, %c0_i32_0 : i32, i32
  }
  func.func @transform_2(%arg0: i32, %arg1: i32) -> (i32, i32) {
    %c0_i32 = arith.constant 0 : i32
    %c0_i32_0 = arith.constant 0 : i32
    %c0_i32_1 = arith.constant 0 : i32
    return %c0_i32, %c0_i32_0 : i32, i32
  }
  func.func @transform_3(%arg0: i32, %arg1: i32) -> (i32, i32) {
    %c0_i32 = arith.constant 0 : i32
    %c0_i32_0 = arith.constant 0 : i32
    %c0_i32_1 = arith.constant 0 : i32
    return %c0_i32, %c0_i32_0 : i32, i32
  }
  func.func @transform_4(%arg0: i32, %arg1: i32) -> (i32, i32) {
    %0 = arith.muli %arg1, %arg0 : i32
    %c0_i32 = arith.constant 0 : i32
    %c0_i32_0 = arith.constant 0 : i32
    return %c0_i32, %0 : i32, i32
  }
}

module attributes {stable_mosaic.version = 11 : i64} {
  func.func @_conv_bn_lrelu_kernel(%arg0: i32, %arg1: i32, %arg2: memref<512x128xbf16, #tpu.memory_space<vmem>>, %arg3: memref<64x512xbf16, #tpu.memory_space<vmem>>, %arg4: memref<64x1xf32, #tpu.memory_space<vmem>>, %arg5: memref<64x1xf32, #tpu.memory_space<vmem>>, %arg6: memref<64x128xbf16, #tpu.memory_space<vmem>>, %arg7: memref<1x64x128xf32, #tpu.memory_space<vmem>>, %arg8: memref<64x1xf32, #tpu.memory_space<vmem>>, %arg9: memref<64x1xf32, #tpu.memory_space<vmem>>, %arg10: memref<64x1xf32, #tpu.memory_space<vmem>>, %arg11: memref<64x1xf32, #tpu.memory_space<vmem>>) attributes {dimension_semantics = [#tpu.dimension_semantics<arbitrary>, #tpu.dimension_semantics<arbitrary>], iteration_bounds = array<i64: 2, 1>, scalar_prefetch = 0 : i64, scratch_operands = 5 : i64, tpu.core_type = #tpu.core_type<tc>, window_params = [{transform_indices = @transform_0, window_bounds = array<i64: 512, 128>}, {pipeline_mode = #tpu.pipeline_mode<synchronous>, transform_indices = @transform_1, window_bounds = array<i64: 64, 512>}, {pipeline_mode = #tpu.pipeline_mode<synchronous>, transform_indices = @transform_2, window_bounds = array<i64: 64, 1>}, {pipeline_mode = #tpu.pipeline_mode<synchronous>, transform_indices = @transform_3, window_bounds = array<i64: 64, 1>}, {transform_indices = @transform_4, window_bounds = array<i64: 64, 128>}]} {
    %c0_i32 = arith.constant 0 : i32
    %0 = arith.cmpi eq, %arg0, %c0_i32 : i32
    %c0_i32_0 = arith.constant 0 : i32
    %1 = arith.cmpi eq, %arg1, %c0_i32_0 : i32
    %2 = arith.andi %0, %1 : i1
    %3 = arith.extui %2 : i1 to i32
    %c0_i32_1 = arith.constant 0 : i32
    %4 = arith.cmpi ne, %3, %c0_i32_1 : i32
    scf.if %4 {
      %cst = arith.constant 0.000000e+00 : f32
      %16 = vector.broadcast %cst : f32 to vector<64x1xf32>
      %c0 = arith.constant 0 : index
      %c0_8 = arith.constant 0 : index
      %17 = vector.load %arg8[%c0, %c0_8] : memref<64x1xf32, #tpu.memory_space<vmem>>, vector<64x1xf32>
      tpu.vector_store %arg8[%c0, %c0_8], %16 {strides = array<i32>} : memref<64x1xf32, #tpu.memory_space<vmem>>, vector<64x1xf32>,
      %cst_9 = arith.constant 0.000000e+00 : f32
      %18 = vector.broadcast %cst_9 : f32 to vector<64x1xf32>
      %c0_10 = arith.constant 0 : index
      %c0_11 = arith.constant 0 : index
      %19 = vector.load %arg9[%c0_10, %c0_11] : memref<64x1xf32, #tpu.memory_space<vmem>>, vector<64x1xf32>
      tpu.vector_store %arg9[%c0_10, %c0_11], %18 {strides = array<i32>} : memref<64x1xf32, #tpu.memory_space<vmem>>, vector<64x1xf32>,
    } else {
    }
    %c0_i32_2 = arith.constant 0 : i32
    %5 = arith.cmpi eq, %arg0, %c0_i32_2 : i32
    %6 = arith.extui %5 : i1 to i32
    %c0_i32_3 = arith.constant 0 : i32
    %7 = arith.cmpi ne, %6, %c0_i32_3 : i32
    scf.if %7 {
      %c0 = arith.constant 0 : index
      %c0_8 = arith.constant 0 : index
      %16 = vector.load %arg3[%c0, %c0_8] : memref<64x512xbf16, #tpu.memory_space<vmem>>, vector<64x512xbf16>
      %c0_9 = arith.constant 0 : index
      %c0_10 = arith.constant 0 : index
      %17 = vector.load %arg2[%c0_9, %c0_10] : memref<512x128xbf16, #tpu.memory_space<vmem>>, vector<512x128xbf16>
      %cst = arith.constant dense<0.000000e+00> : vector<64x128xf32>
      %18 = tpu.matmul %16, %17, %cst {dimension_numbers = #tpu.dot_dimension_numbers<[1], [0], [0], [1], [0, 0, 1, 1], [], []>} : vector<64x512xbf16>, vector<512x128xbf16>, vector<64x128xf32> -> vector<64x128xf32>
      %19 = arith.index_cast %arg1 : i32 to index
      %c0_11 = arith.constant 0 : index
      %c0_12 = arith.constant 0 : index
      %20 = vector.load %arg7[%19, %c0_11, %c0_12] : memref<1x64x128xf32, #tpu.memory_space<vmem>>, vector<1x64x128xf32>
      %21 = vector.shape_cast %20 : vector<1x64x128xf32> to vector<64x128xf32>
      %22 = vector.shape_cast %18 : vector<64x128xf32> to vector<1x64x128xf32>
      tpu.vector_store %arg7[%19, %c0_11, %c0_12], %22 {strides = array<i32>} : memref<1x64x128xf32, #tpu.memory_space<vmem>>, vector<1x64x128xf32>,
      %c0_13 = arith.constant 0 : index
      %c0_14 = arith.constant 0 : index
      %23 = vector.load %arg8[%c0_13, %c0_14] : memref<64x1xf32, #tpu.memory_space<vmem>>, vector<64x1xf32>
      %cst_15 = arith.constant dense<0.000000e+00> : vector<64xf32>
      %24 = vector.multi_reduction <add>, %18, %cst_15 [1] : vector<64x128xf32> to vector<64xf32>
      %25 = vector.shape_cast %24 : vector<64xf32> to vector<64x1xf32>
      %26 = arith.addf %23, %25 : vector<64x1xf32>
      %c0_16 = arith.constant 0 : index
      %c0_17 = arith.constant 0 : index
      %27 = vector.load %arg8[%c0_16, %c0_17] : memref<64x1xf32, #tpu.memory_space<vmem>>, vector<64x1xf32>
      tpu.vector_store %arg8[%c0_16, %c0_17], %26 {strides = array<i32>} : memref<64x1xf32, #tpu.memory_space<vmem>>, vector<64x1xf32>,
      %c0_18 = arith.constant 0 : index
      %c0_19 = arith.constant 0 : index
      %28 = vector.load %arg9[%c0_18, %c0_19] : memref<64x1xf32, #tpu.memory_space<vmem>>, vector<64x1xf32>
      %29 = arith.mulf %18, %18 : vector<64x128xf32>
      %cst_20 = arith.constant dense<0.000000e+00> : vector<64xf32>
      %30 = vector.multi_reduction <add>, %29, %cst_20 [1] : vector<64x128xf32> to vector<64xf32>
      %31 = vector.shape_cast %30 : vector<64xf32> to vector<64x1xf32>
      %32 = arith.addf %28, %31 : vector<64x1xf32>
      %c0_21 = arith.constant 0 : index
      %c0_22 = arith.constant 0 : index
      %33 = vector.load %arg9[%c0_21, %c0_22] : memref<64x1xf32, #tpu.memory_space<vmem>>, vector<64x1xf32>
      tpu.vector_store %arg9[%c0_21, %c0_22], %32 {strides = array<i32>} : memref<64x1xf32, #tpu.memory_space<vmem>>, vector<64x1xf32>,
    } else {
    }
    %c1_i32 = arith.constant 1 : i32
    %8 = arith.cmpi eq, %arg0, %c1_i32 : i32
    %c0_i32_4 = arith.constant 0 : i32
    %9 = arith.cmpi eq, %arg1, %c0_i32_4 : i32
    %10 = arith.andi %8, %9 : i1
    %11 = arith.extui %10 : i1 to i32
    %c0_i32_5 = arith.constant 0 : i32
    %12 = arith.cmpi ne, %11, %c0_i32_5 : i32
    scf.if %12 {
      %c0 = arith.constant 0 : index
      %c0_8 = arith.constant 0 : index
      %16 = vector.load %arg8[%c0, %c0_8] : memref<64x1xf32, #tpu.memory_space<vmem>>, vector<64x1xf32>
      %cst = arith.constant 3.125000e-02 : f32
      %17 = vector.broadcast %cst : f32 to vector<64x1xf32>
      %18 = arith.mulf %16, %17 : vector<64x1xf32>
      %c0_9 = arith.constant 0 : index
      %c0_10 = arith.constant 0 : index
      %19 = vector.load %arg9[%c0_9, %c0_10] : memref<64x1xf32, #tpu.memory_space<vmem>>, vector<64x1xf32>
      %cst_11 = arith.constant 3.125000e-02 : f32
      %20 = vector.broadcast %cst_11 : f32 to vector<64x1xf32>
      %21 = arith.mulf %19, %20 : vector<64x1xf32>
      %22 = arith.mulf %18, %18 : vector<64x1xf32>
      %23 = arith.subf %21, %22 : vector<64x1xf32>
      %cst_12 = arith.constant 0.000000e+00 : f32
      %24 = vector.broadcast %cst_12 : f32 to vector<64x1xf32>
      %25 = arith.maximumf %23, %24 : vector<64x1xf32>
      %c0_13 = arith.constant 0 : index
      %c0_14 = arith.constant 0 : index
      %26 = vector.load %arg4[%c0_13, %c0_14] : memref<64x1xf32, #tpu.memory_space<vmem>>, vector<64x1xf32>
      %cst_15 = arith.constant 9.99999974E-6 : f32
      %27 = vector.broadcast %cst_15 : f32 to vector<64x1xf32>
      %28 = arith.addf %25, %27 : vector<64x1xf32>
      %29 = math.rsqrt %28 : vector<64x1xf32>
      %30 = arith.mulf %26, %29 : vector<64x1xf32>
      %c0_16 = arith.constant 0 : index
      %c0_17 = arith.constant 0 : index
      %31 = vector.load %arg10[%c0_16, %c0_17] : memref<64x1xf32, #tpu.memory_space<vmem>>, vector<64x1xf32>
      tpu.vector_store %arg10[%c0_16, %c0_17], %30 {strides = array<i32>} : memref<64x1xf32, #tpu.memory_space<vmem>>, vector<64x1xf32>,
      %c0_18 = arith.constant 0 : index
      %c0_19 = arith.constant 0 : index
      %32 = vector.load %arg5[%c0_18, %c0_19] : memref<64x1xf32, #tpu.memory_space<vmem>>, vector<64x1xf32>
      %33 = arith.mulf %18, %30 : vector<64x1xf32>
      %34 = arith.subf %32, %33 : vector<64x1xf32>
      %c0_20 = arith.constant 0 : index
      %c0_21 = arith.constant 0 : index
      %35 = vector.load %arg11[%c0_20, %c0_21] : memref<64x1xf32, #tpu.memory_space<vmem>>, vector<64x1xf32>
      tpu.vector_store %arg11[%c0_20, %c0_21], %34 {strides = array<i32>} : memref<64x1xf32, #tpu.memory_space<vmem>>, vector<64x1xf32>,
    } else {
    }
    %c1_i32_6 = arith.constant 1 : i32
    %13 = arith.cmpi eq, %arg0, %c1_i32_6 : i32
    %14 = arith.extui %13 : i1 to i32
    %c0_i32_7 = arith.constant 0 : i32
    %15 = arith.cmpi ne, %14, %c0_i32_7 : i32
    scf.if %15 {
      %16 = arith.index_cast %arg1 : i32 to index
      %c0 = arith.constant 0 : index
      %c0_8 = arith.constant 0 : index
      %17 = vector.load %arg7[%16, %c0, %c0_8] : memref<1x64x128xf32, #tpu.memory_space<vmem>>, vector<1x64x128xf32>
      %18 = vector.shape_cast %17 : vector<1x64x128xf32> to vector<64x128xf32>
      %c0_9 = arith.constant 0 : index
      %c0_10 = arith.constant 0 : index
      %19 = vector.load %arg10[%c0_9, %c0_10] : memref<64x1xf32, #tpu.memory_space<vmem>>, vector<64x1xf32>
      %20 = vector.broadcast %19 : vector<64x1xf32> to vector<64x128xf32>
      %21 = arith.mulf %18, %20 : vector<64x128xf32>
      %c0_11 = arith.constant 0 : index
      %c0_12 = arith.constant 0 : index
      %22 = vector.load %arg11[%c0_11, %c0_12] : memref<64x1xf32, #tpu.memory_space<vmem>>, vector<64x1xf32>
      %23 = vector.broadcast %22 : vector<64x1xf32> to vector<64x128xf32>
      %24 = arith.addf %21, %23 : vector<64x128xf32>
      %cst = arith.constant 0.000000e+00 : f32
      %25 = vector.broadcast %cst : f32 to vector<64x128xf32>
      %26 = arith.cmpf oge, %24, %25 : vector<64x128xf32>
      %cst_13 = arith.constant 2.000000e-01 : f32
      %27 = vector.broadcast %cst_13 : f32 to vector<64x128xf32>
      %28 = arith.mulf %27, %24 : vector<64x128xf32>
      %29 = arith.select %26, %24, %28 : vector<64x128xi1>, vector<64x128xf32>
      %30 = arith.truncf %29 : vector<64x128xf32> to vector<64x128xbf16>
      %c0_14 = arith.constant 0 : index
      %c0_15 = arith.constant 0 : index
      %31 = vector.load %arg6[%c0_14, %c0_15] : memref<64x128xbf16, #tpu.memory_space<vmem>>, vector<64x128xbf16>
      tpu.vector_store %arg6[%c0_14, %c0_15], %30 {strides = array<i32>} : memref<64x128xbf16, #tpu.memory_space<vmem>>, vector<64x128xbf16>,
    } else {
    }
    return
  }
  func.func @transform_0(%arg0: i32, %arg1: i32) -> (i32, i32) {
    %c1_i32 = arith.constant 1 : i32
    %0 = arith.subi %c1_i32, %arg0 : i32
    %1 = arith.muli %arg1, %0 : i32
    %c0_i32 = arith.constant 0 : i32
    %c0_i32_0 = arith.constant 0 : i32
    return %c0_i32, %1 : i32, i32
  }
  func.func @transform_1(%arg0: i32, %arg1: i32) -> (i32, i32) {
    %c0_i32 = arith.constant 0 : i32
    %c0_i32_0 = arith.constant 0 : i32
    %c0_i32_1 = arith.constant 0 : i32
    return %c0_i32, %c0_i32_0 : i32, i32
  }
  func.func @transform_2(%arg0: i32, %arg1: i32) -> (i32, i32) {
    %c0_i32 = arith.constant 0 : i32
    %c0_i32_0 = arith.constant 0 : i32
    %c0_i32_1 = arith.constant 0 : i32
    return %c0_i32, %c0_i32_0 : i32, i32
  }
  func.func @transform_3(%arg0: i32, %arg1: i32) -> (i32, i32) {
    %c0_i32 = arith.constant 0 : i32
    %c0_i32_0 = arith.constant 0 : i32
    %c0_i32_1 = arith.constant 0 : i32
    return %c0_i32, %c0_i32_0 : i32, i32
  }
  func.func @transform_4(%arg0: i32, %arg1: i32) -> (i32, i32) {
    %0 = arith.muli %arg1, %arg0 : i32
    %c0_i32 = arith.constant 0 : i32
    %c0_i32_0 = arith.constant 0 : i32
    return %c0_i32, %0 : i32, i32
  }
}

module attributes {stable_mosaic.version = 11 : i64} {
  func.func @_conv_bias_kernel(%arg0: i32, %arg1: memref<1024x128xbf16, #tpu.memory_space<vmem>>, %arg2: memref<1x1024xbf16, #tpu.memory_space<vmem>>, %arg3: memref<1x1xf32, #tpu.memory_space<vmem>>, %arg4: memref<1x128xf32, #tpu.memory_space<vmem>>) attributes {dimension_semantics = [#tpu.dimension_semantics<parallel>], iteration_bounds = array<i64: 1>, scalar_prefetch = 0 : i64, scratch_operands = 0 : i64, tpu.core_type = #tpu.core_type<tc>, window_params = [{transform_indices = @transform_0, window_bounds = array<i64: 1024, 128>}, {pipeline_mode = #tpu.pipeline_mode<synchronous>, transform_indices = @transform_1, window_bounds = array<i64: 1, 1024>}, {pipeline_mode = #tpu.pipeline_mode<synchronous>, transform_indices = @transform_2, window_bounds = array<i64: 1, 1>}, {transform_indices = @transform_3, window_bounds = array<i64: 1, 128>}]} {
    %c0 = arith.constant 0 : index
    %c0_0 = arith.constant 0 : index
    %0 = vector.load %arg2[%c0, %c0_0] : memref<1x1024xbf16, #tpu.memory_space<vmem>>, vector<1x1024xbf16>
    %c0_1 = arith.constant 0 : index
    %c0_2 = arith.constant 0 : index
    %1 = vector.load %arg1[%c0_1, %c0_2] : memref<1024x128xbf16, #tpu.memory_space<vmem>>, vector<1024x128xbf16>
    %cst = arith.constant dense<0.000000e+00> : vector<1x128xf32>
    %2 = tpu.matmul %0, %1, %cst {dimension_numbers = #tpu.dot_dimension_numbers<[1], [0], [0], [1], [0, 0, 1, 1], [], []>} : vector<1x1024xbf16>, vector<1024x128xbf16>, vector<1x128xf32> -> vector<1x128xf32>
    %c0_3 = arith.constant 0 : index
    %c0_4 = arith.constant 0 : index
    %3 = vector.load %arg3[%c0_3, %c0_4] : memref<1x1xf32, #tpu.memory_space<vmem>>, vector<1x1xf32>
    %4 = vector.broadcast %3 : vector<1x1xf32> to vector<1x128xf32>
    %5 = arith.addf %2, %4 : vector<1x128xf32>
    %c0_5 = arith.constant 0 : index
    %c0_6 = arith.constant 0 : index
    %6 = vector.load %arg4[%c0_5, %c0_6] : memref<1x128xf32, #tpu.memory_space<vmem>>, vector<1x128xf32>
    tpu.vector_store %arg4[%c0_5, %c0_6], %5 {strides = array<i32>} : memref<1x128xf32, #tpu.memory_space<vmem>>, vector<1x128xf32>,
    return
  }
  func.func @transform_0(%arg0: i32) -> (i32, i32) {
    %c0_i32 = arith.constant 0 : i32
    %c0_i32_0 = arith.constant 0 : i32
    return %c0_i32, %arg0 : i32, i32
  }
  func.func @transform_1(%arg0: i32) -> (i32, i32) {
    %c0_i32 = arith.constant 0 : i32
    %c0_i32_0 = arith.constant 0 : i32
    %c0_i32_1 = arith.constant 0 : i32
    return %c0_i32, %c0_i32_0 : i32, i32
  }
  func.func @transform_2(%arg0: i32) -> (i32, i32) {
    %c0_i32 = arith.constant 0 : i32
    %c0_i32_0 = arith.constant 0 : i32
    %c0_i32_1 = arith.constant 0 : i32
    return %c0_i32, %c0_i32_0 : i32, i32
  }
  func.func @transform_3(%arg0: i32) -> (i32, i32) {
    %c0_i32 = arith.constant 0 : i32
    %c0_i32_0 = arith.constant 0 : i32
    return %c0_i32, %arg0 : i32, i32
  }
}

</mosaic_0001>

<llo_original>
// kernel: nlayer_discriminator_forward.5
$region0: #{nlayer_discriminator_forward.5}
  #allocation0 [shape = 'u32[]', space=smem, size = 0x4, offset = 0x4, fixed_abs, tag = 'smem constant byte address 0x4 - core index']
  #allocation1 [shape = 'u32[144,128]{1,0:T(1,128)}', space=vmem, size = 0x12000, scoped, tag = 'internal scratch']
  %s0 = inlined_call_operand.vmem [shape: bf16[64,256], index: 0, kind: input, shape index: {}]
  %s1 = inlined_call_operand.vmem [shape: bf16[8,64], index: 1, kind: input, shape index: {}]
  %s2 = inlined_call_operand.vmem [shape: f32[8,1], index: 2, kind: input, shape index: {}]
  %s3 = inlined_call_operand.vmem [shape: bf16[8,256], index: 3, kind: output, shape index: {}]
  %s4 = sld [smem:[#allocation0]]
  $region22: #{nlayer_discriminator_forward.5} parent=0
    _
  %s6 = ssub.s32 1, %s4
  %s7 = scalar_select 0, %s6, %s4
  // Predicated region
  $region2: #{nlayer_discriminator_forward.5} parent=0 // pred_check
    _
  $region3: #{nlayer_discriminator_forward.5} parent=0 // pred_check_branch
    %9 = sbr.rel (0) target = $region5
  $region4: #{nlayer_discriminator_forward.5} parent=0 // pred_region
    _
  $region5: #{nlayer_discriminator_forward.5} parent=0 // pred_fallthru
    _
  // Predicated region
  $region6: #{nlayer_discriminator_forward.5} parent=0 // pred_check
    _
  $region7: #{nlayer_discriminator_forward.5} parent=0 // pred_check_branch
    %11 = sbr.rel (0) target = $region9
  $region8: #{nlayer_discriminator_forward.5} parent=0 // pred_region
    _
  $region9: #{nlayer_discriminator_forward.5} parent=0 // pred_fallthru
    _
  // Predicated region
  $region10: #{nlayer_discriminator_forward.5} parent=0 // pred_check
    _
  $region11: #{nlayer_discriminator_forward.5} parent=0 // pred_check_branch
    %13 = sbr.rel (0) target = $region13
  $region12: #{nlayer_discriminator_forward.5} parent=0 // pred_region
    _
  $region13: #{nlayer_discriminator_forward.5} parent=0 // pred_fallthru
    _
  %v15 = vld [vmem:[%s1] sm:$0xf]
  %v16 = vld [vmem:[%s0] sm:$0xff]
  %v17 = vld [vmem:[%s0 + $0x8] sm:$0xff]
  %v18 = vld [vmem:[%s0 + $0x10] sm:$0xff]
  %v19 = vld [vmem:[%s0 + $0x18] sm:$0xff]
  %v20 = vld [vmem:[%s0 + $0x20] sm:$0xff]
  %v21 = vld [vmem:[%s0 + $0x28] sm:$0xff]
  %v22 = vld [vmem:[%s0 + $0x30] sm:$0xff]
  %v23 = vld [vmem:[%s0 + $0x38] sm:$0xff]
  %v24 = vld [vmem:[%s2] sm:$0xff]
  %26 = vset.pattern.permute.xlu0 0
  %27 = vperm.xlu0 %26, %v24
  %v28 = vpop.permute.xlu0 %27
  %v38 = vunpack.c.l.b16 %v16
  %v39 = vunpack.c.h.b16 %v16
  %v40 = vunpack.c.l.b16 %v17
  %v41 = vunpack.c.h.b16 %v17
  %v42 = vunpack.c.l.b16 %v18
  %v43 = vunpack.c.h.b16 %v18
  %v44 = vunpack.c.l.b16 %v19
  %v45 = vunpack.c.h.b16 %v19
  %v46 = vunpack.c.l.b16 %v20
  %v47 = vunpack.c.h.b16 %v20
  %v48 = vunpack.c.l.b16 %v21
  %v49 = vunpack.c.h.b16 %v21
  %v50 = vunpack.c.l.b16 %v22
  %v51 = vunpack.c.h.b16 %v22
  %v52 = vunpack.c.l.b16 %v23
  %v53 = vunpack.c.h.b16 %v23
  %v54 = vpack.c.b16 %v40, %v38
  %v55 = vpack.c.b16 %v41, %v39
  %v56 = vpack.c.b16 %v44, %v42
  %v57 = vpack.c.b16 %v45, %v43
  %v58 = vpack.c.b16 %v48, %v46
  %v59 = vpack.c.b16 %v49, %v47
  %v60 = vpack.c.b16 %v52, %v50
  %v61 = vpack.c.b16 %v53, %v51
  %vm70 = vcmask 523264
  %v72 = vsel %vm70, %v15, 0
  %74 = vmatprep.subr.bf16.mxu0 0
  %75 = vmatpush1.bf16.msra.mxu0 0
  %76 = vmatprep.subr.bf16.mxu0 0
  %77 = vmatpush1.bf16.msra.mxu0 0
  %78 = vmatprep.subr.bf16.mxu0 0
  %79 = vmatpush1.bf16.msra.mxu0 0
  %80 = vmatprep.subr.bf16.mxu0 0
  %81 = vmatpush1.bf16.msra.mxu0 0
  %82 = vmatprep.subr.bf16.mxu0 %v61
  %83 = vmatpush1.bf16.msra.mxu0 %v60
  %84 = vmatprep.subr.bf16.mxu0 %v59
  %85 = vmatpush1.bf16.msra.mxu0 %v58
  %86 = vmatprep.subr.bf16.mxu0 %v57
  %87 = vmatpush1.bf16.msra.mxu0 %v56
  %88 = vmatprep.subr.bf16.mxu0 %v55
  %89 = vmatpush1.bf16.msra.mxu0 %v54
  %90 = vmatprep.subr.bf16.mxu0 0
  %91 = vmatpush2.bf16.msra.mxu0 0
  %92 = vmatprep.subr.bf16.mxu0 0
  %93 = vmatpush2.bf16.msra.mxu0 0
  %94 = vmatprep.subr.bf16.mxu0 0
  %95 = vmatpush2.bf16.msra.mxu0 0
  %96 = vmatprep.subr.bf16.mxu0 0
  %97 = vmatpush2.bf16.msra.mxu0 0
  %98 = vmatprep.subr.bf16.mxu0 0
  %99 = vmatpush2.bf16.msra.mxu0 0
  %100 = vmatprep.subr.bf16.mxu0 0
  %101 = vmatpush2.bf16.msra.mxu0 0
  %102 = vmatprep.subr.bf16.mxu0 0
  %103 = vmatpush2.bf16.msra.mxu0 0
  %104 = vmatprep.subr.bf16.mxu0 0
  %105 = vmatpush2.bf16.msra.mxu0 0
  %106 = vmatprep.mubr.bf16.mxu0 0
  %107 = vmatmul.mubr.bf16.gmra.mxu0 %v72
  %v108 = vpop.f32.mrf.mxu0
  %v109 = vadd.f32 %v28, %v108
  %v110 = vpop.f32.mrf.mxu0
  %v111 = vadd.f32 %v28, %v110
  %v112 = vpop.f32.mrf.mxu0
  %v113 = vpop.f32.mrf.mxu0
  %114 = vdwg.mxu0
  %vm115 = vcmp.ge.f32.partialorder %v109, 0.0
  %vm116 = vcmp.ge.f32.partialorder %v111, 0.0
  %v117 = vmul.f32 %v109, 0.2
  %v118 = vmul.f32 %v111, 0.2
  %v119 = vsel %vm115, %v109, %v117
  %v120 = vsel %vm116, %v111, %v118
  %v121 = vpack.c.bf16 %v119, %v119
  %v122 = vpack.c.bf16 %v120, %v120
  %v125 = vunpack.c.l.b16 %v121
  %v126 = vunpack.c.l.b16 %v122
  %v127 = vpack.c.b16 %v126, %v125
  %129 = vst [vmem:[%s3] sm:$0xff] %v127
  // Predicated region
  $region14: #{nlayer_discriminator_forward.5} parent=0 // pred_check
    _
  $region15: #{nlayer_discriminator_forward.5} parent=0 // pred_check_branch
    %131 = sbr.rel (0) target = $region17
  $region16: #{nlayer_discriminator_forward.5} parent=0 // pred_region
    _
  $region17: #{nlayer_discriminator_forward.5} parent=0 // pred_fallthru
    _
  // Predicated region
  $region18: #{nlayer_discriminator_forward.5} parent=0 // pred_check
    _
  $region19: #{nlayer_discriminator_forward.5} parent=0 // pred_check_branch
    %133 = sbr.rel (0) target = $region21
  $region20: #{nlayer_discriminator_forward.5} parent=0 // pred_region
    _
  $region21: #{nlayer_discriminator_forward.5} parent=0 // pred_fallthru
    _

// kernel: nlayer_discriminator_forward.6
$region0: #{nlayer_discriminator_forward.6}
  #allocation0 [shape = 'u32[]', space=smem, size = 0x4, offset = 0x4, fixed_abs, tag = 'smem constant byte address 0x4 - core index']
  #allocation1 [shape = 'u32[144,128]{1,0:T(1,128)}', space=vmem, size = 0x12000, scoped, tag = 'internal scratch']
  #allocation2 [shape = 'f32[1,16,128]{2,1,0:T(8,128)}', space=vmem, size = 0x2000, scoped, tag = 'scratch operand']
  #allocation3 [shape = 'f32[16,1]{1,0:T(8,128)}', space=vmem, size = 0x2000, scoped, tag = 'scratch operand']
  #allocation4 [shape = 'f32[16,1]{1,0:T(8,128)}', space=vmem, size = 0x2000, scoped, tag = 'scratch operand']
  #allocation5 [shape = 'f32[16,1]{1,0:T(8,128)}', space=vmem, size = 0x2000, scoped, tag = 'scratch operand']
  #allocation6 [shape = 'f32[16,1]{1,0:T(8,128)}', space=vmem, size = 0x2000, scoped, tag = 'scratch operand']
  %s0 = inlined_call_operand.vmem [shape: bf16[128,128], index: 0, kind: input, shape index: {}]
  %s1 = inlined_call_operand.vmem [shape: bf16[16,128], index: 1, kind: input, shape index: {}]
  %s2 = inlined_call_operand.vmem [shape: f32[16,1], index: 2, kind: input, shape index: {}]
  %s3 = inlined_call_operand.vmem [shape: f32[16,1], index: 3, kind: input, shape index: {}]
  %s4 = inlined_call_operand.vmem [shape: bf16[16,128], index: 4, kind: output, shape index: {}]
  %s5 = sld [smem:[#allocation0]]
  $region65: #{nlayer_discriminator_forward.6} parent=0
    _
  %s7 = ssub.s32 1, %s5
  %s8 = scalar_select 0, %s7, %s5
  loop: start=0, step=1, limit=4
  $region2: #{nlayer_discriminator_forward.6} parent=0 // loop_pre_header
    _
  $region3: #{nlayer_discriminator_forward.6} parent=0 // loop_header
    %s10 = sphi 0, %s14
    %p11 = scmp.ge.s32.totalorder %s10, 4
    %s17 = sphi 0, %s29
    %s18 = sphi 0, %s25
    %s19 = sphi 0, %s17
    %s20 = sphi 0, %s18
    %s21 = sphi 0, %s19
    %s22 = sphi 0, %s20
    %s36 = sphi 0, %s38
    %s39 = sphi 0, %s36
    %s40 = sphi 0, %s39
    %s56 = sphi 0, %s40
    %s60 = sphi 0, %s60
    %s62 = sphi 0, %s60
    %s63 = sphi 0, %s62
    %s77 = sphi 0, %s63
    %s81 = sphi 0, %s81
    %s83 = sphi 0, %s81
    %s84 = sphi 0, %s83
    %s98 = sphi 0, %s84
    %s102 = sphi 0, %s102
    %s104 = sphi 0, %s102
    %s105 = sphi 0, %s104
    %s119 = sphi 0, %s105
    %s127 = sphi 0, %s129
    %s130 = sphi 0, %s127
    %s131 = sphi 0, %s130
    %s147 = sphi 0, %s131
  $region4: #{nlayer_discriminator_forward.6} parent=0 // loop_header_branch
    %13 = sbr.rel (%p11) target = $region8
  $region5: #{nlayer_discriminator_forward.6} parent=0 // loop_body
    %s15 = ssub.s32 %s10, 1
    %s16 = ssub.s32 %s10, 2
    %s23 = sadd.s32 1, %s18
    %p24 = scmp.ge.s32.totalorder %s23, 1
    %s25 = scalar_select %p24, 0, %s23
    %s26 = sadd.s32 1, %s17
    %s27 = scalar_select %p24, %s26, %s17
    %p28 = scmp.ge.s32.totalorder %s27, 2
    %s29 = scalar_select %p28, 0, %s27
    %s30 = ssub.s32 1, %s17
    %s31 = smul.u32 %s18, %s30
    %s32 = ssub.s32 1, %s29
    %s33 = smul.u32 %s25, %s32
    %s34 = ssub.s32 %s31, %s33
    %p35 = scmp.eq.s32.totalorder %s34, 0
    %s37 = sadd.s32 %s36, 1
    %s38 = scalar_select %p35, %s36, %s37
    %p41 = pneg %p35
    %p42 = scmp.eq.s32.totalorder %s10, 1
    %p43 = por %p41, %p42
    %p44 = scmp.ne.s32.totalorder %s36, %s39
    %p45 = scmp.eq.s32.totalorder %s10, 0
    %p46 = por %p44, %p45
    %p47 = scmp.ne.s32.totalorder %s36, %s39
    %p48 = scmp.eq.s32.totalorder %s15, 1
    %p49 = por %p47, %p48
    %p50 = scmp.ne.s32.totalorder %s39, %s40
    %p51 = scmp.eq.s32.totalorder %s15, 0
    %p52 = por %p50, %p51
    %p53 = scmp.ne.s32.totalorder %s39, %s40
    %p54 = scmp.eq.s32.totalorder %s16, 1
    %p55 = por %p53, %p54
    %p57 = scmp.ne.s32.totalorder %s40, %s56
    %p58 = scmp.eq.s32.totalorder %s16, 0
    %p59 = por %p57, %p58
    %s61 = sadd.s32 %s60, 1
    %p64 = scmp.eq.s32.totalorder %s10, 1
    %p65 = scmp.ne.s32.totalorder %s60, %s62
    %p66 = scmp.eq.s32.totalorder %s10, 0
    %p67 = por %p65, %p66
    %p68 = scmp.ne.s32.totalorder %s60, %s62
    %p69 = scmp.eq.s32.totalorder %s15, 1
    %p70 = por %p68, %p69
    %p71 = scmp.ne.s32.totalorder %s62, %s63
    %p72 = scmp.eq.s32.totalorder %s15, 0
    %p73 = por %p71, %p72
    %p74 = scmp.ne.s32.totalorder %s62, %s63
    %p75 = scmp.eq.s32.totalorder %s16, 1
    %p76 = por %p74, %p75
    %p78 = scmp.ne.s32.totalorder %s63, %s77
    %p79 = scmp.eq.s32.totalorder %s16, 0
    %p80 = por %p78, %p79
    %s82 = sadd.s32 %s81, 1
    %p85 = scmp.eq.s32.totalorder %s10, 1
    %p86 = scmp.ne.s32.totalorder %s81, %s83
    %p87 = scmp.eq.s32.totalorder %s10, 0
    %p88 = por %p86, %p87
    %p89 = scmp.ne.s32.totalorder %s81, %s83
    %p90 = scmp.eq.s32.totalorder %s15, 1
    %p91 = por %p89, %p90
    %p92 = scmp.ne.s32.totalorder %s83, %s84
    %p93 = scmp.eq.s32.totalorder %s15, 0
    %p94 = por %p92, %p93
    %p95 = scmp.ne.s32.totalorder %s83, %s84
    %p96 = scmp.eq.s32.totalorder %s16, 1
    %p97 = por %p95, %p96
    %p99 = scmp.ne.s32.totalorder %s84, %s98
    %p100 = scmp.eq.s32.totalorder %s16, 0
    %p101 = por %p99, %p100
    %s103 = sadd.s32 %s102, 1
    %p106 = scmp.eq.s32.totalorder %s10, 1
    %p107 = scmp.ne.s32.totalorder %s102, %s104
    %p108 = scmp.eq.s32.totalorder %s10, 0
    %p109 = por %p107, %p108
    %p110 = scmp.ne.s32.totalorder %s102, %s104
    %p111 = scmp.eq.s32.totalorder %s15, 1
    %p112 = por %p110, %p111
    %p113 = scmp.ne.s32.totalorder %s104, %s105
    %p114 = scmp.eq.s32.totalorder %s15, 0
    %p115 = por %p113, %p114
    %p116 = scmp.ne.s32.totalorder %s104, %s105
    %p117 = scmp.eq.s32.totalorder %s16, 1
    %p118 = por %p116, %p117
    %p120 = scmp.ne.s32.totalorder %s105, %s119
    %p121 = scmp.eq.s32.totalorder %s16, 0
    %p122 = por %p120, %p121
    %s123 = smul.u32 %s18, %s17
    %s124 = smul.u32 %s25, %s29
    %s125 = ssub.s32 %s123, %s124
    %p126 = scmp.eq.s32.totalorder %s125, 0
    %s128 = sadd.s32 %s127, 1
    %s129 = scalar_select %p126, %s127, %s128
    %p132 = pneg %p126
    %p133 = scmp.eq.s32.totalorder %s10, 1
    %p134 = por %p132, %p133
    %p135 = scmp.ne.s32.totalorder %s127, %s130
    %p136 = scmp.eq.s32.totalorder %s10, 0
    %p137 = por %p135, %p136
    %p138 = scmp.ne.s32.totalorder %s127, %s130
    %p139 = scmp.eq.s32.totalorder %s15, 1
    %p140 = por %p138, %p139
    %p141 = scmp.ne.s32.totalorder %s130, %s131
    %p142 = scmp.eq.s32.totalorder %s15, 0
    %p143 = por %p141, %p142
    %p144 = scmp.ne.s32.totalorder %s130, %s131
    %p145 = scmp.eq.s32.totalorder %s16, 1
    %p146 = por %p144, %p145
    %p148 = scmp.ne.s32.totalorder %s131, %s147
    %p149 = scmp.eq.s32.totalorder %s16, 0
    %p150 = por %p148, %p149
    %p151 = scmp.le.s32.totalorder 1, %s10
    %p152 = scmp.lt.s32.totalorder %s10, 3
    %p153 = pnand %p151, %p152
    %p154 = pneg %p153
    // Predicated region
    $region9: #{nlayer_discriminator_forward.6} parent=5 // pred_check
      _
    $region10: #{nlayer_discriminator_forward.6} parent=5 // pred_check_branch
      %156 = sbr.rel (%p153) target = $region12
    $region11: #{nlayer_discriminator_forward.6} parent=5 // pred_region
      %s157 = ssub.s32 %s10, 1
      // Predicated region
      $region13: #{nlayer_discriminator_forward.6} parent=11 // pred_check
        %p158 = pneg %p73
      $region14: #{nlayer_discriminator_forward.6} parent=11 // pred_check_branch
        %160 = sbr.rel (%p158) target = $region16
      $region15: #{nlayer_discriminator_forward.6} parent=11 // pred_region
        _
      $region16: #{nlayer_discriminator_forward.6} parent=11 // pred_fallthru
        _
      // Predicated region
      $region17: #{nlayer_discriminator_forward.6} parent=11 // pred_check
        %p161 = pneg %p94
      $region18: #{nlayer_discriminator_forward.6} parent=11 // pred_check_branch
        %163 = sbr.rel (%p161) target = $region20
      $region19: #{nlayer_discriminator_forward.6} parent=11 // pred_region
        _
      $region20: #{nlayer_discriminator_forward.6} parent=11 // pred_fallthru
        _
      // Predicated region
      $region21: #{nlayer_discriminator_forward.6} parent=11 // pred_check
        %p164 = pneg %p115
      $region22: #{nlayer_discriminator_forward.6} parent=11 // pred_check_branch
        %166 = sbr.rel (%p164) target = $region24
      $region23: #{nlayer_discriminator_forward.6} parent=11 // pred_region
        _
      $region24: #{nlayer_discriminator_forward.6} parent=11 // pred_fallthru
        _
    $region12: #{nlayer_discriminator_forward.6} parent=5 // pred_fallthru
      _
    %p167 = scmp.lt.s32.totalorder %s10, 2
    // Predicated region
    $region25: #{nlayer_discriminator_forward.6} parent=5 // pred_check
      %p168 = pneg %p167
    $region26: #{nlayer_discriminator_forward.6} parent=5 // pred_check_branch
      %170 = sbr.rel (%p168) target = $region28
    $region27: #{nlayer_discriminator_forward.6} parent=5 // pred_region
      // Predicated region
      $region29: #{nlayer_discriminator_forward.6} parent=27 // pred_check
        %p171 = pneg %p46
      $region30: #{nlayer_discriminator_forward.6} parent=27 // pred_check_branch
        %173 = sbr.rel (%p171) target = $region32
      $region31: #{nlayer_discriminator_forward.6} parent=27 // pred_region
        %s174 = ssub.s32 1, %s17
        %s175 = smul.u32 %s18, %s174
        %p176 = scmp.lt.s32.totalorder %s175, 0
        %s177 = scalar_select %p176, %s175, 0
        %s178 = smul.addr %s177, 4
        %s179 = scalar_lea.vmem %s0, %s178
        %s180 = ssub.s32 1, %s17
        %s181 = smul.u32 %s18, %s180
      $region32: #{nlayer_discriminator_forward.6} parent=27 // pred_fallthru
        _
    $region28: #{nlayer_discriminator_forward.6} parent=5 // pred_fallthru
      _
    %p182 = scmp.le.s32.totalorder 1, %s10
    %p183 = scmp.lt.s32.totalorder %s10, 3
    %p184 = pnand %p182, %p183
    %p185 = pneg %p184
    // Predicated region
    $region33: #{nlayer_discriminator_forward.6} parent=5 // pred_check
      _
    $region34: #{nlayer_discriminator_forward.6} parent=5 // pred_check_branch
      %187 = sbr.rel (%p184) target = $region36
    $region35: #{nlayer_discriminator_forward.6} parent=5 // pred_region
      %s188 = ssub.s32 %s10, 1
      %s189 = ssub.s32 1, %s19
      %s190 = smul.u32 %s20, %s189
      %p191 = scmp.lt.s32.totalorder %s190, 0
      %s192 = scalar_select %p191, %s190, 0
      %s193 = smul.addr %s192, 4
      %s194 = scalar_lea.vmem %s0, %s193
      %p195 = pneg %p52
      %p196 = pneg %p49
      %p197 = pneg %p73
      %p198 = pneg %p70
      %p199 = pneg %p94
      %p200 = pneg %p91
      %p201 = pneg %p115
      %p202 = pneg %p112
      %p203 = pneg %p143
      %p204 = pneg %p140
      %s205 = smul.u32 %s20, %s19
      %p206 = scmp.lt.s32.totalorder %s205, 0
      %s207 = scalar_select %p206, %s205, 0
      %s208 = smul.addr %s207, 4
      %s209 = scalar_lea.vmem %s4, %s208
      %s210 = ssub.s32 1, %s19
      %s211 = smul.u32 %s20, %s210
      %p212 = scmp.lt.s32.totalorder %s211, 0
      %s213 = scalar_select %p212, %s211, 0
      %s214 = smul.addr %s213, 4
      %s215 = scalar_lea.vmem %s0, %s214
      %s216 = ssub.s32 1, %s19
      %s217 = smul.u32 %s20, %s216
      %s218 = smul.u32 %s20, %s19
      %p219 = scmp.lt.s32.totalorder %s218, 0
      %s220 = scalar_select %p219, %s218, 0
      %s221 = smul.addr %s220, 4
      %s222 = scalar_lea.vmem %s4, %s221
      %s223 = smul.u32 %s20, %s19
      %p225 = scmp.eq.s32.totalorder %s19, 0
      %p226 = scmp.eq.s32.totalorder %s20, 0
      %p227 = pnand %p225, %p226
      %p228 = pneg %p227
      // Predicated region
      $region37: #{nlayer_discriminator_forward.6} parent=35 // pred_check
        _
      $region38: #{nlayer_discriminator_forward.6} parent=35 // pred_check_branch
        %230 = sbr.rel (%p227) target = $region40
      $region39: #{nlayer_discriminator_forward.6} parent=35 // pred_region
        %vm231 = vcmask 7168
        %232 = vst.msk [vmem:[#allocation3] sm:$0xff] %vm231, 0.0
        %233 = vst.msk [vmem:[#allocation3 + $0x8] sm:$0xff] %vm231, 0.0
        %234 = vst.msk [vmem:[#allocation4] sm:$0xff] %vm231, 0.0
        %235 = vst.msk [vmem:[#allocation4 + $0x8] sm:$0xff] %vm231, 0.0
      $region40: #{nlayer_discriminator_forward.6} parent=35 // pred_fallthru
        _
      // Predicated region
      $region41: #{nlayer_discriminator_forward.6} parent=35 // pred_check
        %p236 = pneg %p225
      $region42: #{nlayer_discriminator_forward.6} parent=35 // pred_check_branch
        %238 = sbr.rel (%p236) target = $region44
      $region43: #{nlayer_discriminator_forward.6} parent=35 // pred_region
        %v239 = vld [vmem:[%s1] sm:$0xf]
        %v240 = vld [vmem:[%s1 + $0x4] sm:$0xf]
        %v241 = vld [vmem:[%s215] sm:$0xf]
        %v242 = vld [vmem:[%s215 + $0x4] sm:$0xf]
        %v243 = vld [vmem:[%s215 + $0x8] sm:$0xf]
        %v244 = vld [vmem:[%s215 + $0xc] sm:$0xf]
        %v245 = vld [vmem:[%s215 + $0x10] sm:$0xf]
        %v246 = vld [vmem:[%s215 + $0x14] sm:$0xf]
        %v247 = vld [vmem:[%s215 + $0x18] sm:$0xf]
        %v248 = vld [vmem:[%s215 + $0x1c] sm:$0xf]
        %v249 = vld [vmem:[%s215 + $0x20] sm:$0xf]
        %v250 = vld [vmem:[%s215 + $0x24] sm:$0xf]
        %v251 = vld [vmem:[%s215 + $0x28] sm:$0xf]
        %v252 = vld [vmem:[%s215 + $0x2c] sm:$0xf]
        %v253 = vld [vmem:[%s215 + $0x30] sm:$0xf]
        %v254 = vld [vmem:[%s215 + $0x34] sm:$0xf]
        %v255 = vld [vmem:[%s215 + $0x38] sm:$0xf]
        %v256 = vld [vmem:[%s215 + $0x3c] sm:$0xf]
        %v259 = vunpack.c.l.b16 %v239
        %v260 = vunpack.c.l.b16 %v240
        %v261 = vpack.c.b16 %v260, %v259
        %v279 = vunpack.c.l.b16 %v241
        %v280 = vunpack.c.l.b16 %v242
        %v281 = vunpack.c.l.b16 %v243
        %v282 = vunpack.c.l.b16 %v244
        %v283 = vunpack.c.l.b16 %v245
        %v284 = vunpack.c.l.b16 %v246
        %v285 = vunpack.c.l.b16 %v247
        %v286 = vunpack.c.l.b16 %v248
        %v287 = vunpack.c.l.b16 %v249
        %v288 = vunpack.c.l.b16 %v250
        %v289 = vunpack.c.l.b16 %v251
        %v290 = vunpack.c.l.b16 %v252
        %v291 = vunpack.c.l.b16 %v253
        %v292 = vunpack.c.l.b16 %v254
        %v293 = vunpack.c.l.b16 %v255
        %v294 = vunpack.c.l.b16 %v256
        %v295 = vpack.c.b16 %v280, %v279
        %v296 = vpack.c.b16 %v282, %v281
        %v297 = vpack.c.b16 %v284, %v283
        %v298 = vpack.c.b16 %v286, %v285
        %v299 = vpack.c.b16 %v288, %v287
        %v300 = vpack.c.b16 %v290, %v289
        %v301 = vpack.c.b16 %v292, %v291
        %v302 = vpack.c.b16 %v294, %v293
        %311 = vmatprep.subr.bf16.mxu0 0
        %312 = vmatpush1.bf16.msra.mxu0 %v302
        %313 = vmatprep.subr.bf16.mxu0 0
        %314 = vmatpush1.bf16.msra.mxu0 %v301
        %315 = vmatprep.subr.bf16.mxu0 0
        %316 = vmatpush1.bf16.msra.mxu0 %v300
        %317 = vmatprep.subr.bf16.mxu0 0
        %318 = vmatpush1.bf16.msra.mxu0 %v299
        %319 = vmatprep.subr.bf16.mxu0 0
        %320 = vmatpush1.bf16.msra.mxu0 %v298
        %321 = vmatprep.subr.bf16.mxu0 0
        %322 = vmatpush1.bf16.msra.mxu0 %v297
        %323 = vmatprep.subr.bf16.mxu0 0
        %324 = vmatpush1.bf16.msra.mxu0 %v296
        %325 = vmatprep.subr.bf16.mxu0 0
        %326 = vmatpush1.bf16.msra.mxu0 %v295
        %327 = vmatprep.subr.bf16.mxu0 0
        %328 = vmatpush2.bf16.msra.mxu0 0
        %329 = vmatprep.subr.bf16.mxu0 0
        %330 = vmatpush2.bf16.msra.mxu0 0
        %331 = vmatprep.subr.bf16.mxu0 0
        %332 = vmatpush2.bf16.msra.mxu0 0
        %333 = vmatprep.subr.bf16.mxu0 0
        %334 = vmatpush2.bf16.msra.mxu0 0
        %335 = vmatprep.subr.bf16.mxu0 0
        %336 = vmatpush2.bf16.msra.mxu0 0
        %337 = vmatprep.subr.bf16.mxu0 0
        %338 = vmatpush2.bf16.msra.mxu0 0
        %339 = vmatprep.subr.bf16.mxu0 0
        %340 = vmatpush2.bf16.msra.mxu0 0
        %341 = vmatprep.subr.bf16.mxu0 0
        %342 = vmatpush2.bf16.msra.mxu0 0
        %343 = vmatprep.mubr.bf16.mxu0 0
        %344 = vmatmul.mubr.bf16.gmra.mxu0 %v261
        %v345 = vpop.f32.mrf.mxu0
        %v346 = vadd.f32 0.0, %v345
        %v347 = vpop.f32.mrf.mxu0
        %v348 = vpop.f32.mrf.mxu0
        %v349 = vadd.f32 0.0, %v348
        %v350 = vpop.f32.mrf.mxu0
        %351 = vdwg.mxu0
        %s352 = smul.u32 %s20, 16
        %s353 = scalar_lea.vmem [#allocation2], %s352
        %354 = vst [vmem:[%s353] sm:$0xff] %v346
        %355 = vst [vmem:[%s353 + $0x8] sm:$0xff] %v349
        %v356 = vld [vmem:[#allocation3] sm:$0xff]
        %v357 = vld [vmem:[#allocation3 + $0x8] sm:$0xff]
        %358 = vadd.xlane.f32.xlu0 %v346
        %v359 = vpop.xlane.xlu0 %358
        %360 = vadd.xlane.f32.xlu0 %v349
        %v361 = vpop.xlane.xlu0 %360
        %v362 = vadd.f32 %v356, %v359
        %v363 = vadd.f32 %v357, %v361
        %vm364 = vcmask 7168
        %365 = vst.msk [vmem:[#allocation3] sm:$0xff] %vm364, %v362
        %366 = vst.msk [vmem:[#allocation3 + $0x8] sm:$0xff] %vm364, %v363
        %v367 = vld [vmem:[#allocation4] sm:$0xff]
        %v368 = vld [vmem:[#allocation4 + $0x8] sm:$0xff]
        %v369 = vmul.f32 %v346, %v346
        %v370 = vmul.f32 %v349, %v349
        %371 = vadd.xlane.f32.xlu0 %v369
        %v372 = vpop.xlane.xlu0 %371
        %373 = vadd.xlane.f32.xlu0 %v370
        %v374 = vpop.xlane.xlu0 %373
        %v375 = vadd.f32 %v367, %v372
        %v376 = vadd.f32 %v368, %v374
        %377 = vst.msk [vmem:[#allocation4] sm:$0xff] %vm364, %v375
        %378 = vst.msk [vmem:[#allocation4 + $0x8] sm:$0xff] %vm364, %v376
      $region44: #{nlayer_discriminator_forward.6} parent=35 // pred_fallthru
        _
      %p379 = scmp.eq.s32.totalorder %s19, 1
      %p380 = pnand %p379, %p226
      %p381 = pneg %p380
      // Predicated region
      $region45: #{nlayer_discriminator_forward.6} parent=35 // pred_check
        _
      $region46: #{nlayer_discriminator_forward.6} parent=35 // pred_check_branch
        %383 = sbr.rel (%p380) target = $region48
      $region47: #{nlayer_discriminator_forward.6} parent=35 // pred_region
        %v384 = vld [vmem:[#allocation3] sm:$0xff]
        %v385 = vld [vmem:[#allocation3 + $0x8] sm:$0xff]
        %v386 = vmul.f32 %v384, 0.02
        %v387 = vmul.f32 %v385, 0.02
        %v388 = vld [vmem:[#allocation4] sm:$0xff]
        %v389 = vld [vmem:[#allocation4 + $0x8] sm:$0xff]
        %v390 = vmul.f32 %v388, 0.02
        %v391 = vmul.f32 %v389, 0.02
        %v392 = vmul.f32 %v386, %v386
        %v393 = vmul.f32 %v387, %v387
        %v394 = vsub.f32 %v390, %v392
        %v395 = vsub.f32 %v391, %v393
        %v396 = vmax.f32 %v394, 0.0
        %v397 = vmax.f32 %v395, 0.0
        %v398 = vld [vmem:[%s2] sm:$0xff]
        %v399 = vld [vmem:[%s2 + $0x8] sm:$0xff]
        %v400 = vadd.f32 %v396, 1e-05
        %v401 = vadd.f32 %v397, 1e-05
        %v402 = vrsqrt.pop %v400
        %v403 = vrsqrt.pop %v401
        %v404 = vmul.f32 %v398, %v402
        %v405 = vmul.f32 %v399, %v403
        %vm406 = vcmask 7168
        %407 = vst.msk [vmem:[#allocation5] sm:$0xff] %vm406, %v404
        %408 = vst.msk [vmem:[#allocation5 + $0x8] sm:$0xff] %vm406, %v405
        %v409 = vld [vmem:[%s3] sm:$0xff]
        %v410 = vld [vmem:[%s3 + $0x8] sm:$0xff]
        %v411 = vmul.f32 %v386, %v404
        %v412 = vmul.f32 %v387, %v405
        %v413 = vsub.f32 %v409, %v411
        %v414 = vsub.f32 %v410, %v412
        %415 = vst.msk [vmem:[#allocation6] sm:$0xff] %vm406, %v413
        %416 = vst.msk [vmem:[#allocation6 + $0x8] sm:$0xff] %vm406, %v414
      $region48: #{nlayer_discriminator_forward.6} parent=35 // pred_fallthru
        _
      // Predicated region
      $region49: #{nlayer_discriminator_forward.6} parent=35 // pred_check
        %p417 = pneg %p379
      $region50: #{nlayer_discriminator_forward.6} parent=35 // pred_check_branch
        %419 = sbr.rel (%p417) target = $region52
      $region51: #{nlayer_discriminator_forward.6} parent=35 // pred_region
        %s420 = smul.u32 %s20, 16
        %s421 = scalar_lea.vmem [#allocation2], %s420
        %v422 = vld [vmem:[%s421] sm:$0xff]
        %v423 = vld [vmem:[%s421 + $0x8] sm:$0xff]
        %v424 = vld [vmem:[#allocation5] sm:$0xff]
        %v425 = vld [vmem:[#allocation5 + $0x8] sm:$0xff]
        %427 = vset.pattern.permute.xlu0 0
        %428 = vperm.xlu0 %427, %v424
        %v429 = vpop.permute.xlu0 %428
        %432 = vset.pattern.permute.xlu0 0
        %433 = vperm.xlu0 %432, %v425
        %v434 = vpop.permute.xlu0 %433
        %v436 = vmul.f32 %v422, %v429
        %v437 = vmul.f32 %v423, %v434
        %v438 = vld [vmem:[#allocation6] sm:$0xff]
        %v439 = vld [vmem:[#allocation6 + $0x8] sm:$0xff]
        %441 = vset.pattern.permute.xlu0 0
        %442 = vperm.xlu0 %441, %v438
        %v443 = vpop.permute.xlu0 %442
        %446 = vset.pattern.permute.xlu0 0
        %447 = vperm.xlu0 %446, %v439
        %v448 = vpop.permute.xlu0 %447
        %v450 = vadd.f32 %v436, %v443
        %v451 = vadd.f32 %v437, %v448
        %vm452 = vcmp.ge.f32.partialorder %v450, 0.0
        %vm453 = vcmp.ge.f32.partialorder %v451, 0.0
        %v454 = vmul.f32 %v450, 0.2
        %v455 = vmul.f32 %v451, 0.2
        %v456 = vsel %vm452, %v450, %v454
        %v457 = vsel %vm453, %v451, %v455
        %v458 = vpack.c.bf16 %v457, %v456
        %v460 = vunpack.c.l.b16 %v458
        %v461 = vunpack.c.h.b16 %v458
        %v462 = vpack.c.b16 %v460, %v460
        %v463 = vpack.c.b16 %v461, %v461
        %466 = vst [vmem:[%s222] sm:$0xf] %v462
        %467 = vst [vmem:[%s222 + $0x4] sm:$0xf] %v463
      $region52: #{nlayer_discriminator_forward.6} parent=35 // pred_fallthru
        _
      %s468 = smul.u32 %s20, %s19
      %p469 = scmp.lt.s32.totalorder %s468, 0
      %s470 = scalar_select %p469, %s468, 0
      %s471 = smul.addr %s470, 4
      %s472 = scalar_lea.vmem %s4, %s471
      // Predicated region
      $region53: #{nlayer_discriminator_forward.6} parent=35 // pred_check
        %p473 = pneg %p140
      $region54: #{nlayer_discriminator_forward.6} parent=35 // pred_check_branch
        %475 = sbr.rel (%p473) target = $region56
      $region55: #{nlayer_discriminator_forward.6} parent=35 // pred_region
        %s476 = smul.u32 %s20, %s19
      $region56: #{nlayer_discriminator_forward.6} parent=35 // pred_fallthru
        _
    $region36: #{nlayer_discriminator_forward.6} parent=5 // pred_fallthru
      _
    %p477 = scmp.le.s32.totalorder 2, %s10
    // Predicated region
    $region57: #{nlayer_discriminator_forward.6} parent=5 // pred_check
      %p478 = pneg %p477
    $region58: #{nlayer_discriminator_forward.6} parent=5 // pred_check_branch
      %480 = sbr.rel (%p478) target = $region60
    $region59: #{nlayer_discriminator_forward.6} parent=5 // pred_region
      %s481 = ssub.s32 %s10, 2
      // Predicated region
      $region61: #{nlayer_discriminator_forward.6} parent=59 // pred_check
        %p482 = pneg %p146
      $region62: #{nlayer_discriminator_forward.6} parent=59 // pred_check_branch
        %484 = sbr.rel (%p482) target = $region64
      $region63: #{nlayer_discriminator_forward.6} parent=59 // pred_region
        %s485 = smul.u32 %s22, %s21
        %p486 = scmp.lt.s32.totalorder %s485, 0
        %s487 = scalar_select %p486, %s485, 0
        %s488 = smul.addr %s487, 4
        %s489 = scalar_lea.vmem %s4, %s488
      $region64: #{nlayer_discriminator_forward.6} parent=59 // pred_fallthru
        _
    $region60: #{nlayer_discriminator_forward.6} parent=5 // pred_fallthru
      _
  $region6: #{nlayer_discriminator_forward.6} parent=0 // loop_footer
    %s14 = sadd.s32 1, %s10
  $region7: #{nlayer_discriminator_forward.6} parent=0 // loop_footer_branch
    %9 = sbr.rel target = $region3
  $region8: #{nlayer_discriminator_forward.6} parent=0 // loop_exit
    _

// kernel: nlayer_discriminator_forward.7
$region0: #{nlayer_discriminator_forward.7}
  #allocation0 [shape = 'u32[]', space=smem, size = 0x4, offset = 0x4, fixed_abs, tag = 'smem constant byte address 0x4 - core index']
  #allocation1 [shape = 'u32[144,128]{1,0:T(1,128)}', space=vmem, size = 0x12000, scoped, tag = 'internal scratch']
  #allocation2 [shape = 'f32[1,32,128]{2,1,0:T(8,128)}', space=vmem, size = 0x4000, scoped, tag = 'scratch operand']
  #allocation3 [shape = 'f32[32,1]{1,0:T(8,128)}', space=vmem, size = 0x4000, scoped, tag = 'scratch operand']
  #allocation4 [shape = 'f32[32,1]{1,0:T(8,128)}', space=vmem, size = 0x4000, scoped, tag = 'scratch operand']
  #allocation5 [shape = 'f32[32,1]{1,0:T(8,128)}', space=vmem, size = 0x4000, scoped, tag = 'scratch operand']
  #allocation6 [shape = 'f32[32,1]{1,0:T(8,128)}', space=vmem, size = 0x4000, scoped, tag = 'scratch operand']
  %s0 = inlined_call_operand.vmem [shape: bf16[256,128], index: 0, kind: input, shape index: {}]
  %s1 = inlined_call_operand.vmem [shape: bf16[32,256], index: 1, kind: input, shape index: {}]
  %s2 = inlined_call_operand.vmem [shape: f32[32,1], index: 2, kind: input, shape index: {}]
  %s3 = inlined_call_operand.vmem [shape: f32[32,1], index: 3, kind: input, shape index: {}]
  %s4 = inlined_call_operand.vmem [shape: bf16[32,128], index: 4, kind: output, shape index: {}]
  %s5 = sld [smem:[#allocation0]]
  $region65: #{nlayer_discriminator_forward.7} parent=0
    _
  %s7 = ssub.s32 1, %s5
  %s8 = scalar_select 0, %s7, %s5
  loop: start=0, step=1, limit=4
  $region2: #{nlayer_discriminator_forward.7} parent=0 // loop_pre_header
    _
  $region3: #{nlayer_discriminator_forward.7} parent=0 // loop_header
    %s10 = sphi 0, %s14
    %p11 = scmp.ge.s32.totalorder %s10, 4
    %s17 = sphi 0, %s29
    %s18 = sphi 0, %s25
    %s19 = sphi 0, %s17
    %s20 = sphi 0, %s18
    %s21 = sphi 0, %s19
    %s22 = sphi 0, %s20
    %s36 = sphi 0, %s38
    %s39 = sphi 0, %s36
    %s40 = sphi 0, %s39
    %s56 = sphi 0, %s40
    %s60 = sphi 0, %s60
    %s62 = sphi 0, %s60
    %s63 = sphi 0, %s62
    %s77 = sphi 0, %s63
    %s81 = sphi 0, %s81
    %s83 = sphi 0, %s81
    %s84 = sphi 0, %s83
    %s98 = sphi 0, %s84
    %s102 = sphi 0, %s102
    %s104 = sphi 0, %s102
    %s105 = sphi 0, %s104
    %s119 = sphi 0, %s105
    %s127 = sphi 0, %s129
    %s130 = sphi 0, %s127
    %s131 = sphi 0, %s130
    %s147 = sphi 0, %s131
  $region4: #{nlayer_discriminator_forward.7} parent=0 // loop_header_branch
    %13 = sbr.rel (%p11) target = $region8
  $region5: #{nlayer_discriminator_forward.7} parent=0 // loop_body
    %s15 = ssub.s32 %s10, 1
    %s16 = ssub.s32 %s10, 2
    %s23 = sadd.s32 1, %s18
    %p24 = scmp.ge.s32.totalorder %s23, 1
    %s25 = scalar_select %p24, 0, %s23
    %s26 = sadd.s32 1, %s17
    %s27 = scalar_select %p24, %s26, %s17
    %p28 = scmp.ge.s32.totalorder %s27, 2
    %s29 = scalar_select %p28, 0, %s27
    %s30 = ssub.s32 1, %s17
    %s31 = smul.u32 %s18, %s30
    %s32 = ssub.s32 1, %s29
    %s33 = smul.u32 %s25, %s32
    %s34 = ssub.s32 %s31, %s33
    %p35 = scmp.eq.s32.totalorder %s34, 0
    %s37 = sadd.s32 %s36, 1
    %s38 = scalar_select %p35, %s36, %s37
    %p41 = pneg %p35
    %p42 = scmp.eq.s32.totalorder %s10, 1
    %p43 = por %p41, %p42
    %p44 = scmp.ne.s32.totalorder %s36, %s39
    %p45 = scmp.eq.s32.totalorder %s10, 0
    %p46 = por %p44, %p45
    %p47 = scmp.ne.s32.totalorder %s36, %s39
    %p48 = scmp.eq.s32.totalorder %s15, 1
    %p49 = por %p47, %p48
    %p50 = scmp.ne.s32.totalorder %s39, %s40
    %p51 = scmp.eq.s32.totalorder %s15, 0
    %p52 = por %p50, %p51
    %p53 = scmp.ne.s32.totalorder %s39, %s40
    %p54 = scmp.eq.s32.totalorder %s16, 1
    %p55 = por %p53, %p54
    %p57 = scmp.ne.s32.totalorder %s40, %s56
    %p58 = scmp.eq.s32.totalorder %s16, 0
    %p59 = por %p57, %p58
    %s61 = sadd.s32 %s60, 1
    %p64 = scmp.eq.s32.totalorder %s10, 1
    %p65 = scmp.ne.s32.totalorder %s60, %s62
    %p66 = scmp.eq.s32.totalorder %s10, 0
    %p67 = por %p65, %p66
    %p68 = scmp.ne.s32.totalorder %s60, %s62
    %p69 = scmp.eq.s32.totalorder %s15, 1
    %p70 = por %p68, %p69
    %p71 = scmp.ne.s32.totalorder %s62, %s63
    %p72 = scmp.eq.s32.totalorder %s15, 0
    %p73 = por %p71, %p72
    %p74 = scmp.ne.s32.totalorder %s62, %s63
    %p75 = scmp.eq.s32.totalorder %s16, 1
    %p76 = por %p74, %p75
    %p78 = scmp.ne.s32.totalorder %s63, %s77
    %p79 = scmp.eq.s32.totalorder %s16, 0
    %p80 = por %p78, %p79
    %s82 = sadd.s32 %s81, 1
    %p85 = scmp.eq.s32.totalorder %s10, 1
    %p86 = scmp.ne.s32.totalorder %s81, %s83
    %p87 = scmp.eq.s32.totalorder %s10, 0
    %p88 = por %p86, %p87
    %p89 = scmp.ne.s32.totalorder %s81, %s83
    %p90 = scmp.eq.s32.totalorder %s15, 1
    %p91 = por %p89, %p90
    %p92 = scmp.ne.s32.totalorder %s83, %s84
    %p93 = scmp.eq.s32.totalorder %s15, 0
    %p94 = por %p92, %p93
    %p95 = scmp.ne.s32.totalorder %s83, %s84
    %p96 = scmp.eq.s32.totalorder %s16, 1
    %p97 = por %p95, %p96
    %p99 = scmp.ne.s32.totalorder %s84, %s98
    %p100 = scmp.eq.s32.totalorder %s16, 0
    %p101 = por %p99, %p100
    %s103 = sadd.s32 %s102, 1
    %p106 = scmp.eq.s32.totalorder %s10, 1
    %p107 = scmp.ne.s32.totalorder %s102, %s104
    %p108 = scmp.eq.s32.totalorder %s10, 0
    %p109 = por %p107, %p108
    %p110 = scmp.ne.s32.totalorder %s102, %s104
    %p111 = scmp.eq.s32.totalorder %s15, 1
    %p112 = por %p110, %p111
    %p113 = scmp.ne.s32.totalorder %s104, %s105
    %p114 = scmp.eq.s32.totalorder %s15, 0
    %p115 = por %p113, %p114
    %p116 = scmp.ne.s32.totalorder %s104, %s105
    %p117 = scmp.eq.s32.totalorder %s16, 1
    %p118 = por %p116, %p117
    %p120 = scmp.ne.s32.totalorder %s105, %s119
    %p121 = scmp.eq.s32.totalorder %s16, 0
    %p122 = por %p120, %p121
    %s123 = smul.u32 %s18, %s17
    %s124 = smul.u32 %s25, %s29
    %s125 = ssub.s32 %s123, %s124
    %p126 = scmp.eq.s32.totalorder %s125, 0
    %s128 = sadd.s32 %s127, 1
    %s129 = scalar_select %p126, %s127, %s128
    %p132 = pneg %p126
    %p133 = scmp.eq.s32.totalorder %s10, 1
    %p134 = por %p132, %p133
    %p135 = scmp.ne.s32.totalorder %s127, %s130
    %p136 = scmp.eq.s32.totalorder %s10, 0
    %p137 = por %p135, %p136
    %p138 = scmp.ne.s32.totalorder %s127, %s130
    %p139 = scmp.eq.s32.totalorder %s15, 1
    %p140 = por %p138, %p139
    %p141 = scmp.ne.s32.totalorder %s130, %s131
    %p142 = scmp.eq.s32.totalorder %s15, 0
    %p143 = por %p141, %p142
    %p144 = scmp.ne.s32.totalorder %s130, %s131
    %p145 = scmp.eq.s32.totalorder %s16, 1
    %p146 = por %p144, %p145
    %p148 = scmp.ne.s32.totalorder %s131, %s147
    %p149 = scmp.eq.s32.totalorder %s16, 0
    %p150 = por %p148, %p149
    %p151 = scmp.le.s32.totalorder 1, %s10
    %p152 = scmp.lt.s32.totalorder %s10, 3
    %p153 = pnand %p151, %p152
    %p154 = pneg %p153
    // Predicated region
    $region9: #{nlayer_discriminator_forward.7} parent=5 // pred_check
      _
    $region10: #{nlayer_discriminator_forward.7} parent=5 // pred_check_branch
      %156 = sbr.rel (%p153) target = $region12
    $region11: #{nlayer_discriminator_forward.7} parent=5 // pred_region
      %s157 = ssub.s32 %s10, 1
      // Predicated region
      $region13: #{nlayer_discriminator_forward.7} parent=11 // pred_check
        %p158 = pneg %p73
      $region14: #{nlayer_discriminator_forward.7} parent=11 // pred_check_branch
        %160 = sbr.rel (%p158) target = $region16
      $region15: #{nlayer_discriminator_forward.7} parent=11 // pred_region
        _
      $region16: #{nlayer_discriminator_forward.7} parent=11 // pred_fallthru
        _
      // Predicated region
      $region17: #{nlayer_discriminator_forward.7} parent=11 // pred_check
        %p161 = pneg %p94
      $region18: #{nlayer_discriminator_forward.7} parent=11 // pred_check_branch
        %163 = sbr.rel (%p161) target = $region20
      $region19: #{nlayer_discriminator_forward.7} parent=11 // pred_region
        _
      $region20: #{nlayer_discriminator_forward.7} parent=11 // pred_fallthru
        _
      // Predicated region
      $region21: #{nlayer_discriminator_forward.7} parent=11 // pred_check
        %p164 = pneg %p115
      $region22: #{nlayer_discriminator_forward.7} parent=11 // pred_check_branch
        %166 = sbr.rel (%p164) target = $region24
      $region23: #{nlayer_discriminator_forward.7} parent=11 // pred_region
        _
      $region24: #{nlayer_discriminator_forward.7} parent=11 // pred_fallthru
        _
    $region12: #{nlayer_discriminator_forward.7} parent=5 // pred_fallthru
      _
    %p167 = scmp.lt.s32.totalorder %s10, 2
    // Predicated region
    $region25: #{nlayer_discriminator_forward.7} parent=5 // pred_check
      %p168 = pneg %p167
    $region26: #{nlayer_discriminator_forward.7} parent=5 // pred_check_branch
      %170 = sbr.rel (%p168) target = $region28
    $region27: #{nlayer_discriminator_forward.7} parent=5 // pred_region
      // Predicated region
      $region29: #{nlayer_discriminator_forward.7} parent=27 // pred_check
        %p171 = pneg %p46
      $region30: #{nlayer_discriminator_forward.7} parent=27 // pred_check_branch
        %173 = sbr.rel (%p171) target = $region32
      $region31: #{nlayer_discriminator_forward.7} parent=27 // pred_region
        %s174 = ssub.s32 1, %s17
        %s175 = smul.u32 %s18, %s174
        %p176 = scmp.lt.s32.totalorder %s175, 0
        %s177 = scalar_select %p176, %s175, 0
        %s178 = smul.addr %s177, 4
        %s179 = scalar_lea.vmem %s0, %s178
        %s180 = ssub.s32 1, %s17
        %s181 = smul.u32 %s18, %s180
      $region32: #{nlayer_discriminator_forward.7} parent=27 // pred_fallthru
        _
    $region28: #{nlayer_discriminator_forward.7} parent=5 // pred_fallthru
      _
    %p182 = scmp.le.s32.totalorder 1, %s10
    %p183 = scmp.lt.s32.totalorder %s10, 3
    %p184 = pnand %p182, %p183
    %p185 = pneg %p184
    // Predicated region
    $region33: #{nlayer_discriminator_forward.7} parent=5 // pred_check
      _
    $region34: #{nlayer_discriminator_forward.7} parent=5 // pred_check_branch
      %187 = sbr.rel (%p184) target = $region36
    $region35: #{nlayer_discriminator_forward.7} parent=5 // pred_region
      %s188 = ssub.s32 %s10, 1
      %s189 = ssub.s32 1, %s19
      %s190 = smul.u32 %s20, %s189
      %p191 = scmp.lt.s32.totalorder %s190, 0
      %s192 = scalar_select %p191, %s190, 0
      %s193 = smul.addr %s192, 4
      %s194 = scalar_lea.vmem %s0, %s193
      %p195 = pneg %p52
      %p196 = pneg %p49
      %p197 = pneg %p73
      %p198 = pneg %p70
      %p199 = pneg %p94
      %p200 = pneg %p91
      %p201 = pneg %p115
      %p202 = pneg %p112
      %p203 = pneg %p143
      %p204 = pneg %p140
      %s205 = smul.u32 %s20, %s19
      %p206 = scmp.lt.s32.totalorder %s205, 0
      %s207 = scalar_select %p206, %s205, 0
      %s208 = smul.addr %s207, 4
      %s209 = scalar_lea.vmem %s4, %s208
      %s210 = ssub.s32 1, %s19
      %s211 = smul.u32 %s20, %s210
      %p212 = scmp.lt.s32.totalorder %s211, 0
      %s213 = scalar_select %p212, %s211, 0
      %s214 = smul.addr %s213, 4
      %s215 = scalar_lea.vmem %s0, %s214
      %s216 = ssub.s32 1, %s19
      %s217 = smul.u32 %s20, %s216
      %s218 = smul.u32 %s20, %s19
      %p219 = scmp.lt.s32.totalorder %s218, 0
      %s220 = scalar_select %p219, %s218, 0
      %s221 = smul.addr %s220, 4
      %s222 = scalar_lea.vmem %s4, %s221
      %s223 = smul.u32 %s20, %s19
      %p225 = scmp.eq.s32.totalorder %s19, 0
      %p226 = scmp.eq.s32.totalorder %s20, 0
      %p227 = pnand %p225, %p226
      %p228 = pneg %p227
      // Predicated region
      $region37: #{nlayer_discriminator_forward.7} parent=35 // pred_check
        _
      $region38: #{nlayer_discriminator_forward.7} parent=35 // pred_check_branch
        %230 = sbr.rel (%p227) target = $region40
      $region39: #{nlayer_discriminator_forward.7} parent=35 // pred_region
        %vm231 = vcmask 7168
        %232 = vst.msk [vmem:[#allocation3] sm:$0xff] %vm231, 0.0
        %233 = vst.msk [vmem:[#allocation3 + $0x8] sm:$0xff] %vm231, 0.0
        %234 = vst.msk [vmem:[#allocation3 + $0x10] sm:$0xff] %vm231, 0.0
        %235 = vst.msk [vmem:[#allocation3 + $0x18] sm:$0xff] %vm231, 0.0
        %236 = vst.msk [vmem:[#allocation4] sm:$0xff] %vm231, 0.0
        %237 = vst.msk [vmem:[#allocation4 + $0x8] sm:$0xff] %vm231, 0.0
        %238 = vst.msk [vmem:[#allocation4 + $0x10] sm:$0xff] %vm231, 0.0
        %239 = vst.msk [vmem:[#allocation4 + $0x18] sm:$0xff] %vm231, 0.0
      $region40: #{nlayer_discriminator_forward.7} parent=35 // pred_fallthru
        _
      // Predicated region
      $region41: #{nlayer_discriminator_forward.7} parent=35 // pred_check
        %p240 = pneg %p225
      $region42: #{nlayer_discriminator_forward.7} parent=35 // pred_check_branch
        %242 = sbr.rel (%p240) target = $region44
      $region43: #{nlayer_discriminator_forward.7} parent=35 // pred_region
        %v243 = vld [vmem:[%s1] sm:$0xff]
        %v244 = vld [vmem:[%s1 + $0x8] sm:$0xff]
        %v245 = vld [vmem:[%s1 + $0x10] sm:$0xff]
        %v246 = vld [vmem:[%s1 + $0x18] sm:$0xff]
        %v247 = vld [vmem:[%s215] sm:$0xf]
        %v248 = vld [vmem:[%s215 + $0x4] sm:$0xf]
        %v249 = vld [vmem:[%s215 + $0x8] sm:$0xf]
        %v250 = vld [vmem:[%s215 + $0xc] sm:$0xf]
        %v251 = vld [vmem:[%s215 + $0x10] sm:$0xf]
        %v252 = vld [vmem:[%s215 + $0x14] sm:$0xf]
        %v253 = vld [vmem:[%s215 + $0x18] sm:$0xf]
        %v254 = vld [vmem:[%s215 + $0x1c] sm:$0xf]
        %v255 = vld [vmem:[%s215 + $0x20] sm:$0xf]
        %v256 = vld [vmem:[%s215 + $0x24] sm:$0xf]
        %v257 = vld [vmem:[%s215 + $0x28] sm:$0xf]
        %v258 = vld [vmem:[%s215 + $0x2c] sm:$0xf]
        %v259 = vld [vmem:[%s215 + $0x30] sm:$0xf]
        %v260 = vld [vmem:[%s215 + $0x34] sm:$0xf]
        %v261 = vld [vmem:[%s215 + $0x38] sm:$0xf]
        %v262 = vld [vmem:[%s215 + $0x3c] sm:$0xf]
        %v263 = vld [vmem:[%s215 + $0x40] sm:$0xf]
        %v264 = vld [vmem:[%s215 + $0x44] sm:$0xf]
        %v265 = vld [vmem:[%s215 + $0x48] sm:$0xf]
        %v266 = vld [vmem:[%s215 + $0x4c] sm:$0xf]
        %v267 = vld [vmem:[%s215 + $0x50] sm:$0xf]
        %v268 = vld [vmem:[%s215 + $0x54] sm:$0xf]
        %v269 = vld [vmem:[%s215 + $0x58] sm:$0xf]
        %v270 = vld [vmem:[%s215 + $0x5c] sm:$0xf]
        %v271 = vld [vmem:[%s215 + $0x60] sm:$0xf]
        %v272 = vld [vmem:[%s215 + $0x64] sm:$0xf]
        %v273 = vld [vmem:[%s215 + $0x68] sm:$0xf]
        %v274 = vld [vmem:[%s215 + $0x6c] sm:$0xf]
        %v275 = vld [vmem:[%s215 + $0x70] sm:$0xf]
        %v276 = vld [vmem:[%s215 + $0x74] sm:$0xf]
        %v277 = vld [vmem:[%s215 + $0x78] sm:$0xf]
        %v278 = vld [vmem:[%s215 + $0x7c] sm:$0xf]
        %v283 = vunpack.c.l.b16 %v243
        %v284 = vunpack.c.h.b16 %v243
        %v285 = vunpack.c.l.b16 %v244
        %v286 = vunpack.c.h.b16 %v244
        %v287 = vunpack.c.l.b16 %v245
        %v288 = vunpack.c.h.b16 %v245
        %v289 = vunpack.c.l.b16 %v246
        %v290 = vunpack.c.h.b16 %v246
        %v291 = vpack.c.b16 %v285, %v283
        %v292 = vpack.c.b16 %v286, %v284
        %v293 = vpack.c.b16 %v289, %v287
        %v294 = vpack.c.b16 %v290, %v288
        %v331 = vunpack.c.l.b16 %v247
        %v332 = vunpack.c.l.b16 %v248
        %v333 = vunpack.c.l.b16 %v249
        %v334 = vunpack.c.l.b16 %v250
        %v335 = vunpack.c.l.b16 %v251
        %v336 = vunpack.c.l.b16 %v252
        %v337 = vunpack.c.l.b16 %v253
        %v338 = vunpack.c.l.b16 %v254
        %v339 = vunpack.c.l.b16 %v255
        %v340 = vunpack.c.l.b16 %v256
        %v341 = vunpack.c.l.b16 %v257
        %v342 = vunpack.c.l.b16 %v258
        %v343 = vunpack.c.l.b16 %v259
        %v344 = vunpack.c.l.b16 %v260
        %v345 = vunpack.c.l.b16 %v261
        %v346 = vunpack.c.l.b16 %v262
        %v347 = vunpack.c.l.b16 %v263
        %v348 = vunpack.c.l.b16 %v264
        %v349 = vunpack.c.l.b16 %v265
        %v350 = vunpack.c.l.b16 %v266
        %v351 = vunpack.c.l.b16 %v267
        %v352 = vunpack.c.l.b16 %v268
        %v353 = vunpack.c.l.b16 %v269
        %v354 = vunpack.c.l.b16 %v270
        %v355 = vunpack.c.l.b16 %v271
        %v356 = vunpack.c.l.b16 %v272
        %v357 = vunpack.c.l.b16 %v273
        %v358 = vunpack.c.l.b16 %v274
        %v359 = vunpack.c.l.b16 %v275
        %v360 = vunpack.c.l.b16 %v276
        %v361 = vunpack.c.l.b16 %v277
        %v362 = vunpack.c.l.b16 %v278
        %v363 = vpack.c.b16 %v332, %v331
        %v364 = vpack.c.b16 %v334, %v333
        %v365 = vpack.c.b16 %v336, %v335
        %v366 = vpack.c.b16 %v338, %v337
        %v367 = vpack.c.b16 %v340, %v339
        %v368 = vpack.c.b16 %v342, %v341
        %v369 = vpack.c.b16 %v344, %v343
        %v370 = vpack.c.b16 %v346, %v345
        %v371 = vpack.c.b16 %v348, %v347
        %v372 = vpack.c.b16 %v350, %v349
        %v373 = vpack.c.b16 %v352, %v351
        %v374 = vpack.c.b16 %v354, %v353
        %v375 = vpack.c.b16 %v356, %v355
        %v376 = vpack.c.b16 %v358, %v357
        %v377 = vpack.c.b16 %v360, %v359
        %v378 = vpack.c.b16 %v362, %v361
        %395 = vmatprep.subr.bf16.mxu0 0
        %396 = vmatpush1.bf16.msra.mxu0 %v370
        %397 = vmatprep.subr.bf16.mxu0 0
        %398 = vmatpush1.bf16.msra.mxu0 %v369
        %399 = vmatprep.subr.bf16.mxu0 0
        %400 = vmatpush1.bf16.msra.mxu0 %v368
        %401 = vmatprep.subr.bf16.mxu0 0
        %402 = vmatpush1.bf16.msra.mxu0 %v367
        %403 = vmatprep.subr.bf16.mxu0 0
        %404 = vmatpush1.bf16.msra.mxu0 %v366
        %405 = vmatprep.subr.bf16.mxu0 0
        %406 = vmatpush1.bf16.msra.mxu0 %v365
        %407 = vmatprep.subr.bf16.mxu0 0
        %408 = vmatpush1.bf16.msra.mxu0 %v364
        %409 = vmatprep.subr.bf16.mxu0 0
        %410 = vmatpush1.bf16.msra.mxu0 %v363
        %411 = vmatprep.subr.bf16.mxu0 0
        %412 = vmatpush2.bf16.msra.mxu0 %v378
        %413 = vmatprep.subr.bf16.mxu0 0
        %414 = vmatpush2.bf16.msra.mxu0 %v377
        %415 = vmatprep.subr.bf16.mxu0 0
        %416 = vmatpush2.bf16.msra.mxu0 %v376
        %417 = vmatprep.subr.bf16.mxu0 0
        %418 = vmatpush2.bf16.msra.mxu0 %v375
        %419 = vmatprep.subr.bf16.mxu0 0
        %420 = vmatpush2.bf16.msra.mxu0 %v374
        %421 = vmatprep.subr.bf16.mxu0 0
        %422 = vmatpush2.bf16.msra.mxu0 %v373
        %423 = vmatprep.subr.bf16.mxu0 0
        %424 = vmatpush2.bf16.msra.mxu0 %v372
        %425 = vmatprep.subr.bf16.mxu0 0
        %426 = vmatpush2.bf16.msra.mxu0 %v371
        %427 = vmatprep.mubr.bf16.mxu0 %v292
        %428 = vmatmul.mubr.bf16.gmra.mxu0 %v291
        %v429 = vpop.f32.mrf.mxu0
        %v430 = vadd.f32 0.0, %v429
        %v431 = vpop.f32.mrf.mxu0
        %v432 = vpop.f32.mrf.mxu0
        %v433 = vadd.f32 0.0, %v432
        %v434 = vpop.f32.mrf.mxu0
        %435 = vmatprep.mubr.bf16.mxu0 %v294
        %436 = vmatmul.mubr.bf16.gmra.mxu0 %v293
        %v437 = vpop.f32.mrf.mxu0
        %v438 = vadd.f32 0.0, %v437
        %v439 = vpop.f32.mrf.mxu0
        %v440 = vpop.f32.mrf.mxu0
        %v441 = vadd.f32 0.0, %v440
        %v442 = vpop.f32.mrf.mxu0
        %443 = vdwg.mxu0
        %s444 = smul.u32 %s20, 32
        %s445 = scalar_lea.vmem [#allocation2], %s444
        %446 = vst [vmem:[%s445] sm:$0xff] %v430
        %447 = vst [vmem:[%s445 + $0x8] sm:$0xff] %v433
        %448 = vst [vmem:[%s445 + $0x10] sm:$0xff] %v438
        %449 = vst [vmem:[%s445 + $0x18] sm:$0xff] %v441
        %v450 = vld [vmem:[#allocation3] sm:$0xff]
        %v451 = vld [vmem:[#allocation3 + $0x8] sm:$0xff]
        %v452 = vld [vmem:[#allocation3 + $0x10] sm:$0xff]
        %v453 = vld [vmem:[#allocation3 + $0x18] sm:$0xff]
        %454 = vadd.xlane.f32.xlu0 %v430
        %v455 = vpop.xlane.xlu0 %454
        %456 = vadd.xlane.f32.xlu0 %v433
        %v457 = vpop.xlane.xlu0 %456
        %458 = vadd.xlane.f32.xlu0 %v438
        %v459 = vpop.xlane.xlu0 %458
        %460 = vadd.xlane.f32.xlu0 %v441
        %v461 = vpop.xlane.xlu0 %460
        %v462 = vadd.f32 %v450, %v455
        %v463 = vadd.f32 %v451, %v457
        %v464 = vadd.f32 %v452, %v459
        %v465 = vadd.f32 %v453, %v461
        %vm466 = vcmask 7168
        %467 = vst.msk [vmem:[#allocation3] sm:$0xff] %vm466, %v462
        %468 = vst.msk [vmem:[#allocation3 + $0x8] sm:$0xff] %vm466, %v463
        %469 = vst.msk [vmem:[#allocation3 + $0x10] sm:$0xff] %vm466, %v464
        %470 = vst.msk [vmem:[#allocation3 + $0x18] sm:$0xff] %vm466, %v465
        %v471 = vld [vmem:[#allocation4] sm:$0xff]
        %v472 = vld [vmem:[#allocation4 + $0x8] sm:$0xff]
        %v473 = vld [vmem:[#allocation4 + $0x10] sm:$0xff]
        %v474 = vld [vmem:[#allocation4 + $0x18] sm:$0xff]
        %v475 = vmul.f32 %v430, %v430
        %v476 = vmul.f32 %v433, %v433
        %v477 = vmul.f32 %v438, %v438
        %v478 = vmul.f32 %v441, %v441
        %479 = vadd.xlane.f32.xlu0 %v475
        %v480 = vpop.xlane.xlu0 %479
        %481 = vadd.xlane.f32.xlu0 %v476
        %v482 = vpop.xlane.xlu0 %481
        %483 = vadd.xlane.f32.xlu0 %v477
        %v484 = vpop.xlane.xlu0 %483
        %485 = vadd.xlane.f32.xlu0 %v478
        %v486 = vpop.xlane.xlu0 %485
        %v487 = vadd.f32 %v471, %v480
        %v488 = vadd.f32 %v472, %v482
        %v489 = vadd.f32 %v473, %v484
        %v490 = vadd.f32 %v474, %v486
        %491 = vst.msk [vmem:[#allocation4] sm:$0xff] %vm466, %v487
        %492 = vst.msk [vmem:[#allocation4 + $0x8] sm:$0xff] %vm466, %v488
        %493 = vst.msk [vmem:[#allocation4 + $0x10] sm:$0xff] %vm466, %v489
        %494 = vst.msk [vmem:[#allocation4 + $0x18] sm:$0xff] %vm466, %v490
      $region44: #{nlayer_discriminator_forward.7} parent=35 // pred_fallthru
        _
      %p495 = scmp.eq.s32.totalorder %s19, 1
      %p496 = pnand %p495, %p226
      %p497 = pneg %p496
      // Predicated region
      $region45: #{nlayer_discriminator_forward.7} parent=35 // pred_check
        _
      $region46: #{nlayer_discriminator_forward.7} parent=35 // pred_check_branch
        %499 = sbr.rel (%p496) target = $region48
      $region47: #{nlayer_discriminator_forward.7} parent=35 // pred_region
        %v500 = vld [vmem:[#allocation3] sm:$0xff]
        %v501 = vld [vmem:[#allocation3 + $0x8] sm:$0xff]
        %v502 = vld [vmem:[#allocation3 + $0x10] sm:$0xff]
        %v503 = vld [vmem:[#allocation3 + $0x18] sm:$0xff]
        %v504 = vmul.f32 %v500, 0.055555556
        %v505 = vmul.f32 %v501, 0.055555556
        %v506 = vmul.f32 %v502, 0.055555556
        %v507 = vmul.f32 %v503, 0.055555556
        %v508 = vld [vmem:[#allocation4] sm:$0xff]
        %v509 = vld [vmem:[#allocation4 + $0x8] sm:$0xff]
        %v510 = vld [vmem:[#allocation4 + $0x10] sm:$0xff]
        %v511 = vld [vmem:[#allocation4 + $0x18] sm:$0xff]
        %v512 = vmul.f32 %v508, 0.055555556
        %v513 = vmul.f32 %v509, 0.055555556
        %v514 = vmul.f32 %v510, 0.055555556
        %v515 = vmul.f32 %v511, 0.055555556
        %v516 = vmul.f32 %v504, %v504
        %v517 = vmul.f32 %v505, %v505
        %v518 = vmul.f32 %v506, %v506
        %v519 = vmul.f32 %v507, %v507
        %v520 = vsub.f32 %v512, %v516
        %v521 = vsub.f32 %v513, %v517
        %v522 = vsub.f32 %v514, %v518
        %v523 = vsub.f32 %v515, %v519
        %v524 = vmax.f32 %v520, 0.0
        %v525 = vmax.f32 %v521, 0.0
        %v526 = vmax.f32 %v522, 0.0
        %v527 = vmax.f32 %v523, 0.0
        %v528 = vld [vmem:[%s2] sm:$0xff]
        %v529 = vld [vmem:[%s2 + $0x8] sm:$0xff]
        %v530 = vld [vmem:[%s2 + $0x10] sm:$0xff]
        %v531 = vld [vmem:[%s2 + $0x18] sm:$0xff]
        %v532 = vadd.f32 %v524, 1e-05
        %v533 = vadd.f32 %v525, 1e-05
        %v534 = vadd.f32 %v526, 1e-05
        %v535 = vadd.f32 %v527, 1e-05
        %v536 = vrsqrt.pop %v532
        %v537 = vrsqrt.pop %v533
        %v538 = vrsqrt.pop %v534
        %v539 = vrsqrt.pop %v535
        %v540 = vmul.f32 %v528, %v536
        %v541 = vmul.f32 %v529, %v537
        %v542 = vmul.f32 %v530, %v538
        %v543 = vmul.f32 %v531, %v539
        %vm544 = vcmask 7168
        %545 = vst.msk [vmem:[#allocation5] sm:$0xff] %vm544, %v540
        %546 = vst.msk [vmem:[#allocation5 + $0x8] sm:$0xff] %vm544, %v541
        %547 = vst.msk [vmem:[#allocation5 + $0x10] sm:$0xff] %vm544, %v542
        %548 = vst.msk [vmem:[#allocation5 + $0x18] sm:$0xff] %vm544, %v543
        %v549 = vld [vmem:[%s3] sm:$0xff]
        %v550 = vld [vmem:[%s3 + $0x8] sm:$0xff]
        %v551 = vld [vmem:[%s3 + $0x10] sm:$0xff]
        %v552 = vld [vmem:[%s3 + $0x18] sm:$0xff]
        %v553 = vmul.f32 %v504, %v540
        %v554 = vmul.f32 %v505, %v541
        %v555 = vmul.f32 %v506, %v542
        %v556 = vmul.f32 %v507, %v543
        %v557 = vsub.f32 %v549, %v553
        %v558 = vsub.f32 %v550, %v554
        %v559 = vsub.f32 %v551, %v555
        %v560 = vsub.f32 %v552, %v556
        %561 = vst.msk [vmem:[#allocation6] sm:$0xff] %vm544, %v557
        %562 = vst.msk [vmem:[#allocation6 + $0x8] sm:$0xff] %vm544, %v558
        %563 = vst.msk [vmem:[#allocation6 + $0x10] sm:$0xff] %vm544, %v559
        %564 = vst.msk [vmem:[#allocation6 + $0x18] sm:$0xff] %vm544, %v560
      $region48: #{nlayer_discriminator_forward.7} parent=35 // pred_fallthru
        _
      // Predicated region
      $region49: #{nlayer_discriminator_forward.7} parent=35 // pred_check
        %p565 = pneg %p495
      $region50: #{nlayer_discriminator_forward.7} parent=35 // pred_check_branch
        %567 = sbr.rel (%p565) target = $region52
      $region51: #{nlayer_discriminator_forward.7} parent=35 // pred_region
        %s568 = smul.u32 %s20, 32
        %s569 = scalar_lea.vmem [#allocation2], %s568
        %v570 = vld [vmem:[%s569] sm:$0xff]
        %v571 = vld [vmem:[%s569 + $0x8] sm:$0xff]
        %v572 = vld [vmem:[%s569 + $0x10] sm:$0xff]
        %v573 = vld [vmem:[%s569 + $0x18] sm:$0xff]
        %v574 = vld [vmem:[#allocation5] sm:$0xff]
        %v575 = vld [vmem:[#allocation5 + $0x8] sm:$0xff]
        %v576 = vld [vmem:[#allocation5 + $0x10] sm:$0xff]
        %v577 = vld [vmem:[#allocation5 + $0x18] sm:$0xff]
        %579 = vset.pattern.permute.xlu0 0
        %580 = vperm.xlu0 %579, %v574
        %v581 = vpop.permute.xlu0 %580
        %584 = vset.pattern.permute.xlu0 0
        %585 = vperm.xlu0 %584, %v575
        %v586 = vpop.permute.xlu0 %585
        %589 = vset.pattern.permute.xlu0 0
        %590 = vperm.xlu0 %589, %v576
        %v591 = vpop.permute.xlu0 %590
        %594 = vset.pattern.permute.xlu0 0
        %595 = vperm.xlu0 %594, %v577
        %v596 = vpop.permute.xlu0 %595
        %v598 = vmul.f32 %v570, %v581
        %v599 = vmul.f32 %v571, %v586
        %v600 = vmul.f32 %v572, %v591
        %v601 = vmul.f32 %v573, %v596
        %v602 = vld [vmem:[#allocation6] sm:$0xff]
        %v603 = vld [vmem:[#allocation6 + $0x8] sm:$0xff]
        %v604 = vld [vmem:[#allocation6 + $0x10] sm:$0xff]
        %v605 = vld [vmem:[#allocation6 + $0x18] sm:$0xff]
        %607 = vset.pattern.permute.xlu0 0
        %608 = vperm.xlu0 %607, %v602
        %v609 = vpop.permute.xlu0 %608
        %612 = vset.pattern.permute.xlu0 0
        %613 = vperm.xlu0 %612, %v603
        %v614 = vpop.permute.xlu0 %613
        %617 = vset.pattern.permute.xlu0 0
        %618 = vperm.xlu0 %617, %v604
        %v619 = vpop.permute.xlu0 %618
        %622 = vset.pattern.permute.xlu0 0
        %623 = vperm.xlu0 %622, %v605
        %v624 = vpop.permute.xlu0 %623
        %v626 = vadd.f32 %v598, %v609
        %v627 = vadd.f32 %v599, %v614
        %v628 = vadd.f32 %v600, %v619
        %v629 = vadd.f32 %v601, %v624
        %vm630 = vcmp.ge.f32.partialorder %v626, 0.0
        %vm631 = vcmp.ge.f32.partialorder %v627, 0.0
        %vm632 = vcmp.ge.f32.partialorder %v628, 0.0
        %vm633 = vcmp.ge.f32.partialorder %v629, 0.0
        %v634 = vmul.f32 %v626, 0.2
        %v635 = vmul.f32 %v627, 0.2
        %v636 = vmul.f32 %v628, 0.2
        %v637 = vmul.f32 %v629, 0.2
        %v638 = vsel %vm630, %v626, %v634
        %v639 = vsel %vm631, %v627, %v635
        %v640 = vsel %vm632, %v628, %v636
        %v641 = vsel %vm633, %v629, %v637
        %v642 = vpack.c.bf16 %v639, %v638
        %v643 = vpack.c.bf16 %v641, %v640
        %v646 = vunpack.c.l.b16 %v642
        %v647 = vunpack.c.h.b16 %v642
        %v648 = vunpack.c.l.b16 %v643
        %v649 = vunpack.c.h.b16 %v643
        %v650 = vpack.c.b16 %v646, %v646
        %v651 = vpack.c.b16 %v647, %v647
        %v652 = vpack.c.b16 %v648, %v648
        %v653 = vpack.c.b16 %v649, %v649
        %658 = vst [vmem:[%s222] sm:$0xf] %v650
        %659 = vst [vmem:[%s222 + $0x4] sm:$0xf] %v651
        %660 = vst [vmem:[%s222 + $0x8] sm:$0xf] %v652
        %661 = vst [vmem:[%s222 + $0xc] sm:$0xf] %v653
      $region52: #{nlayer_discriminator_forward.7} parent=35 // pred_fallthru
        _
      %s662 = smul.u32 %s20, %s19
      %p663 = scmp.lt.s32.totalorder %s662, 0
      %s664 = scalar_select %p663, %s662, 0
      %s665 = smul.addr %s664, 4
      %s666 = scalar_lea.vmem %s4, %s665
      // Predicated region
      $region53: #{nlayer_discriminator_forward.7} parent=35 // pred_check
        %p667 = pneg %p140
      $region54: #{nlayer_discriminator_forward.7} parent=35 // pred_check_branch
        %669 = sbr.rel (%p667) target = $region56
      $region55: #{nlayer_discriminator_forward.7} parent=35 // pred_region
        %s670 = smul.u32 %s20, %s19
      $region56: #{nlayer_discriminator_forward.7} parent=35 // pred_fallthru
        _
    $region36: #{nlayer_discriminator_forward.7} parent=5 // pred_fallthru
      _
    %p671 = scmp.le.s32.totalorder 2, %s10
    // Predicated region
    $region57: #{nlayer_discriminator_forward.7} parent=5 // pred_check
      %p672 = pneg %p671
    $region58: #{nlayer_discriminator_forward.7} parent=5 // pred_check_branch
      %674 = sbr.rel (%p672) target = $region60
    $region59: #{nlayer_discriminator_forward.7} parent=5 // pred_region
      %s675 = ssub.s32 %s10, 2
      // Predicated region
      $region61: #{nlayer_discriminator_forward.7} parent=59 // pred_check
        %p676 = pneg %p146
      $region62: #{nlayer_discriminator_forward.7} parent=59 // pred_check_branch
        %678 = sbr.rel (%p676) target = $region64
      $region63: #{nlayer_discriminator_forward.7} parent=59 // pred_region
        %s679 = smul.u32 %s22, %s21
        %p680 = scmp.lt.s32.totalorder %s679, 0
        %s681 = scalar_select %p680, %s679, 0
        %s682 = smul.addr %s681, 4
        %s683 = scalar_lea.vmem %s4, %s682
      $region64: #{nlayer_discriminator_forward.7} parent=59 // pred_fallthru
        _
    $region60: #{nlayer_discriminator_forward.7} parent=5 // pred_fallthru
      _
  $region6: #{nlayer_discriminator_forward.7} parent=0 // loop_footer
    %s14 = sadd.s32 1, %s10
  $region7: #{nlayer_discriminator_forward.7} parent=0 // loop_footer_branch
    %9 = sbr.rel target = $region3
  $region8: #{nlayer_discriminator_forward.7} parent=0 // loop_exit
    _

// kernel: nlayer_discriminator_forward.8
$region0: #{nlayer_discriminator_forward.8}
  #allocation0 [shape = 'u32[]', space=smem, size = 0x4, offset = 0x4, fixed_abs, tag = 'smem constant byte address 0x4 - core index']
  #allocation1 [shape = 'u32[144,128]{1,0:T(1,128)}', space=vmem, size = 0x12000, scoped, tag = 'internal scratch']
  #allocation2 [shape = 'f32[1,64,128]{2,1,0:T(8,128)}', space=vmem, size = 0x8000, scoped, tag = 'scratch operand']
  #allocation3 [shape = 'f32[64,1]{1,0:T(8,128)}', space=vmem, size = 0x8000, scoped, tag = 'scratch operand']
  #allocation4 [shape = 'f32[64,1]{1,0:T(8,128)}', space=vmem, size = 0x8000, scoped, tag = 'scratch operand']
  #allocation5 [shape = 'f32[64,1]{1,0:T(8,128)}', space=vmem, size = 0x8000, scoped, tag = 'scratch operand']
  #allocation6 [shape = 'f32[64,1]{1,0:T(8,128)}', space=vmem, size = 0x8000, scoped, tag = 'scratch operand']
  %s0 = inlined_call_operand.vmem [shape: bf16[512,128], index: 0, kind: input, shape index: {}]
  %s1 = inlined_call_operand.vmem [shape: bf16[64,512], index: 1, kind: input, shape index: {}]
  %s2 = inlined_call_operand.vmem [shape: f32[64,1], index: 2, kind: input, shape index: {}]
  %s3 = inlined_call_operand.vmem [shape: f32[64,1], index: 3, kind: input, shape index: {}]
  %s4 = inlined_call_operand.vmem [shape: bf16[64,128], index: 4, kind: output, shape index: {}]
  %s5 = sld [smem:[#allocation0]]
  $region65: #{nlayer_discriminator_forward.8} parent=0
    _
  %s7 = ssub.s32 1, %s5
  %s8 = scalar_select 0, %s7, %s5
  loop: start=0, step=1, limit=4
  $region2: #{nlayer_discriminator_forward.8} parent=0 // loop_pre_header
    _
  $region3: #{nlayer_discriminator_forward.8} parent=0 // loop_header
    %s10 = sphi 0, %s14
    %p11 = scmp.ge.s32.totalorder %s10, 4
    %s17 = sphi 0, %s29
    %s18 = sphi 0, %s25
    %s19 = sphi 0, %s17
    %s20 = sphi 0, %s18
    %s21 = sphi 0, %s19
    %s22 = sphi 0, %s20
    %s36 = sphi 0, %s38
    %s39 = sphi 0, %s36
    %s40 = sphi 0, %s39
    %s56 = sphi 0, %s40
    %s60 = sphi 0, %s60
    %s62 = sphi 0, %s60
    %s63 = sphi 0, %s62
    %s77 = sphi 0, %s63
    %s81 = sphi 0, %s81
    %s83 = sphi 0, %s81
    %s84 = sphi 0, %s83
    %s98 = sphi 0, %s84
    %s102 = sphi 0, %s102
    %s104 = sphi 0, %s102
    %s105 = sphi 0, %s104
    %s119 = sphi 0, %s105
    %s127 = sphi 0, %s129
    %s130 = sphi 0, %s127
    %s131 = sphi 0, %s130
    %s147 = sphi 0, %s131
  $region4: #{nlayer_discriminator_forward.8} parent=0 // loop_header_branch
    %13 = sbr.rel (%p11) target = $region8
  $region5: #{nlayer_discriminator_forward.8} parent=0 // loop_body
    %s15 = ssub.s32 %s10, 1
    %s16 = ssub.s32 %s10, 2
    %s23 = sadd.s32 1, %s18
    %p24 = scmp.ge.s32.totalorder %s23, 1
    %s25 = scalar_select %p24, 0, %s23
    %s26 = sadd.s32 1, %s17
    %s27 = scalar_select %p24, %s26, %s17
    %p28 = scmp.ge.s32.totalorder %s27, 2
    %s29 = scalar_select %p28, 0, %s27
    %s30 = ssub.s32 1, %s17
    %s31 = smul.u32 %s18, %s30
    %s32 = ssub.s32 1, %s29
    %s33 = smul.u32 %s25, %s32
    %s34 = ssub.s32 %s31, %s33
    %p35 = scmp.eq.s32.totalorder %s34, 0
    %s37 = sadd.s32 %s36, 1
    %s38 = scalar_select %p35, %s36, %s37
    %p41 = pneg %p35
    %p42 = scmp.eq.s32.totalorder %s10, 1
    %p43 = por %p41, %p42
    %p44 = scmp.ne.s32.totalorder %s36, %s39
    %p45 = scmp.eq.s32.totalorder %s10, 0
    %p46 = por %p44, %p45
    %p47 = scmp.ne.s32.totalorder %s36, %s39
    %p48 = scmp.eq.s32.totalorder %s15, 1
    %p49 = por %p47, %p48
    %p50 = scmp.ne.s32.totalorder %s39, %s40
    %p51 = scmp.eq.s32.totalorder %s15, 0
    %p52 = por %p50, %p51
    %p53 = scmp.ne.s32.totalorder %s39, %s40
    %p54 = scmp.eq.s32.totalorder %s16, 1
    %p55 = por %p53, %p54
    %p57 = scmp.ne.s32.totalorder %s40, %s56
    %p58 = scmp.eq.s32.totalorder %s16, 0
    %p59 = por %p57, %p58
    %s61 = sadd.s32 %s60, 1
    %p64 = scmp.eq.s32.totalorder %s10, 1
    %p65 = scmp.ne.s32.totalorder %s60, %s62
    %p66 = scmp.eq.s32.totalorder %s10, 0
    %p67 = por %p65, %p66
    %p68 = scmp.ne.s32.totalorder %s60, %s62
    %p69 = scmp.eq.s32.totalorder %s15, 1
    %p70 = por %p68, %p69
    %p71 = scmp.ne.s32.totalorder %s62, %s63
    %p72 = scmp.eq.s32.totalorder %s15, 0
    %p73 = por %p71, %p72
    %p74 = scmp.ne.s32.totalorder %s62, %s63
    %p75 = scmp.eq.s32.totalorder %s16, 1
    %p76 = por %p74, %p75
    %p78 = scmp.ne.s32.totalorder %s63, %s77
    %p79 = scmp.eq.s32.totalorder %s16, 0
    %p80 = por %p78, %p79
    %s82 = sadd.s32 %s81, 1
    %p85 = scmp.eq.s32.totalorder %s10, 1
    %p86 = scmp.ne.s32.totalorder %s81, %s83
    %p87 = scmp.eq.s32.totalorder %s10, 0
    %p88 = por %p86, %p87
    %p89 = scmp.ne.s32.totalorder %s81, %s83
    %p90 = scmp.eq.s32.totalorder %s15, 1
    %p91 = por %p89, %p90
    %p92 = scmp.ne.s32.totalorder %s83, %s84
    %p93 = scmp.eq.s32.totalorder %s15, 0
    %p94 = por %p92, %p93
    %p95 = scmp.ne.s32.totalorder %s83, %s84
    %p96 = scmp.eq.s32.totalorder %s16, 1
    %p97 = por %p95, %p96
    %p99 = scmp.ne.s32.totalorder %s84, %s98
    %p100 = scmp.eq.s32.totalorder %s16, 0
    %p101 = por %p99, %p100
    %s103 = sadd.s32 %s102, 1
    %p106 = scmp.eq.s32.totalorder %s10, 1
    %p107 = scmp.ne.s32.totalorder %s102, %s104
    %p108 = scmp.eq.s32.totalorder %s10, 0
    %p109 = por %p107, %p108
    %p110 = scmp.ne.s32.totalorder %s102, %s104
    %p111 = scmp.eq.s32.totalorder %s15, 1
    %p112 = por %p110, %p111
    %p113 = scmp.ne.s32.totalorder %s104, %s105
    %p114 = scmp.eq.s32.totalorder %s15, 0
    %p115 = por %p113, %p114
    %p116 = scmp.ne.s32.totalorder %s104, %s105
    %p117 = scmp.eq.s32.totalorder %s16, 1
    %p118 = por %p116, %p117
    %p120 = scmp.ne.s32.totalorder %s105, %s119
    %p121 = scmp.eq.s32.totalorder %s16, 0
    %p122 = por %p120, %p121
    %s123 = smul.u32 %s18, %s17
    %s124 = smul.u32 %s25, %s29
    %s125 = ssub.s32 %s123, %s124
    %p126 = scmp.eq.s32.totalorder %s125, 0
    %s128 = sadd.s32 %s127, 1
    %s129 = scalar_select %p126, %s127, %s128
    %p132 = pneg %p126
    %p133 = scmp.eq.s32.totalorder %s10, 1
    %p134 = por %p132, %p133
    %p135 = scmp.ne.s32.totalorder %s127, %s130
    %p136 = scmp.eq.s32.totalorder %s10, 0
    %p137 = por %p135, %p136
    %p138 = scmp.ne.s32.totalorder %s127, %s130
    %p139 = scmp.eq.s32.totalorder %s15, 1
    %p140 = por %p138, %p139
    %p141 = scmp.ne.s32.totalorder %s130, %s131
    %p142 = scmp.eq.s32.totalorder %s15, 0
    %p143 = por %p141, %p142
    %p144 = scmp.ne.s32.totalorder %s130, %s131
    %p145 = scmp.eq.s32.totalorder %s16, 1
    %p146 = por %p144, %p145
    %p148 = scmp.ne.s32.totalorder %s131, %s147
    %p149 = scmp.eq.s32.totalorder %s16, 0
    %p150 = por %p148, %p149
    %p151 = scmp.le.s32.totalorder 1, %s10
    %p152 = scmp.lt.s32.totalorder %s10, 3
    %p153 = pnand %p151, %p152
    %p154 = pneg %p153
    // Predicated region
    $region9: #{nlayer_discriminator_forward.8} parent=5 // pred_check
      _
    $region10: #{nlayer_discriminator_forward.8} parent=5 // pred_check_branch
      %156 = sbr.rel (%p153) target = $region12
    $region11: #{nlayer_discriminator_forward.8} parent=5 // pred_region
      %s157 = ssub.s32 %s10, 1
      // Predicated region
      $region13: #{nlayer_discriminator_forward.8} parent=11 // pred_check
        %p158 = pneg %p73
      $region14: #{nlayer_discriminator_forward.8} parent=11 // pred_check_branch
        %160 = sbr.rel (%p158) target = $region16
      $region15: #{nlayer_discriminator_forward.8} parent=11 // pred_region
        _
      $region16: #{nlayer_discriminator_forward.8} parent=11 // pred_fallthru
        _
      // Predicated region
      $region17: #{nlayer_discriminator_forward.8} parent=11 // pred_check
        %p161 = pneg %p94
      $region18: #{nlayer_discriminator_forward.8} parent=11 // pred_check_branch
        %163 = sbr.rel (%p161) target = $region20
      $region19: #{nlayer_discriminator_forward.8} parent=11 // pred_region
        _
      $region20: #{nlayer_discriminator_forward.8} parent=11 // pred_fallthru
        _
      // Predicated region
      $region21: #{nlayer_discriminator_forward.8} parent=11 // pred_check
        %p164 = pneg %p115
      $region22: #{nlayer_discriminator_forward.8} parent=11 // pred_check_branch
        %166 = sbr.rel (%p164) target = $region24
      $region23: #{nlayer_discriminator_forward.8} parent=11 // pred_region
        _
      $region24: #{nlayer_discriminator_forward.8} parent=11 // pred_fallthru
        _
    $region12: #{nlayer_discriminator_forward.8} parent=5 // pred_fallthru
      _
    %p167 = scmp.lt.s32.totalorder %s10, 2
    // Predicated region
    $region25: #{nlayer_discriminator_forward.8} parent=5 // pred_check
      %p168 = pneg %p167
    $region26: #{nlayer_discriminator_forward.8} parent=5 // pred_check_branch
      %170 = sbr.rel (%p168) target = $region28
    $region27: #{nlayer_discriminator_forward.8} parent=5 // pred_region
      // Predicated region
      $region29: #{nlayer_discriminator_forward.8} parent=27 // pred_check
        %p171 = pneg %p46
      $region30: #{nlayer_discriminator_forward.8} parent=27 // pred_check_branch
        %173 = sbr.rel (%p171) target = $region32
      $region31: #{nlayer_discriminator_forward.8} parent=27 // pred_region
        %s174 = ssub.s32 1, %s17
        %s175 = smul.u32 %s18, %s174
        %p176 = scmp.lt.s32.totalorder %s175, 0
        %s177 = scalar_select %p176, %s175, 0
        %s178 = smul.addr %s177, 4
        %s179 = scalar_lea.vmem %s0, %s178
        %s180 = ssub.s32 1, %s17
        %s181 = smul.u32 %s18, %s180
      $region32: #{nlayer_discriminator_forward.8} parent=27 // pred_fallthru
        _
    $region28: #{nlayer_discriminator_forward.8} parent=5 // pred_fallthru
      _
    %p182 = scmp.le.s32.totalorder 1, %s10
    %p183 = scmp.lt.s32.totalorder %s10, 3
    %p184 = pnand %p182, %p183
    %p185 = pneg %p184
    // Predicated region
    $region33: #{nlayer_discriminator_forward.8} parent=5 // pred_check
      _
    $region34: #{nlayer_discriminator_forward.8} parent=5 // pred_check_branch
      %187 = sbr.rel (%p184) target = $region36
    $region35: #{nlayer_discriminator_forward.8} parent=5 // pred_region
      %s188 = ssub.s32 %s10, 1
      %s189 = ssub.s32 1, %s19
      %s190 = smul.u32 %s20, %s189
      %p191 = scmp.lt.s32.totalorder %s190, 0
      %s192 = scalar_select %p191, %s190, 0
      %s193 = smul.addr %s192, 4
      %s194 = scalar_lea.vmem %s0, %s193
      %p195 = pneg %p52
      %p196 = pneg %p49
      %p197 = pneg %p73
      %p198 = pneg %p70
      %p199 = pneg %p94
      %p200 = pneg %p91
      %p201 = pneg %p115
      %p202 = pneg %p112
      %p203 = pneg %p143
      %p204 = pneg %p140
      %s205 = smul.u32 %s20, %s19
      %p206 = scmp.lt.s32.totalorder %s205, 0
      %s207 = scalar_select %p206, %s205, 0
      %s208 = smul.addr %s207, 4
      %s209 = scalar_lea.vmem %s4, %s208
      %s210 = ssub.s32 1, %s19
      %s211 = smul.u32 %s20, %s210
      %p212 = scmp.lt.s32.totalorder %s211, 0
      %s213 = scalar_select %p212, %s211, 0
      %s214 = smul.addr %s213, 4
      %s215 = scalar_lea.vmem %s0, %s214
      %s216 = ssub.s32 1, %s19
      %s217 = smul.u32 %s20, %s216
      %s218 = smul.u32 %s20, %s19
      %p219 = scmp.lt.s32.totalorder %s218, 0
      %s220 = scalar_select %p219, %s218, 0
      %s221 = smul.addr %s220, 4
      %s222 = scalar_lea.vmem %s4, %s221
      %s223 = smul.u32 %s20, %s19
      %p225 = scmp.eq.s32.totalorder %s19, 0
      %p226 = scmp.eq.s32.totalorder %s20, 0
      %p227 = pnand %p225, %p226
      %p228 = pneg %p227
      // Predicated region
      $region37: #{nlayer_discriminator_forward.8} parent=35 // pred_check
        _
      $region38: #{nlayer_discriminator_forward.8} parent=35 // pred_check_branch
        %230 = sbr.rel (%p227) target = $region40
      $region39: #{nlayer_discriminator_forward.8} parent=35 // pred_region
        %vm231 = vcmask 7168
        %232 = vst.msk [vmem:[#allocation3] sm:$0xff] %vm231, 0.0
        %233 = vst.msk [vmem:[#allocation3 + $0x8] sm:$0xff] %vm231, 0.0
        %234 = vst.msk [vmem:[#allocation3 + $0x10] sm:$0xff] %vm231, 0.0
        %235 = vst.msk [vmem:[#allocation3 + $0x18] sm:$0xff] %vm231, 0.0
        %236 = vst.msk [vmem:[#allocation3 + $0x20] sm:$0xff] %vm231, 0.0
        %237 = vst.msk [vmem:[#allocation3 + $0x28] sm:$0xff] %vm231, 0.0
        %238 = vst.msk [vmem:[#allocation3 + $0x30] sm:$0xff] %vm231, 0.0
        %239 = vst.msk [vmem:[#allocation3 + $0x38] sm:$0xff] %vm231, 0.0
        %240 = vst.msk [vmem:[#allocation4] sm:$0xff] %vm231, 0.0
        %241 = vst.msk [vmem:[#allocation4 + $0x8] sm:$0xff] %vm231, 0.0
        %242 = vst.msk [vmem:[#allocation4 + $0x10] sm:$0xff] %vm231, 0.0
        %243 = vst.msk [vmem:[#allocation4 + $0x18] sm:$0xff] %vm231, 0.0
        %244 = vst.msk [vmem:[#allocation4 + $0x20] sm:$0xff] %vm231, 0.0
        %245 = vst.msk [vmem:[#allocation4 + $0x28] sm:$0xff] %vm231, 0.0
        %246 = vst.msk [vmem:[#allocation4 + $0x30] sm:$0xff] %vm231, 0.0
        %247 = vst.msk [vmem:[#allocation4 + $0x38] sm:$0xff] %vm231, 0.0
      $region40: #{nlayer_discriminator_forward.8} parent=35 // pred_fallthru
        _
      // Predicated region
      $region41: #{nlayer_discriminator_forward.8} parent=35 // pred_check
        %p248 = pneg %p225
      $region42: #{nlayer_discriminator_forward.8} parent=35 // pred_check_branch
        %250 = sbr.rel (%p248) target = $region44
      $region43: #{nlayer_discriminator_forward.8} parent=35 // pred_region
        %v251 = vld [vmem:[%s1] sm:$0xff]
        %v252 = vld [vmem:[%s1 + $0x8] sm:$0xff]
        %v253 = vld [vmem:[%s1 + $0x10] sm:$0xff]
        %v254 = vld [vmem:[%s1 + $0x18] sm:$0xff]
        %v255 = vld [vmem:[%s1 + $0x20] sm:$0xff]
        %v256 = vld [vmem:[%s1 + $0x28] sm:$0xff]
        %v257 = vld [vmem:[%s1 + $0x30] sm:$0xff]
        %v258 = vld [vmem:[%s1 + $0x38] sm:$0xff]
        %v259 = vld [vmem:[%s1 + $0x40] sm:$0xff]
        %v260 = vld [vmem:[%s1 + $0x48] sm:$0xff]
        %v261 = vld [vmem:[%s1 + $0x50] sm:$0xff]
        %v262 = vld [vmem:[%s1 + $0x58] sm:$0xff]
        %v263 = vld [vmem:[%s1 + $0x60] sm:$0xff]
        %v264 = vld [vmem:[%s1 + $0x68] sm:$0xff]
        %v265 = vld [vmem:[%s1 + $0x70] sm:$0xff]
        %v266 = vld [vmem:[%s1 + $0x78] sm:$0xff]
        %v267 = vld [vmem:[%s215] sm:$0xf]
        %v268 = vld [vmem:[%s215 + $0x4] sm:$0xf]
        %v269 = vld [vmem:[%s215 + $0x8] sm:$0xf]
        %v270 = vld [vmem:[%s215 + $0xc] sm:$0xf]
        %v271 = vld [vmem:[%s215 + $0x10] sm:$0xf]
        %v272 = vld [vmem:[%s215 + $0x14] sm:$0xf]
        %v273 = vld [vmem:[%s215 + $0x18] sm:$0xf]
        %v274 = vld [vmem:[%s215 + $0x1c] sm:$0xf]
        %v275 = vld [vmem:[%s215 + $0x20] sm:$0xf]
        %v276 = vld [vmem:[%s215 + $0x24] sm:$0xf]
        %v277 = vld [vmem:[%s215 + $0x28] sm:$0xf]
        %v278 = vld [vmem:[%s215 + $0x2c] sm:$0xf]
        %v279 = vld [vmem:[%s215 + $0x30] sm:$0xf]
        %v280 = vld [vmem:[%s215 + $0x34] sm:$0xf]
        %v281 = vld [vmem:[%s215 + $0x38] sm:$0xf]
        %v282 = vld [vmem:[%s215 + $0x3c] sm:$0xf]
        %v283 = vld [vmem:[%s215 + $0x40] sm:$0xf]
        %v284 = vld [vmem:[%s215 + $0x44] sm:$0xf]
        %v285 = vld [vmem:[%s215 + $0x48] sm:$0xf]
        %v286 = vld [vmem:[%s215 + $0x4c] sm:$0xf]
        %v287 = vld [vmem:[%s215 + $0x50] sm:$0xf]
        %v288 = vld [vmem:[%s215 + $0x54] sm:$0xf]
        %v289 = vld [vmem:[%s215 + $0x58] sm:$0xf]
        %v290 = vld [vmem:[%s215 + $0x5c] sm:$0xf]
        %v291 = vld [vmem:[%s215 + $0x60] sm:$0xf]
        %v292 = vld [vmem:[%s215 + $0x64] sm:$0xf]
        %v293 = vld [vmem:[%s215 + $0x68] sm:$0xf]
        %v294 = vld [vmem:[%s215 + $0x6c] sm:$0xf]
        %v295 = vld [vmem:[%s215 + $0x70] sm:$0xf]
        %v296 = vld [vmem:[%s215 + $0x74] sm:$0xf]
        %v297 = vld [vmem:[%s215 + $0x78] sm:$0xf]
        %v298 = vld [vmem:[%s215 + $0x7c] sm:$0xf]
        %v299 = vld [vmem:[%s215 + $0x80] sm:$0xf]
        %v300 = vld [vmem:[%s215 + $0x84] sm:$0xf]
        %v301 = vld [vmem:[%s215 + $0x88] sm:$0xf]
        %v302 = vld [vmem:[%s215 + $0x8c] sm:$0xf]
        %v303 = vld [vmem:[%s215 + $0x90] sm:$0xf]
        %v304 = vld [vmem:[%s215 + $0x94] sm:$0xf]
        %v305 = vld [vmem:[%s215 + $0x98] sm:$0xf]
        %v306 = vld [vmem:[%s215 + $0x9c] sm:$0xf]
        %v307 = vld [vmem:[%s215 + $0xa0] sm:$0xf]
        %v308 = vld [vmem:[%s215 + $0xa4] sm:$0xf]
        %v309 = vld [vmem:[%s215 + $0xa8] sm:$0xf]
        %v310 = vld [vmem:[%s215 + $0xac] sm:$0xf]
        %v311 = vld [vmem:[%s215 + $0xb0] sm:$0xf]
        %v312 = vld [vmem:[%s215 + $0xb4] sm:$0xf]
        %v313 = vld [vmem:[%s215 + $0xb8] sm:$0xf]
        %v314 = vld [vmem:[%s215 + $0xbc] sm:$0xf]
        %v315 = vld [vmem:[%s215 + $0xc0] sm:$0xf]
        %v316 = vld [vmem:[%s215 + $0xc4] sm:$0xf]
        %v317 = vld [vmem:[%s215 + $0xc8] sm:$0xf]
        %v318 = vld [vmem:[%s215 + $0xcc] sm:$0xf]
        %v319 = vld [vmem:[%s215 + $0xd0] sm:$0xf]
        %v320 = vld [vmem:[%s215 + $0xd4] sm:$0xf]
        %v321 = vld [vmem:[%s215 + $0xd8] sm:$0xf]
        %v322 = vld [vmem:[%s215 + $0xdc] sm:$0xf]
        %v323 = vld [vmem:[%s215 + $0xe0] sm:$0xf]
        %v324 = vld [vmem:[%s215 + $0xe4] sm:$0xf]
        %v325 = vld [vmem:[%s215 + $0xe8] sm:$0xf]
        %v326 = vld [vmem:[%s215 + $0xec] sm:$0xf]
        %v327 = vld [vmem:[%s215 + $0xf0] sm:$0xf]
        %v328 = vld [vmem:[%s215 + $0xf4] sm:$0xf]
        %v329 = vld [vmem:[%s215 + $0xf8] sm:$0xf]
        %v330 = vld [vmem:[%s215 + $0xfc] sm:$0xf]
        %v347 = vunpack.c.l.b16 %v251
        %v348 = vunpack.c.h.b16 %v251
        %v349 = vunpack.c.l.b16 %v252
        %v350 = vunpack.c.h.b16 %v252
        %v351 = vunpack.c.l.b16 %v253
        %v352 = vunpack.c.h.b16 %v253
        %v353 = vunpack.c.l.b16 %v254
        %v354 = vunpack.c.h.b16 %v254
        %v355 = vunpack.c.l.b16 %v255
        %v356 = vunpack.c.h.b16 %v255
        %v357 = vunpack.c.l.b16 %v256
        %v358 = vunpack.c.h.b16 %v256
        %v359 = vunpack.c.l.b16 %v257
        %v360 = vunpack.c.h.b16 %v257
        %v361 = vunpack.c.l.b16 %v258
        %v362 = vunpack.c.h.b16 %v258
        %v363 = vunpack.c.l.b16 %v259
        %v364 = vunpack.c.h.b16 %v259
        %v365 = vunpack.c.l.b16 %v260
        %v366 = vunpack.c.h.b16 %v260
        %v367 = vunpack.c.l.b16 %v261
        %v368 = vunpack.c.h.b16 %v261
        %v369 = vunpack.c.l.b16 %v262
        %v370 = vunpack.c.h.b16 %v262
        %v371 = vunpack.c.l.b16 %v263
        %v372 = vunpack.c.h.b16 %v263
        %v373 = vunpack.c.l.b16 %v264
        %v374 = vunpack.c.h.b16 %v264
        %v375 = vunpack.c.l.b16 %v265
        %v376 = vunpack.c.h.b16 %v265
        %v377 = vunpack.c.l.b16 %v266
        %v378 = vunpack.c.h.b16 %v266
        %v379 = vpack.c.b16 %v351, %v347
        %v380 = vpack.c.b16 %v352, %v348
        %v381 = vpack.c.b16 %v353, %v349
        %v382 = vpack.c.b16 %v354, %v350
        %v383 = vpack.c.b16 %v359, %v355
        %v384 = vpack.c.b16 %v360, %v356
        %v385 = vpack.c.b16 %v361, %v357
        %v386 = vpack.c.b16 %v362, %v358
        %v387 = vpack.c.b16 %v367, %v363
        %v388 = vpack.c.b16 %v368, %v364
        %v389 = vpack.c.b16 %v369, %v365
        %v390 = vpack.c.b16 %v370, %v366
        %v391 = vpack.c.b16 %v375, %v371
        %v392 = vpack.c.b16 %v376, %v372
        %v393 = vpack.c.b16 %v377, %v373
        %v394 = vpack.c.b16 %v378, %v374
        %v475 = vunpack.c.l.b16 %v267
        %v476 = vunpack.c.l.b16 %v268
        %v477 = vunpack.c.l.b16 %v269
        %v478 = vunpack.c.l.b16 %v270
        %v479 = vunpack.c.l.b16 %v271
        %v480 = vunpack.c.l.b16 %v272
        %v481 = vunpack.c.l.b16 %v273
        %v482 = vunpack.c.l.b16 %v274
        %v483 = vunpack.c.l.b16 %v275
        %v484 = vunpack.c.l.b16 %v276
        %v485 = vunpack.c.l.b16 %v277
        %v486 = vunpack.c.l.b16 %v278
        %v487 = vunpack.c.l.b16 %v279
        %v488 = vunpack.c.l.b16 %v280
        %v489 = vunpack.c.l.b16 %v281
        %v490 = vunpack.c.l.b16 %v282
        %v491 = vunpack.c.l.b16 %v283
        %v492 = vunpack.c.l.b16 %v284
        %v493 = vunpack.c.l.b16 %v285
        %v494 = vunpack.c.l.b16 %v286
        %v495 = vunpack.c.l.b16 %v287
        %v496 = vunpack.c.l.b16 %v288
        %v497 = vunpack.c.l.b16 %v289
        %v498 = vunpack.c.l.b16 %v290
        %v499 = vunpack.c.l.b16 %v291
        %v500 = vunpack.c.l.b16 %v292
        %v501 = vunpack.c.l.b16 %v293
        %v502 = vunpack.c.l.b16 %v294
        %v503 = vunpack.c.l.b16 %v295
        %v504 = vunpack.c.l.b16 %v296
        %v505 = vunpack.c.l.b16 %v297
        %v506 = vunpack.c.l.b16 %v298
        %v507 = vunpack.c.l.b16 %v299
        %v508 = vunpack.c.l.b16 %v300
        %v509 = vunpack.c.l.b16 %v301
        %v510 = vunpack.c.l.b16 %v302
        %v511 = vunpack.c.l.b16 %v303
        %v512 = vunpack.c.l.b16 %v304
        %v513 = vunpack.c.l.b16 %v305
        %v514 = vunpack.c.l.b16 %v306
        %v515 = vunpack.c.l.b16 %v307
        %v516 = vunpack.c.l.b16 %v308
        %v517 = vunpack.c.l.b16 %v309
        %v518 = vunpack.c.l.b16 %v310
        %v519 = vunpack.c.l.b16 %v311
        %v520 = vunpack.c.l.b16 %v312
        %v521 = vunpack.c.l.b16 %v313
        %v522 = vunpack.c.l.b16 %v314
        %v523 = vunpack.c.l.b16 %v315
        %v524 = vunpack.c.l.b16 %v316
        %v525 = vunpack.c.l.b16 %v317
        %v526 = vunpack.c.l.b16 %v318
        %v527 = vunpack.c.l.b16 %v319
        %v528 = vunpack.c.l.b16 %v320
        %v529 = vunpack.c.l.b16 %v321
        %v530 = vunpack.c.l.b16 %v322
        %v531 = vunpack.c.l.b16 %v323
        %v532 = vunpack.c.l.b16 %v324
        %v533 = vunpack.c.l.b16 %v325
        %v534 = vunpack.c.l.b16 %v326
        %v535 = vunpack.c.l.b16 %v327
        %v536 = vunpack.c.l.b16 %v328
        %v537 = vunpack.c.l.b16 %v329
        %v538 = vunpack.c.l.b16 %v330
        %v539 = vpack.c.b16 %v476, %v475
        %v540 = vpack.c.b16 %v478, %v477
        %v541 = vpack.c.b16 %v480, %v479
        %v542 = vpack.c.b16 %v482, %v481
        %v543 = vpack.c.b16 %v484, %v483
        %v544 = vpack.c.b16 %v486, %v485
        %v545 = vpack.c.b16 %v488, %v487
        %v546 = vpack.c.b16 %v490, %v489
        %v547 = vpack.c.b16 %v492, %v491
        %v548 = vpack.c.b16 %v494, %v493
        %v549 = vpack.c.b16 %v496, %v495
        %v550 = vpack.c.b16 %v498, %v497
        %v551 = vpack.c.b16 %v500, %v499
        %v552 = vpack.c.b16 %v502, %v501
        %v553 = vpack.c.b16 %v504, %v503
        %v554 = vpack.c.b16 %v506, %v505
        %v555 = vpack.c.b16 %v508, %v507
        %v556 = vpack.c.b16 %v510, %v509
        %v557 = vpack.c.b16 %v512, %v511
        %v558 = vpack.c.b16 %v514, %v513
        %v559 = vpack.c.b16 %v516, %v515
        %v560 = vpack.c.b16 %v518, %v517
        %v561 = vpack.c.b16 %v520, %v519
        %v562 = vpack.c.b16 %v522, %v521
        %v563 = vpack.c.b16 %v524, %v523
        %v564 = vpack.c.b16 %v526, %v525
        %v565 = vpack.c.b16 %v528, %v527
        %v566 = vpack.c.b16 %v530, %v529
        %v567 = vpack.c.b16 %v532, %v531
        %v568 = vpack.c.b16 %v534, %v533
        %v569 = vpack.c.b16 %v536, %v535
        %v570 = vpack.c.b16 %v538, %v537
        %603 = vmatprep.subr.bf16.mxu0 0
        %604 = vmatpush1.bf16.msra.mxu0 %v546
        %605 = vmatprep.subr.bf16.mxu0 0
        %606 = vmatpush1.bf16.msra.mxu0 %v545
        %607 = vmatprep.subr.bf16.mxu0 0
        %608 = vmatpush1.bf16.msra.mxu0 %v544
        %609 = vmatprep.subr.bf16.mxu0 0
        %610 = vmatpush1.bf16.msra.mxu0 %v543
        %611 = vmatprep.subr.bf16.mxu0 0
        %612 = vmatpush1.bf16.msra.mxu0 %v542
        %613 = vmatprep.subr.bf16.mxu0 0
        %614 = vmatpush1.bf16.msra.mxu0 %v541
        %615 = vmatprep.subr.bf16.mxu0 0
        %616 = vmatpush1.bf16.msra.mxu0 %v540
        %617 = vmatprep.subr.bf16.mxu0 0
        %618 = vmatpush1.bf16.msra.mxu0 %v539
        %619 = vmatprep.subr.bf16.mxu0 0
        %620 = vmatpush2.bf16.msra.mxu0 %v554
        %621 = vmatprep.subr.bf16.mxu0 0
        %622 = vmatpush2.bf16.msra.mxu0 %v553
        %623 = vmatprep.subr.bf16.mxu0 0
        %624 = vmatpush2.bf16.msra.mxu0 %v552
        %625 = vmatprep.subr.bf16.mxu0 0
        %626 = vmatpush2.bf16.msra.mxu0 %v551
        %627 = vmatprep.subr.bf16.mxu0 0
        %628 = vmatpush2.bf16.msra.mxu0 %v550
        %629 = vmatprep.subr.bf16.mxu0 0
        %630 = vmatpush2.bf16.msra.mxu0 %v549
        %631 = vmatprep.subr.bf16.mxu0 0
        %632 = vmatpush2.bf16.msra.mxu0 %v548
        %633 = vmatprep.subr.bf16.mxu0 0
        %634 = vmatpush2.bf16.msra.mxu0 %v547
        %635 = vmatprep.mubr.bf16.mxu0 %v380
        %636 = vmatmul.mubr.bf16.gmra.mxu0 %v379
        %v637 = vpop.f32.mrf.mxu0
        %v638 = vadd.f32 0.0, %v637
        %v639 = vpop.f32.mrf.mxu0
        %v640 = vpop.f32.mrf.mxu0
        %v641 = vadd.f32 0.0, %v640
        %v642 = vpop.f32.mrf.mxu0
        %643 = vmatprep.mubr.bf16.mxu0 %v384
        %644 = vmatmul.mubr.bf16.gmra.mxu0 %v383
        %v645 = vpop.f32.mrf.mxu0
        %v646 = vadd.f32 0.0, %v645
        %v647 = vpop.f32.mrf.mxu0
        %v648 = vpop.f32.mrf.mxu0
        %v649 = vadd.f32 0.0, %v648
        %v650 = vpop.f32.mrf.mxu0
        %651 = vmatprep.mubr.bf16.mxu0 %v388
        %652 = vmatmul.mubr.bf16.gmra.mxu0 %v387
        %v653 = vpop.f32.mrf.mxu0
        %v654 = vadd.f32 0.0, %v653
        %v655 = vpop.f32.mrf.mxu0
        %v656 = vpop.f32.mrf.mxu0
        %v657 = vadd.f32 0.0, %v656
        %v658 = vpop.f32.mrf.mxu0
        %659 = vmatprep.mubr.bf16.mxu0 %v392
        %660 = vmatmul.mubr.bf16.gmra.mxu0 %v391
        %v661 = vpop.f32.mrf.mxu0
        %v662 = vadd.f32 0.0, %v661
        %v663 = vpop.f32.mrf.mxu0
        %v664 = vpop.f32.mrf.mxu0
        %v665 = vadd.f32 0.0, %v664
        %v666 = vpop.f32.mrf.mxu0
        %667 = vdwg.mxu0
        %668 = vmatprep.subr.bf16.mxu0 0
        %669 = vmatpush1.bf16.msra.mxu0 %v562
        %670 = vmatprep.subr.bf16.mxu0 0
        %671 = vmatpush1.bf16.msra.mxu0 %v561
        %672 = vmatprep.subr.bf16.mxu0 0
        %673 = vmatpush1.bf16.msra.mxu0 %v560
        %674 = vmatprep.subr.bf16.mxu0 0
        %675 = vmatpush1.bf16.msra.mxu0 %v559
        %676 = vmatprep.subr.bf16.mxu0 0
        %677 = vmatpush1.bf16.msra.mxu0 %v558
        %678 = vmatprep.subr.bf16.mxu0 0
        %679 = vmatpush1.bf16.msra.mxu0 %v557
        %680 = vmatprep.subr.bf16.mxu0 0
        %681 = vmatpush1.bf16.msra.mxu0 %v556
        %682 = vmatprep.subr.bf16.mxu0 0
        %683 = vmatpush1.bf16.msra.mxu0 %v555
        %684 = vmatprep.subr.bf16.mxu0 0
        %685 = vmatpush2.bf16.msra.mxu0 %v570
        %686 = vmatprep.subr.bf16.mxu0 0
        %687 = vmatpush2.bf16.msra.mxu0 %v569
        %688 = vmatprep.subr.bf16.mxu0 0
        %689 = vmatpush2.bf16.msra.mxu0 %v568
        %690 = vmatprep.subr.bf16.mxu0 0
        %691 = vmatpush2.bf16.msra.mxu0 %v567
        %692 = vmatprep.subr.bf16.mxu0 0
        %693 = vmatpush2.bf16.msra.mxu0 %v566
        %694 = vmatprep.subr.bf16.mxu0 0
        %695 = vmatpush2.bf16.msra.mxu0 %v565
        %696 = vmatprep.subr.bf16.mxu0 0
        %697 = vmatpush2.bf16.msra.mxu0 %v564
        %698 = vmatprep.subr.bf16.mxu0 0
        %699 = vmatpush2.bf16.msra.mxu0 %v563
        %700 = vmatprep.mubr.bf16.mxu0 %v382
        %701 = vmatmul.mubr.bf16.gmra.mxu0 %v381
        %v702 = vpop.f32.mrf.mxu0
        %v703 = vadd.f32 %v638, %v702
        %v704 = vpop.f32.mrf.mxu0
        %v705 = vpop.f32.mrf.mxu0
        %v706 = vadd.f32 %v641, %v705
        %v707 = vpop.f32.mrf.mxu0
        %708 = vmatprep.mubr.bf16.mxu0 %v386
        %709 = vmatmul.mubr.bf16.gmra.mxu0 %v385
        %v710 = vpop.f32.mrf.mxu0
        %v711 = vadd.f32 %v646, %v710
        %v712 = vpop.f32.mrf.mxu0
        %v713 = vpop.f32.mrf.mxu0
        %v714 = vadd.f32 %v649, %v713
        %v715 = vpop.f32.mrf.mxu0
        %716 = vmatprep.mubr.bf16.mxu0 %v390
        %717 = vmatmul.mubr.bf16.gmra.mxu0 %v389
        %v718 = vpop.f32.mrf.mxu0
        %v719 = vadd.f32 %v654, %v718
        %v720 = vpop.f32.mrf.mxu0
        %v721 = vpop.f32.mrf.mxu0
        %v722 = vadd.f32 %v657, %v721
        %v723 = vpop.f32.mrf.mxu0
        %724 = vmatprep.mubr.bf16.mxu0 %v394
        %725 = vmatmul.mubr.bf16.gmra.mxu0 %v393
        %v726 = vpop.f32.mrf.mxu0
        %v727 = vadd.f32 %v662, %v726
        %v728 = vpop.f32.mrf.mxu0
        %v729 = vpop.f32.mrf.mxu0
        %v730 = vadd.f32 %v665, %v729
        %v731 = vpop.f32.mrf.mxu0
        %732 = vdwg.mxu0
        %s733 = smul.u32 %s20, 64
        %s734 = scalar_lea.vmem [#allocation2], %s733
        %735 = vst [vmem:[%s734] sm:$0xff] %v703
        %736 = vst [vmem:[%s734 + $0x8] sm:$0xff] %v706
        %737 = vst [vmem:[%s734 + $0x10] sm:$0xff] %v711
        %738 = vst [vmem:[%s734 + $0x18] sm:$0xff] %v714
        %739 = vst [vmem:[%s734 + $0x20] sm:$0xff] %v719
        %740 = vst [vmem:[%s734 + $0x28] sm:$0xff] %v722
        %741 = vst [vmem:[%s734 + $0x30] sm:$0xff] %v727
        %742 = vst [vmem:[%s734 + $0x38] sm:$0xff] %v730
        %v743 = vld [vmem:[#allocation3] sm:$0xff]
        %v744 = vld [vmem:[#allocation3 + $0x8] sm:$0xff]
        %v745 = vld [vmem:[#allocation3 + $0x10] sm:$0xff]
        %v746 = vld [vmem:[#allocation3 + $0x18] sm:$0xff]
        %v747 = vld [vmem:[#allocation3 + $0x20] sm:$0xff]
        %v748 = vld [vmem:[#allocation3 + $0x28] sm:$0xff]
        %v749 = vld [vmem:[#allocation3 + $0x30] sm:$0xff]
        %v750 = vld [vmem:[#allocation3 + $0x38] sm:$0xff]
        %751 = vadd.xlane.f32.xlu0 %v703
        %v752 = vpop.xlane.xlu0 %751
        %753 = vadd.xlane.f32.xlu0 %v706
        %v754 = vpop.xlane.xlu0 %753
        %755 = vadd.xlane.f32.xlu0 %v711
        %v756 = vpop.xlane.xlu0 %755
        %757 = vadd.xlane.f32.xlu0 %v714
        %v758 = vpop.xlane.xlu0 %757
        %759 = vadd.xlane.f32.xlu0 %v719
        %v760 = vpop.xlane.xlu0 %759
        %761 = vadd.xlane.f32.xlu0 %v722
        %v762 = vpop.xlane.xlu0 %761
        %763 = vadd.xlane.f32.xlu0 %v727
        %v764 = vpop.xlane.xlu0 %763
        %765 = vadd.xlane.f32.xlu0 %v730
        %v766 = vpop.xlane.xlu0 %765
        %v767 = vadd.f32 %v743, %v752
        %v768 = vadd.f32 %v744, %v754
        %v769 = vadd.f32 %v745, %v756
        %v770 = vadd.f32 %v746, %v758
        %v771 = vadd.f32 %v747, %v760
        %v772 = vadd.f32 %v748, %v762
        %v773 = vadd.f32 %v749, %v764
        %v774 = vadd.f32 %v750, %v766
        %vm775 = vcmask 7168
        %776 = vst.msk [vmem:[#allocation3] sm:$0xff] %vm775, %v767
        %777 = vst.msk [vmem:[#allocation3 + $0x8] sm:$0xff] %vm775, %v768
        %778 = vst.msk [vmem:[#allocation3 + $0x10] sm:$0xff] %vm775, %v769
        %779 = vst.msk [vmem:[#allocation3 + $0x18] sm:$0xff] %vm775, %v770
        %780 = vst.msk [vmem:[#allocation3 + $0x20] sm:$0xff] %vm775, %v771
        %781 = vst.msk [vmem:[#allocation3 + $0x28] sm:$0xff] %vm775, %v772
        %782 = vst.msk [vmem:[#allocation3 + $0x30] sm:$0xff] %vm775, %v773
        %783 = vst.msk [vmem:[#allocation3 + $0x38] sm:$0xff] %vm775, %v774
        %v784 = vld [vmem:[#allocation4] sm:$0xff]
        %v785 = vld [vmem:[#allocation4 + $0x8] sm:$0xff]
        %v786 = vld [vmem:[#allocation4 + $0x10] sm:$0xff]
        %v787 = vld [vmem:[#allocation4 + $0x18] sm:$0xff]
        %v788 = vld [vmem:[#allocation4 + $0x20] sm:$0xff]
        %v789 = vld [vmem:[#allocation4 + $0x28] sm:$0xff]
        %v790 = vld [vmem:[#allocation4 + $0x30] sm:$0xff]
        %v791 = vld [vmem:[#allocation4 + $0x38] sm:$0xff]
        %v792 = vmul.f32 %v703, %v703
        %v793 = vmul.f32 %v706, %v706
        %v794 = vmul.f32 %v711, %v711
        %v795 = vmul.f32 %v714, %v714
        %v796 = vmul.f32 %v719, %v719
        %v797 = vmul.f32 %v722, %v722
        %v798 = vmul.f32 %v727, %v727
        %v799 = vmul.f32 %v730, %v730
        %800 = vadd.xlane.f32.xlu0 %v792
        %v801 = vpop.xlane.xlu0 %800
        %802 = vadd.xlane.f32.xlu0 %v793
        %v803 = vpop.xlane.xlu0 %802
        %804 = vadd.xlane.f32.xlu0 %v794
        %v805 = vpop.xlane.xlu0 %804
        %806 = vadd.xlane.f32.xlu0 %v795
        %v807 = vpop.xlane.xlu0 %806
        %808 = vadd.xlane.f32.xlu0 %v796
        %v809 = vpop.xlane.xlu0 %808
        %810 = vadd.xlane.f32.xlu0 %v797
        %v811 = vpop.xlane.xlu0 %810
        %812 = vadd.xlane.f32.xlu0 %v798
        %v813 = vpop.xlane.xlu0 %812
        %814 = vadd.xlane.f32.xlu0 %v799
        %v815 = vpop.xlane.xlu0 %814
        %v816 = vadd.f32 %v784, %v801
        %v817 = vadd.f32 %v785, %v803
        %v818 = vadd.f32 %v786, %v805
        %v819 = vadd.f32 %v787, %v807
        %v820 = vadd.f32 %v788, %v809
        %v821 = vadd.f32 %v789, %v811
        %v822 = vadd.f32 %v790, %v813
        %v823 = vadd.f32 %v791, %v815
        %824 = vst.msk [vmem:[#allocation4] sm:$0xff] %vm775, %v816
        %825 = vst.msk [vmem:[#allocation4 + $0x8] sm:$0xff] %vm775, %v817
        %826 = vst.msk [vmem:[#allocation4 + $0x10] sm:$0xff] %vm775, %v818
        %827 = vst.msk [vmem:[#allocation4 + $0x18] sm:$0xff] %vm775, %v819
        %828 = vst.msk [vmem:[#allocation4 + $0x20] sm:$0xff] %vm775, %v820
        %829 = vst.msk [vmem:[#allocation4 + $0x28] sm:$0xff] %vm775, %v821
        %830 = vst.msk [vmem:[#allocation4 + $0x30] sm:$0xff] %vm775, %v822
        %831 = vst.msk [vmem:[#allocation4 + $0x38] sm:$0xff] %vm775, %v823
      $region44: #{nlayer_discriminator_forward.8} parent=35 // pred_fallthru
        _
      %p832 = scmp.eq.s32.totalorder %s19, 1
      %p833 = pnand %p832, %p226
      %p834 = pneg %p833
      // Predicated region
      $region45: #{nlayer_discriminator_forward.8} parent=35 // pred_check
        _
      $region46: #{nlayer_discriminator_forward.8} parent=35 // pred_check_branch
        %836 = sbr.rel (%p833) target = $region48
      $region47: #{nlayer_discriminator_forward.8} parent=35 // pred_region
        %v837 = vld [vmem:[#allocation3] sm:$0xff]
        %v838 = vld [vmem:[#allocation3 + $0x8] sm:$0xff]
        %v839 = vld [vmem:[#allocation3 + $0x10] sm:$0xff]
        %v840 = vld [vmem:[#allocation3 + $0x18] sm:$0xff]
        %v841 = vld [vmem:[#allocation3 + $0x20] sm:$0xff]
        %v842 = vld [vmem:[#allocation3 + $0x28] sm:$0xff]
        %v843 = vld [vmem:[#allocation3 + $0x30] sm:$0xff]
        %v844 = vld [vmem:[#allocation3 + $0x38] sm:$0xff]
        %v845 = vmul.f32 %v837, 0.03125
        %v846 = vmul.f32 %v838, 0.03125
        %v847 = vmul.f32 %v839, 0.03125
        %v848 = vmul.f32 %v840, 0.03125
        %v849 = vmul.f32 %v841, 0.03125
        %v850 = vmul.f32 %v842, 0.03125
        %v851 = vmul.f32 %v843, 0.03125
        %v852 = vmul.f32 %v844, 0.03125
        %v853 = vld [vmem:[#allocation4] sm:$0xff]
        %v854 = vld [vmem:[#allocation4 + $0x8] sm:$0xff]
        %v855 = vld [vmem:[#allocation4 + $0x10] sm:$0xff]
        %v856 = vld [vmem:[#allocation4 + $0x18] sm:$0xff]
        %v857 = vld [vmem:[#allocation4 + $0x20] sm:$0xff]
        %v858 = vld [vmem:[#allocation4 + $0x28] sm:$0xff]
        %v859 = vld [vmem:[#allocation4 + $0x30] sm:$0xff]
        %v860 = vld [vmem:[#allocation4 + $0x38] sm:$0xff]
        %v861 = vmul.f32 %v853, 0.03125
        %v862 = vmul.f32 %v854, 0.03125
        %v863 = vmul.f32 %v855, 0.03125
        %v864 = vmul.f32 %v856, 0.03125
        %v865 = vmul.f32 %v857, 0.03125
        %v866 = vmul.f32 %v858, 0.03125
        %v867 = vmul.f32 %v859, 0.03125
        %v868 = vmul.f32 %v860, 0.03125
        %v869 = vmul.f32 %v845, %v845
        %v870 = vmul.f32 %v846, %v846
        %v871 = vmul.f32 %v847, %v847
        %v872 = vmul.f32 %v848, %v848
        %v873 = vmul.f32 %v849, %v849
        %v874 = vmul.f32 %v850, %v850
        %v875 = vmul.f32 %v851, %v851
        %v876 = vmul.f32 %v852, %v852
        %v877 = vsub.f32 %v861, %v869
        %v878 = vsub.f32 %v862, %v870
        %v879 = vsub.f32 %v863, %v871
        %v880 = vsub.f32 %v864, %v872
        %v881 = vsub.f32 %v865, %v873
        %v882 = vsub.f32 %v866, %v874
        %v883 = vsub.f32 %v867, %v875
        %v884 = vsub.f32 %v868, %v876
        %v885 = vmax.f32 %v877, 0.0
        %v886 = vmax.f32 %v878, 0.0
        %v887 = vmax.f32 %v879, 0.0
        %v888 = vmax.f32 %v880, 0.0
        %v889 = vmax.f32 %v881, 0.0
        %v890 = vmax.f32 %v882, 0.0
        %v891 = vmax.f32 %v883, 0.0
        %v892 = vmax.f32 %v884, 0.0
        %v893 = vld [vmem:[%s2] sm:$0xff]
        %v894 = vld [vmem:[%s2 + $0x8] sm:$0xff]
        %v895 = vld [vmem:[%s2 + $0x10] sm:$0xff]
        %v896 = vld [vmem:[%s2 + $0x18] sm:$0xff]
        %v897 = vld [vmem:[%s2 + $0x20] sm:$0xff]
        %v898 = vld [vmem:[%s2 + $0x28] sm:$0xff]
        %v899 = vld [vmem:[%s2 + $0x30] sm:$0xff]
        %v900 = vld [vmem:[%s2 + $0x38] sm:$0xff]
        %v901 = vadd.f32 %v885, 1e-05
        %v902 = vadd.f32 %v886, 1e-05
        %v903 = vadd.f32 %v887, 1e-05
        %v904 = vadd.f32 %v888, 1e-05
        %v905 = vadd.f32 %v889, 1e-05
        %v906 = vadd.f32 %v890, 1e-05
        %v907 = vadd.f32 %v891, 1e-05
        %v908 = vadd.f32 %v892, 1e-05
        %v909 = vrsqrt.pop %v901
        %v910 = vrsqrt.pop %v902
        %v911 = vrsqrt.pop %v903
        %v912 = vrsqrt.pop %v904
        %v913 = vrsqrt.pop %v905
        %v914 = vrsqrt.pop %v906
        %v915 = vrsqrt.pop %v907
        %v916 = vrsqrt.pop %v908
        %v917 = vmul.f32 %v893, %v909
        %v918 = vmul.f32 %v894, %v910
        %v919 = vmul.f32 %v895, %v911
        %v920 = vmul.f32 %v896, %v912
        %v921 = vmul.f32 %v897, %v913
        %v922 = vmul.f32 %v898, %v914
        %v923 = vmul.f32 %v899, %v915
        %v924 = vmul.f32 %v900, %v916
        %vm925 = vcmask 7168
        %926 = vst.msk [vmem:[#allocation5] sm:$0xff] %vm925, %v917
        %927 = vst.msk [vmem:[#allocation5 + $0x8] sm:$0xff] %vm925, %v918
        %928 = vst.msk [vmem:[#allocation5 + $0x10] sm:$0xff] %vm925, %v919
        %929 = vst.msk [vmem:[#allocation5 + $0x18] sm:$0xff] %vm925, %v920
        %930 = vst.msk [vmem:[#allocation5 + $0x20] sm:$0xff] %vm925, %v921
        %931 = vst.msk [vmem:[#allocation5 + $0x28] sm:$0xff] %vm925, %v922
        %932 = vst.msk [vmem:[#allocation5 + $0x30] sm:$0xff] %vm925, %v923
        %933 = vst.msk [vmem:[#allocation5 + $0x38] sm:$0xff] %vm925, %v924
        %v934 = vld [vmem:[%s3] sm:$0xff]
        %v935 = vld [vmem:[%s3 + $0x8] sm:$0xff]
        %v936 = vld [vmem:[%s3 + $0x10] sm:$0xff]
        %v937 = vld [vmem:[%s3 + $0x18] sm:$0xff]
        %v938 = vld [vmem:[%s3 + $0x20] sm:$0xff]
        %v939 = vld [vmem:[%s3 + $0x28] sm:$0xff]
        %v940 = vld [vmem:[%s3 + $0x30] sm:$0xff]
        %v941 = vld [vmem:[%s3 + $0x38] sm:$0xff]
        %v942 = vmul.f32 %v845, %v917
        %v943 = vmul.f32 %v846, %v918
        %v944 = vmul.f32 %v847, %v919
        %v945 = vmul.f32 %v848, %v920
        %v946 = vmul.f32 %v849, %v921
        %v947 = vmul.f32 %v850, %v922
        %v948 = vmul.f32 %v851, %v923
        %v949 = vmul.f32 %v852, %v924
        %v950 = vsub.f32 %v934, %v942
        %v951 = vsub.f32 %v935, %v943
        %v952 = vsub.f32 %v936, %v944
        %v953 = vsub.f32 %v937, %v945
        %v954 = vsub.f32 %v938, %v946
        %v955 = vsub.f32 %v939, %v947
        %v956 = vsub.f32 %v940, %v948
        %v957 = vsub.f32 %v941, %v949
        %958 = vst.msk [vmem:[#allocation6] sm:$0xff] %vm925, %v950
        %959 = vst.msk [vmem:[#allocation6 + $0x8] sm:$0xff] %vm925, %v951
        %960 = vst.msk [vmem:[#allocation6 + $0x10] sm:$0xff] %vm925, %v952
        %961 = vst.msk [vmem:[#allocation6 + $0x18] sm:$0xff] %vm925, %v953
        %962 = vst.msk [vmem:[#allocation6 + $0x20] sm:$0xff] %vm925, %v954
        %963 = vst.msk [vmem:[#allocation6 + $0x28] sm:$0xff] %vm925, %v955
        %964 = vst.msk [vmem:[#allocation6 + $0x30] sm:$0xff] %vm925, %v956
        %965 = vst.msk [vmem:[#allocation6 + $0x38] sm:$0xff] %vm925, %v957
      $region48: #{nlayer_discriminator_forward.8} parent=35 // pred_fallthru
        _
      // Predicated region
      $region49: #{nlayer_discriminator_forward.8} parent=35 // pred_check
        %p966 = pneg %p832
      $region50: #{nlayer_discriminator_forward.8} parent=35 // pred_check_branch
        %968 = sbr.rel (%p966) target = $region52
      $region51: #{nlayer_discriminator_forward.8} parent=35 // pred_region
        %s969 = smul.u32 %s20, 64
        %s970 = scalar_lea.vmem [#allocation2], %s969
        %v971 = vld [vmem:[%s970] sm:$0xff]
        %v972 = vld [vmem:[%s970 + $0x8] sm:$0xff]
        %v973 = vld [vmem:[%s970 + $0x10] sm:$0xff]
        %v974 = vld [vmem:[%s970 + $0x18] sm:$0xff]
        %v975 = vld [vmem:[%s970 + $0x20] sm:$0xff]
        %v976 = vld [vmem:[%s970 + $0x28] sm:$0xff]
        %v977 = vld [vmem:[%s970 + $0x30] sm:$0xff]
        %v978 = vld [vmem:[%s970 + $0x38] sm:$0xff]
        %v979 = vld [vmem:[#allocation5] sm:$0xff]
        %v980 = vld [vmem:[#allocation5 + $0x8] sm:$0xff]
        %v981 = vld [vmem:[#allocation5 + $0x10] sm:$0xff]
        %v982 = vld [vmem:[#allocation5 + $0x18] sm:$0xff]
        %v983 = vld [vmem:[#allocation5 + $0x20] sm:$0xff]
        %v984 = vld [vmem:[#allocation5 + $0x28] sm:$0xff]
        %v985 = vld [vmem:[#allocation5 + $0x30] sm:$0xff]
        %v986 = vld [vmem:[#allocation5 + $0x38] sm:$0xff]
        %988 = vset.pattern.permute.xlu0 0
        %989 = vperm.xlu0 %988, %v979
        %v990 = vpop.permute.xlu0 %989
        %993 = vset.pattern.permute.xlu0 0
        %994 = vperm.xlu0 %993, %v980
        %v995 = vpop.permute.xlu0 %994
        %998 = vset.pattern.permute.xlu0 0
        %999 = vperm.xlu0 %998, %v981
        %v1000 = vpop.permute.xlu0 %999
        %1003 = vset.pattern.permute.xlu0 0
        %1004 = vperm.xlu0 %1003, %v982
        %v1005 = vpop.permute.xlu0 %1004
        %1008 = vset.pattern.permute.xlu0 0
        %1009 = vperm.xlu0 %1008, %v983
        %v1010 = vpop.permute.xlu0 %1009
        %1013 = vset.pattern.permute.xlu0 0
        %1014 = vperm.xlu0 %1013, %v984
        %v1015 = vpop.permute.xlu0 %1014
        %1018 = vset.pattern.permute.xlu0 0
        %1019 = vperm.xlu0 %1018, %v985
        %v1020 = vpop.permute.xlu0 %1019
        %1023 = vset.pattern.permute.xlu0 0
        %1024 = vperm.xlu0 %1023, %v986
        %v1025 = vpop.permute.xlu0 %1024
        %v1027 = vmul.f32 %v971, %v990
        %v1028 = vmul.f32 %v972, %v995
        %v1029 = vmul.f32 %v973, %v1000
        %v1030 = vmul.f32 %v974, %v1005
        %v1031 = vmul.f32 %v975, %v1010
        %v1032 = vmul.f32 %v976, %v1015
        %v1033 = vmul.f32 %v977, %v1020
        %v1034 = vmul.f32 %v978, %v1025
        %v1035 = vld [vmem:[#allocation6] sm:$0xff]
        %v1036 = vld [vmem:[#allocation6 + $0x8] sm:$0xff]
        %v1037 = vld [vmem:[#allocation6 + $0x10] sm:$0xff]
        %v1038 = vld [vmem:[#allocation6 + $0x18] sm:$0xff]
        %v1039 = vld [vmem:[#allocation6 + $0x20] sm:$0xff]
        %v1040 = vld [vmem:[#allocation6 + $0x28] sm:$0xff]
        %v1041 = vld [vmem:[#allocation6 + $0x30] sm:$0xff]
        %v1042 = vld [vmem:[#allocation6 + $0x38] sm:$0xff]
        %1044 = vset.pattern.permute.xlu0 0
        %1045 = vperm.xlu0 %1044, %v1035
        %v1046 = vpop.permute.xlu0 %1045
        %1049 = vset.pattern.permute.xlu0 0
        %1050 = vperm.xlu0 %1049, %v1036
        %v1051 = vpop.permute.xlu0 %1050
        %1054 = vset.pattern.permute.xlu0 0
        %1055 = vperm.xlu0 %1054, %v1037
        %v1056 = vpop.permute.xlu0 %1055
        %1059 = vset.pattern.permute.xlu0 0
        %1060 = vperm.xlu0 %1059, %v1038
        %v1061 = vpop.permute.xlu0 %1060
        %1064 = vset.pattern.permute.xlu0 0
        %1065 = vperm.xlu0 %1064, %v1039
        %v1066 = vpop.permute.xlu0 %1065
        %1069 = vset.pattern.permute.xlu0 0
        %1070 = vperm.xlu0 %1069, %v1040
        %v1071 = vpop.permute.xlu0 %1070
        %1074 = vset.pattern.permute.xlu0 0
        %1075 = vperm.xlu0 %1074, %v1041
        %v1076 = vpop.permute.xlu0 %1075
        %1079 = vset.pattern.permute.xlu0 0
        %1080 = vperm.xlu0 %1079, %v1042
        %v1081 = vpop.permute.xlu0 %1080
        %v1083 = vadd.f32 %v1027, %v1046
        %v1084 = vadd.f32 %v1028, %v1051
        %v1085 = vadd.f32 %v1029, %v1056
        %v1086 = vadd.f32 %v1030, %v1061
        %v1087 = vadd.f32 %v1031, %v1066
        %v1088 = vadd.f32 %v1032, %v1071
        %v1089 = vadd.f32 %v1033, %v1076
        %v1090 = vadd.f32 %v1034, %v1081
        %vm1091 = vcmp.ge.f32.partialorder %v1083, 0.0
        %vm1092 = vcmp.ge.f32.partialorder %v1084, 0.0
        %vm1093 = vcmp.ge.f32.partialorder %v1085, 0.0
        %vm1094 = vcmp.ge.f32.partialorder %v1086, 0.0
        %vm1095 = vcmp.ge.f32.partialorder %v1087, 0.0
        %vm1096 = vcmp.ge.f32.partialorder %v1088, 0.0
        %vm1097 = vcmp.ge.f32.partialorder %v1089, 0.0
        %vm1098 = vcmp.ge.f32.partialorder %v1090, 0.0
        %v1099 = vmul.f32 %v1083, 0.2
        %v1100 = vmul.f32 %v1084, 0.2
        %v1101 = vmul.f32 %v1085, 0.2
        %v1102 = vmul.f32 %v1086, 0.2
        %v1103 = vmul.f32 %v1087, 0.2
        %v1104 = vmul.f32 %v1088, 0.2
        %v1105 = vmul.f32 %v1089, 0.2
        %v1106 = vmul.f32 %v1090, 0.2
        %v1107 = vsel %vm1091, %v1083, %v1099
        %v1108 = vsel %vm1092, %v1084, %v1100
        %v1109 = vsel %vm1093, %v1085, %v1101
        %v1110 = vsel %vm1094, %v1086, %v1102
        %v1111 = vsel %vm1095, %v1087, %v1103
        %v1112 = vsel %vm1096, %v1088, %v1104
        %v1113 = vsel %vm1097, %v1089, %v1105
        %v1114 = vsel %vm1098, %v1090, %v1106
        %v1115 = vpack.c.bf16 %v1108, %v1107
        %v1116 = vpack.c.bf16 %v1110, %v1109
        %v1117 = vpack.c.bf16 %v1112, %v1111
        %v1118 = vpack.c.bf16 %v1114, %v1113
        %v1123 = vunpack.c.l.b16 %v1115
        %v1124 = vunpack.c.h.b16 %v1115
        %v1125 = vunpack.c.l.b16 %v1116
        %v1126 = vunpack.c.h.b16 %v1116
        %v1127 = vunpack.c.l.b16 %v1117
        %v1128 = vunpack.c.h.b16 %v1117
        %v1129 = vunpack.c.l.b16 %v1118
        %v1130 = vunpack.c.h.b16 %v1118
        %v1131 = vpack.c.b16 %v1123, %v1123
        %v1132 = vpack.c.b16 %v1124, %v1124
        %v1133 = vpack.c.b16 %v1125, %v1125
        %v1134 = vpack.c.b16 %v1126, %v1126
        %v1135 = vpack.c.b16 %v1127, %v1127
        %v1136 = vpack.c.b16 %v1128, %v1128
        %v1137 = vpack.c.b16 %v1129, %v1129
        %v1138 = vpack.c.b16 %v1130, %v1130
        %1147 = vst [vmem:[%s222] sm:$0xf] %v1131
        %1148 = vst [vmem:[%s222 + $0x4] sm:$0xf] %v1132
        %1149 = vst [vmem:[%s222 + $0x8] sm:$0xf] %v1133
        %1150 = vst [vmem:[%s222 + $0xc] sm:$0xf] %v1134
        %1151 = vst [vmem:[%s222 + $0x10] sm:$0xf] %v1135
        %1152 = vst [vmem:[%s222 + $0x14] sm:$0xf] %v1136
        %1153 = vst [vmem:[%s222 + $0x18] sm:$0xf] %v1137
        %1154 = vst [vmem:[%s222 + $0x1c] sm:$0xf] %v1138
      $region52: #{nlayer_discriminator_forward.8} parent=35 // pred_fallthru
        _
      %s1155 = smul.u32 %s20, %s19
      %p1156 = scmp.lt.s32.totalorder %s1155, 0
      %s1157 = scalar_select %p1156, %s1155, 0
      %s1158 = smul.addr %s1157, 4
      %s1159 = scalar_lea.vmem %s4, %s1158
      // Predicated region
      $region53: #{nlayer_discriminator_forward.8} parent=35 // pred_check
        %p1160 = pneg %p140
      $region54: #{nlayer_discriminator_forward.8} parent=35 // pred_check_branch
        %1162 = sbr.rel (%p1160) target = $region56
      $region55: #{nlayer_discriminator_forward.8} parent=35 // pred_region
        %s1163 = smul.u32 %s20, %s19
      $region56: #{nlayer_discriminator_forward.8} parent=35 // pred_fallthru
        _
    $region36: #{nlayer_discriminator_forward.8} parent=5 // pred_fallthru
      _
    %p1164 = scmp.le.s32.totalorder 2, %s10
    // Predicated region
    $region57: #{nlayer_discriminator_forward.8} parent=5 // pred_check
      %p1165 = pneg %p1164
    $region58: #{nlayer_discriminator_forward.8} parent=5 // pred_check_branch
      %1167 = sbr.rel (%p1165) target = $region60
    $region59: #{nlayer_discriminator_forward.8} parent=5 // pred_region
      %s1168 = ssub.s32 %s10, 2
      // Predicated region
      $region61: #{nlayer_discriminator_forward.8} parent=59 // pred_check
        %p1169 = pneg %p146
      $region62: #{nlayer_discriminator_forward.8} parent=59 // pred_check_branch
        %1171 = sbr.rel (%p1169) target = $region64
      $region63: #{nlayer_discriminator_forward.8} parent=59 // pred_region
        %s1172 = smul.u32 %s22, %s21
        %p1173 = scmp.lt.s32.totalorder %s1172, 0
        %s1174 = scalar_select %p1173, %s1172, 0
        %s1175 = smul.addr %s1174, 4
        %s1176 = scalar_lea.vmem %s4, %s1175
      $region64: #{nlayer_discriminator_forward.8} parent=59 // pred_fallthru
        _
    $region60: #{nlayer_discriminator_forward.8} parent=5 // pred_fallthru
      _
  $region6: #{nlayer_discriminator_forward.8} parent=0 // loop_footer
    %s14 = sadd.s32 1, %s10
  $region7: #{nlayer_discriminator_forward.8} parent=0 // loop_footer_branch
    %9 = sbr.rel target = $region3
  $region8: #{nlayer_discriminator_forward.8} parent=0 // loop_exit
    _

// kernel: nlayer_discriminator_forward.9
$region0: #{nlayer_discriminator_forward.9}
  #allocation0 [shape = 'u32[]', space=smem, size = 0x4, offset = 0x4, fixed_abs, tag = 'smem constant byte address 0x4 - core index']
  #allocation1 [shape = 'u32[144,128]{1,0:T(1,128)}', space=vmem, size = 0x12000, scoped, tag = 'internal scratch']
  #allocation2 [shape = 'f32[1,1]{1,0:T(1,128)S(1)}', space=vmem, size = 0x200, scoped, tag = 'scoped memory for nlayer_discriminator_forward.9']
  %s0 = inlined_call_operand.vmem [shape: bf16[1024,128], index: 0, kind: input, shape index: {}]
  %s1 = inlined_call_operand.vmem [shape: bf16[1,1024], index: 1, kind: input, shape index: {}]
  %s2 = inlined_call_operand.<no memory space> [shape: f32[1,1], index: 2, kind: input, shape index: {}]
  %s3 = inlined_call_operand.vmem [shape: f32[1,128], index: 3, kind: output, shape index: {}]
  %s4 = sld [smem:[#allocation0]]
  $region22: #{nlayer_discriminator_forward.9} parent=0
    _
  %s6 = ssub.s32 1, %s4
  %s7 = scalar_select 0, %s6, %s4
  %v8 = vstv %s2
  %9 = vst [vmem:[#allocation2] sm:$0x1] %v8
  // Predicated region
  $region2: #{nlayer_discriminator_forward.9} parent=0 // pred_check
    _
  $region3: #{nlayer_discriminator_forward.9} parent=0 // pred_check_branch
    %11 = sbr.rel (0) target = $region5
  $region4: #{nlayer_discriminator_forward.9} parent=0 // pred_region
    _
  $region5: #{nlayer_discriminator_forward.9} parent=0 // pred_fallthru
    _
  // Predicated region
  $region6: #{nlayer_discriminator_forward.9} parent=0 // pred_check
    _
  $region7: #{nlayer_discriminator_forward.9} parent=0 // pred_check_branch
    %13 = sbr.rel (0) target = $region9
  $region8: #{nlayer_discriminator_forward.9} parent=0 // pred_region
    _
  $region9: #{nlayer_discriminator_forward.9} parent=0 // pred_fallthru
    _
  // Predicated region
  $region10: #{nlayer_discriminator_forward.9} parent=0 // pred_check
    _
  $region11: #{nlayer_discriminator_forward.9} parent=0 // pred_check_branch
    %15 = sbr.rel (0) target = $region13
  $region12: #{nlayer_discriminator_forward.9} parent=0 // pred_region
    _
  $region13: #{nlayer_discriminator_forward.9} parent=0 // pred_fallthru
    _
  %v17 = vld [vmem:[%s1] sm:$0xff]
  %v18 = vld [vmem:[%s0] sm:$0xf]
  %v19 = vld [vmem:[%s0 + $0x4] sm:$0xf]
  %v20 = vld [vmem:[%s0 + $0x8] sm:$0xf]
  %v21 = vld [vmem:[%s0 + $0xc] sm:$0xf]
  %v22 = vld [vmem:[%s0 + $0x10] sm:$0xf]
  %v23 = vld [vmem:[%s0 + $0x14] sm:$0xf]
  %v24 = vld [vmem:[%s0 + $0x18] sm:$0xf]
  %v25 = vld [vmem:[%s0 + $0x1c] sm:$0xf]
  %v26 = vld [vmem:[%s0 + $0x20] sm:$0xf]
  %v27 = vld [vmem:[%s0 + $0x24] sm:$0xf]
  %v28 = vld [vmem:[%s0 + $0x28] sm:$0xf]
  %v29 = vld [vmem:[%s0 + $0x2c] sm:$0xf]
  %v30 = vld [vmem:[%s0 + $0x30] sm:$0xf]
  %v31 = vld [vmem:[%s0 + $0x34] sm:$0xf]
  %v32 = vld [vmem:[%s0 + $0x38] sm:$0xf]
  %v33 = vld [vmem:[%s0 + $0x3c] sm:$0xf]
  %v34 = vld [vmem:[%s0 + $0x40] sm:$0xf]
  %v35 = vld [vmem:[%s0 + $0x44] sm:$0xf]
  %v36 = vld [vmem:[%s0 + $0x48] sm:$0xf]
  %v37 = vld [vmem:[%s0 + $0x4c] sm:$0xf]
  %v38 = vld [vmem:[%s0 + $0x50] sm:$0xf]
  %v39 = vld [vmem:[%s0 + $0x54] sm:$0xf]
  %v40 = vld [vmem:[%s0 + $0x58] sm:$0xf]
  %v41 = vld [vmem:[%s0 + $0x5c] sm:$0xf]
  %v42 = vld [vmem:[%s0 + $0x60] sm:$0xf]
  %v43 = vld [vmem:[%s0 + $0x64] sm:$0xf]
  %v44 = vld [vmem:[%s0 + $0x68] sm:$0xf]
  %v45 = vld [vmem:[%s0 + $0x6c] sm:$0xf]
  %v46 = vld [vmem:[%s0 + $0x70] sm:$0xf]
  %v47 = vld [vmem:[%s0 + $0x74] sm:$0xf]
  %v48 = vld [vmem:[%s0 + $0x78] sm:$0xf]
  %v49 = vld [vmem:[%s0 + $0x7c] sm:$0xf]
  %v50 = vld [vmem:[%s0 + $0x80] sm:$0xf]
  %v51 = vld [vmem:[%s0 + $0x84] sm:$0xf]
  %v52 = vld [vmem:[%s0 + $0x88] sm:$0xf]
  %v53 = vld [vmem:[%s0 + $0x8c] sm:$0xf]
  %v54 = vld [vmem:[%s0 + $0x90] sm:$0xf]
  %v55 = vld [vmem:[%s0 + $0x94] sm:$0xf]
  %v56 = vld [vmem:[%s0 + $0x98] sm:$0xf]
  %v57 = vld [vmem:[%s0 + $0x9c] sm:$0xf]
  %v58 = vld [vmem:[%s0 + $0xa0] sm:$0xf]
  %v59 = vld [vmem:[%s0 + $0xa4] sm:$0xf]
  %v60 = vld [vmem:[%s0 + $0xa8] sm:$0xf]
  %v61 = vld [vmem:[%s0 + $0xac] sm:$0xf]
  %v62 = vld [vmem:[%s0 + $0xb0] sm:$0xf]
  %v63 = vld [vmem:[%s0 + $0xb4] sm:$0xf]
  %v64 = vld [vmem:[%s0 + $0xb8] sm:$0xf]
  %v65 = vld [vmem:[%s0 + $0xbc] sm:$0xf]
  %v66 = vld [vmem:[%s0 + $0xc0] sm:$0xf]
  %v67 = vld [vmem:[%s0 + $0xc4] sm:$0xf]
  %v68 = vld [vmem:[%s0 + $0xc8] sm:$0xf]
  %v69 = vld [vmem:[%s0 + $0xcc] sm:$0xf]
  %v70 = vld [vmem:[%s0 + $0xd0] sm:$0xf]
  %v71 = vld [vmem:[%s0 + $0xd4] sm:$0xf]
  %v72 = vld [vmem:[%s0 + $0xd8] sm:$0xf]
  %v73 = vld [vmem:[%s0 + $0xdc] sm:$0xf]
  %v74 = vld [vmem:[%s0 + $0xe0] sm:$0xf]
  %v75 = vld [vmem:[%s0 + $0xe4] sm:$0xf]
  %v76 = vld [vmem:[%s0 + $0xe8] sm:$0xf]
  %v77 = vld [vmem:[%s0 + $0xec] sm:$0xf]
  %v78 = vld [vmem:[%s0 + $0xf0] sm:$0xf]
  %v79 = vld [vmem:[%s0 + $0xf4] sm:$0xf]
  %v80 = vld [vmem:[%s0 + $0xf8] sm:$0xf]
  %v81 = vld [vmem:[%s0 + $0xfc] sm:$0xf]
  %v82 = vld [vmem:[%s0 + $0x100] sm:$0xf]
  %v83 = vld [vmem:[%s0 + $0x104] sm:$0xf]
  %v84 = vld [vmem:[%s0 + $0x108] sm:$0xf]
  %v85 = vld [vmem:[%s0 + $0x10c] sm:$0xf]
  %v86 = vld [vmem:[%s0 + $0x110] sm:$0xf]
  %v87 = vld [vmem:[%s0 + $0x114] sm:$0xf]
  %v88 = vld [vmem:[%s0 + $0x118] sm:$0xf]
  %v89 = vld [vmem:[%s0 + $0x11c] sm:$0xf]
  %v90 = vld [vmem:[%s0 + $0x120] sm:$0xf]
  %v91 = vld [vmem:[%s0 + $0x124] sm:$0xf]
  %v92 = vld [vmem:[%s0 + $0x128] sm:$0xf]
  %v93 = vld [vmem:[%s0 + $0x12c] sm:$0xf]
  %v94 = vld [vmem:[%s0 + $0x130] sm:$0xf]
  %v95 = vld [vmem:[%s0 + $0x134] sm:$0xf]
  %v96 = vld [vmem:[%s0 + $0x138] sm:$0xf]
  %v97 = vld [vmem:[%s0 + $0x13c] sm:$0xf]
  %v98 = vld [vmem:[%s0 + $0x140] sm:$0xf]
  %v99 = vld [vmem:[%s0 + $0x144] sm:$0xf]
  %v100 = vld [vmem:[%s0 + $0x148] sm:$0xf]
  %v101 = vld [vmem:[%s0 + $0x14c] sm:$0xf]
  %v102 = vld [vmem:[%s0 + $0x150] sm:$0xf]
  %v103 = vld [vmem:[%s0 + $0x154] sm:$0xf]
  %v104 = vld [vmem:[%s0 + $0x158] sm:$0xf]
  %v105 = vld [vmem:[%s0 + $0x15c] sm:$0xf]
  %v106 = vld [vmem:[%s0 + $0x160] sm:$0xf]
  %v107 = vld [vmem:[%s0 + $0x164] sm:$0xf]
  %v108 = vld [vmem:[%s0 + $0x168] sm:$0xf]
  %v109 = vld [vmem:[%s0 + $0x16c] sm:$0xf]
  %v110 = vld [vmem:[%s0 + $0x170] sm:$0xf]
  %v111 = vld [vmem:[%s0 + $0x174] sm:$0xf]
  %v112 = vld [vmem:[%s0 + $0x178] sm:$0xf]
  %v113 = vld [vmem:[%s0 + $0x17c] sm:$0xf]
  %v114 = vld [vmem:[%s0 + $0x180] sm:$0xf]
  %v115 = vld [vmem:[%s0 + $0x184] sm:$0xf]
  %v116 = vld [vmem:[%s0 + $0x188] sm:$0xf]
  %v117 = vld [vmem:[%s0 + $0x18c] sm:$0xf]
  %v118 = vld [vmem:[%s0 + $0x190] sm:$0xf]
  %v119 = vld [vmem:[%s0 + $0x194] sm:$0xf]
  %v120 = vld [vmem:[%s0 + $0x198] sm:$0xf]
  %v121 = vld [vmem:[%s0 + $0x19c] sm:$0xf]
  %v122 = vld [vmem:[%s0 + $0x1a0] sm:$0xf]
  %v123 = vld [vmem:[%s0 + $0x1a4] sm:$0xf]
  %v124 = vld [vmem:[%s0 + $0x1a8] sm:$0xf]
  %v125 = vld [vmem:[%s0 + $0x1ac] sm:$0xf]
  %v126 = vld [vmem:[%s0 + $0x1b0] sm:$0xf]
  %v127 = vld [vmem:[%s0 + $0x1b4] sm:$0xf]
  %v128 = vld [vmem:[%s0 + $0x1b8] sm:$0xf]
  %v129 = vld [vmem:[%s0 + $0x1bc] sm:$0xf]
  %v130 = vld [vmem:[%s0 + $0x1c0] sm:$0xf]
  %v131 = vld [vmem:[%s0 + $0x1c4] sm:$0xf]
  %v132 = vld [vmem:[%s0 + $0x1c8] sm:$0xf]
  %v133 = vld [vmem:[%s0 + $0x1cc] sm:$0xf]
  %v134 = vld [vmem:[%s0 + $0x1d0] sm:$0xf]
  %v135 = vld [vmem:[%s0 + $0x1d4] sm:$0xf]
  %v136 = vld [vmem:[%s0 + $0x1d8] sm:$0xf]
  %v137 = vld [vmem:[%s0 + $0x1dc] sm:$0xf]
  %v138 = vld [vmem:[%s0 + $0x1e0] sm:$0xf]
  %v139 = vld [vmem:[%s0 + $0x1e4] sm:$0xf]
  %v140 = vld [vmem:[%s0 + $0x1e8] sm:$0xf]
  %v141 = vld [vmem:[%s0 + $0x1ec] sm:$0xf]
  %v142 = vld [vmem:[%s0 + $0x1f0] sm:$0xf]
  %v143 = vld [vmem:[%s0 + $0x1f4] sm:$0xf]
  %v144 = vld [vmem:[%s0 + $0x1f8] sm:$0xf]
  %v145 = vld [vmem:[%s0 + $0x1fc] sm:$0xf]
  %v146 = vld [vmem:[#allocation2] sm:$0x1]
  %148 = vset.pattern.permute.xlu0 0
  %149 = vperm.xlu0 %148, %v146
  %v150 = vpop.permute.xlu0 %149
  %v152 = vlaneseq
  %v153 = vshrl.u32 %v152, 7
  %v154 = vsub.s32 0, %v153
  %v155 = vrot.slane %v150, %v154
  %v157 = vcombine.high %v17, %v17
  %v159 = vunpack.c.l.s4 1966171168
  %v160 = vunpack.c.0.s8 %v159
  %v161 = vlaneseq
  %v162 = vshrl.u32 %v161, 7
  %v163 = vsub.s32 %v160, %v162
  %v164 = vrot.slane %v17, %v163
  %v166 = vunpack.c.l.s4 1966171168
  %v167 = vunpack.c.0.s8 %v166
  %v168 = vlaneseq
  %v169 = vshrl.u32 %v168, 7
  %v170 = vsub.s32 %v167, %v169
  %v171 = vrot.slane %v157, %v170
  %v172 = vcombine.high %v164, %v164
  %v173 = vcombine.high %v171, %v171
  %v175 = vunpack.c.l.s4 1966171168
  %v176 = vunpack.c.0.s8 %v175
  %v177 = vlaneseq
  %v178 = vshrl.u32 %v177, 7
  %v179 = vsub.s32 %v176, %v178
  %v180 = vrot.slane %v164, %v179
  %v182 = vunpack.c.l.s4 1966171168
  %v183 = vunpack.c.0.s8 %v182
  %v184 = vlaneseq
  %v185 = vshrl.u32 %v184, 7
  %v186 = vsub.s32 %v183, %v185
  %v187 = vrot.slane %v171, %v186
  %v189 = vunpack.c.l.s4 1966171168
  %v190 = vunpack.c.0.s8 %v189
  %v191 = vlaneseq
  %v192 = vshrl.u32 %v191, 7
  %v193 = vsub.s32 %v190, %v192
  %v194 = vrot.slane %v172, %v193
  %v196 = vunpack.c.l.s4 1966171168
  %v197 = vunpack.c.0.s8 %v196
  %v198 = vlaneseq
  %v199 = vshrl.u32 %v198, 7
  %v200 = vsub.s32 %v197, %v199
  %v201 = vrot.slane %v173, %v200
  %v202 = vcombine.high %v180, %v180
  %v203 = vcombine.high %v187, %v187
  %v204 = vcombine.high %v194, %v194
  %v205 = vcombine.high %v201, %v201
  %v342 = vunpack.c.l.b16 %v18
  %v343 = vunpack.c.l.b16 %v19
  %v344 = vunpack.c.l.b16 %v20
  %v345 = vunpack.c.l.b16 %v21
  %v346 = vunpack.c.l.b16 %v22
  %v347 = vunpack.c.l.b16 %v23
  %v348 = vunpack.c.l.b16 %v24
  %v349 = vunpack.c.l.b16 %v25
  %v350 = vunpack.c.l.b16 %v26
  %v351 = vunpack.c.l.b16 %v27
  %v352 = vunpack.c.l.b16 %v28
  %v353 = vunpack.c.l.b16 %v29
  %v354 = vunpack.c.l.b16 %v30
  %v355 = vunpack.c.l.b16 %v31
  %v356 = vunpack.c.l.b16 %v32
  %v357 = vunpack.c.l.b16 %v33
  %v358 = vunpack.c.l.b16 %v34
  %v359 = vunpack.c.l.b16 %v35
  %v360 = vunpack.c.l.b16 %v36
  %v361 = vunpack.c.l.b16 %v37
  %v362 = vunpack.c.l.b16 %v38
  %v363 = vunpack.c.l.b16 %v39
  %v364 = vunpack.c.l.b16 %v40
  %v365 = vunpack.c.l.b16 %v41
  %v366 = vunpack.c.l.b16 %v42
  %v367 = vunpack.c.l.b16 %v43
  %v368 = vunpack.c.l.b16 %v44
  %v369 = vunpack.c.l.b16 %v45
  %v370 = vunpack.c.l.b16 %v46
  %v371 = vunpack.c.l.b16 %v47
  %v372 = vunpack.c.l.b16 %v48
  %v373 = vunpack.c.l.b16 %v49
  %v374 = vunpack.c.l.b16 %v50
  %v375 = vunpack.c.l.b16 %v51
  %v376 = vunpack.c.l.b16 %v52
  %v377 = vunpack.c.l.b16 %v53
  %v378 = vunpack.c.l.b16 %v54
  %v379 = vunpack.c.l.b16 %v55
  %v380 = vunpack.c.l.b16 %v56
  %v381 = vunpack.c.l.b16 %v57
  %v382 = vunpack.c.l.b16 %v58
  %v383 = vunpack.c.l.b16 %v59
  %v384 = vunpack.c.l.b16 %v60
  %v385 = vunpack.c.l.b16 %v61
  %v386 = vunpack.c.l.b16 %v62
  %v387 = vunpack.c.l.b16 %v63
  %v388 = vunpack.c.l.b16 %v64
  %v389 = vunpack.c.l.b16 %v65
  %v390 = vunpack.c.l.b16 %v66
  %v391 = vunpack.c.l.b16 %v67
  %v392 = vunpack.c.l.b16 %v68
  %v393 = vunpack.c.l.b16 %v69
  %v394 = vunpack.c.l.b16 %v70
  %v395 = vunpack.c.l.b16 %v71
  %v396 = vunpack.c.l.b16 %v72
  %v397 = vunpack.c.l.b16 %v73
  %v398 = vunpack.c.l.b16 %v74
  %v399 = vunpack.c.l.b16 %v75
  %v400 = vunpack.c.l.b16 %v76
  %v401 = vunpack.c.l.b16 %v77
  %v402 = vunpack.c.l.b16 %v78
  %v403 = vunpack.c.l.b16 %v79
  %v404 = vunpack.c.l.b16 %v80
  %v405 = vunpack.c.l.b16 %v81
  %v406 = vunpack.c.l.b16 %v82
  %v407 = vunpack.c.l.b16 %v83
  %v408 = vunpack.c.l.b16 %v84
  %v409 = vunpack.c.l.b16 %v85
  %v410 = vunpack.c.l.b16 %v86
  %v411 = vunpack.c.l.b16 %v87
  %v412 = vunpack.c.l.b16 %v88
  %v413 = vunpack.c.l.b16 %v89
  %v414 = vunpack.c.l.b16 %v90
  %v415 = vunpack.c.l.b16 %v91
  %v416 = vunpack.c.l.b16 %v92
  %v417 = vunpack.c.l.b16 %v93
  %v418 = vunpack.c.l.b16 %v94
  %v419 = vunpack.c.l.b16 %v95
  %v420 = vunpack.c.l.b16 %v96
  %v421 = vunpack.c.l.b16 %v97
  %v422 = vunpack.c.l.b16 %v98
  %v423 = vunpack.c.l.b16 %v99
  %v424 = vunpack.c.l.b16 %v100
  %v425 = vunpack.c.l.b16 %v101
  %v426 = vunpack.c.l.b16 %v102
  %v427 = vunpack.c.l.b16 %v103
  %v428 = vunpack.c.l.b16 %v104
  %v429 = vunpack.c.l.b16 %v105
  %v430 = vunpack.c.l.b16 %v106
  %v431 = vunpack.c.l.b16 %v107
  %v432 = vunpack.c.l.b16 %v108
  %v433 = vunpack.c.l.b16 %v109
  %v434 = vunpack.c.l.b16 %v110
  %v435 = vunpack.c.l.b16 %v111
  %v436 = vunpack.c.l.b16 %v112
  %v437 = vunpack.c.l.b16 %v113
  %v438 = vunpack.c.l.b16 %v114
  %v439 = vunpack.c.l.b16 %v115
  %v440 = vunpack.c.l.b16 %v116
  %v441 = vunpack.c.l.b16 %v117
  %v442 = vunpack.c.l.b16 %v118
  %v443 = vunpack.c.l.b16 %v119
  %v444 = vunpack.c.l.b16 %v120
  %v445 = vunpack.c.l.b16 %v121
  %v446 = vunpack.c.l.b16 %v122
  %v447 = vunpack.c.l.b16 %v123
  %v448 = vunpack.c.l.b16 %v124
  %v449 = vunpack.c.l.b16 %v125
  %v450 = vunpack.c.l.b16 %v126
  %v451 = vunpack.c.l.b16 %v127
  %v452 = vunpack.c.l.b16 %v128
  %v453 = vunpack.c.l.b16 %v129
  %v454 = vunpack.c.l.b16 %v130
  %v455 = vunpack.c.l.b16 %v131
  %v456 = vunpack.c.l.b16 %v132
  %v457 = vunpack.c.l.b16 %v133
  %v458 = vunpack.c.l.b16 %v134
  %v459 = vunpack.c.l.b16 %v135
  %v460 = vunpack.c.l.b16 %v136
  %v461 = vunpack.c.l.b16 %v137
  %v462 = vunpack.c.l.b16 %v138
  %v463 = vunpack.c.l.b16 %v139
  %v464 = vunpack.c.l.b16 %v140
  %v465 = vunpack.c.l.b16 %v141
  %v466 = vunpack.c.l.b16 %v142
  %v467 = vunpack.c.l.b16 %v143
  %v468 = vunpack.c.l.b16 %v144
  %v469 = vunpack.c.l.b16 %v145
  %v470 = vpack.c.b16 %v343, %v342
  %v471 = vpack.c.b16 %v345, %v344
  %v472 = vpack.c.b16 %v347, %v346
  %v473 = vpack.c.b16 %v349, %v348
  %v474 = vpack.c.b16 %v351, %v350
  %v475 = vpack.c.b16 %v353, %v352
  %v476 = vpack.c.b16 %v355, %v354
  %v477 = vpack.c.b16 %v357, %v356
  %v478 = vpack.c.b16 %v359, %v358
  %v479 = vpack.c.b16 %v361, %v360
  %v480 = vpack.c.b16 %v363, %v362
  %v481 = vpack.c.b16 %v365, %v364
  %v482 = vpack.c.b16 %v367, %v366
  %v483 = vpack.c.b16 %v369, %v368
  %v484 = vpack.c.b16 %v371, %v370
  %v485 = vpack.c.b16 %v373, %v372
  %v486 = vpack.c.b16 %v375, %v374
  %v487 = vpack.c.b16 %v377, %v376
  %v488 = vpack.c.b16 %v379, %v378
  %v489 = vpack.c.b16 %v381, %v380
  %v490 = vpack.c.b16 %v383, %v382
  %v491 = vpack.c.b16 %v385, %v384
  %v492 = vpack.c.b16 %v387, %v386
  %v493 = vpack.c.b16 %v389, %v388
  %v494 = vpack.c.b16 %v391, %v390
  %v495 = vpack.c.b16 %v393, %v392
  %v496 = vpack.c.b16 %v395, %v394
  %v497 = vpack.c.b16 %v397, %v396
  %v498 = vpack.c.b16 %v399, %v398
  %v499 = vpack.c.b16 %v401, %v400
  %v500 = vpack.c.b16 %v403, %v402
  %v501 = vpack.c.b16 %v405, %v404
  %v502 = vpack.c.b16 %v407, %v406
  %v503 = vpack.c.b16 %v409, %v408
  %v504 = vpack.c.b16 %v411, %v410
  %v505 = vpack.c.b16 %v413, %v412
  %v506 = vpack.c.b16 %v415, %v414
  %v507 = vpack.c.b16 %v417, %v416
  %v508 = vpack.c.b16 %v419, %v418
  %v509 = vpack.c.b16 %v421, %v420
  %v510 = vpack.c.b16 %v423, %v422
  %v511 = vpack.c.b16 %v425, %v424
  %v512 = vpack.c.b16 %v427, %v426
  %v513 = vpack.c.b16 %v429, %v428
  %v514 = vpack.c.b16 %v431, %v430
  %v515 = vpack.c.b16 %v433, %v432
  %v516 = vpack.c.b16 %v435, %v434
  %v517 = vpack.c.b16 %v437, %v436
  %v518 = vpack.c.b16 %v439, %v438
  %v519 = vpack.c.b16 %v441, %v440
  %v520 = vpack.c.b16 %v443, %v442
  %v521 = vpack.c.b16 %v445, %v444
  %v522 = vpack.c.b16 %v447, %v446
  %v523 = vpack.c.b16 %v449, %v448
  %v524 = vpack.c.b16 %v451, %v450
  %v525 = vpack.c.b16 %v453, %v452
  %v526 = vpack.c.b16 %v455, %v454
  %v527 = vpack.c.b16 %v457, %v456
  %v528 = vpack.c.b16 %v459, %v458
  %v529 = vpack.c.b16 %v461, %v460
  %v530 = vpack.c.b16 %v463, %v462
  %v531 = vpack.c.b16 %v465, %v464
  %v532 = vpack.c.b16 %v467, %v466
  %v533 = vpack.c.b16 %v469, %v468
  %598 = vmatprep.subr.bf16.mxu0 0
  %599 = vmatpush1.bf16.msra.mxu0 %v477
  %600 = vmatprep.subr.bf16.mxu0 0
  %601 = vmatpush1.bf16.msra.mxu0 %v476
  %602 = vmatprep.subr.bf16.mxu0 0
  %603 = vmatpush1.bf16.msra.mxu0 %v475
  %604 = vmatprep.subr.bf16.mxu0 0
  %605 = vmatpush1.bf16.msra.mxu0 %v474
  %606 = vmatprep.subr.bf16.mxu0 0
  %607 = vmatpush1.bf16.msra.mxu0 %v473
  %608 = vmatprep.subr.bf16.mxu0 0
  %609 = vmatpush1.bf16.msra.mxu0 %v472
  %610 = vmatprep.subr.bf16.mxu0 0
  %611 = vmatpush1.bf16.msra.mxu0 %v471
  %612 = vmatprep.subr.bf16.mxu0 0
  %613 = vmatpush1.bf16.msra.mxu0 %v470
  %614 = vmatprep.subr.bf16.mxu0 0
  %615 = vmatpush2.bf16.msra.mxu0 %v485
  %616 = vmatprep.subr.bf16.mxu0 0
  %617 = vmatpush2.bf16.msra.mxu0 %v484
  %618 = vmatprep.subr.bf16.mxu0 0
  %619 = vmatpush2.bf16.msra.mxu0 %v483
  %620 = vmatprep.subr.bf16.mxu0 0
  %621 = vmatpush2.bf16.msra.mxu0 %v482
  %622 = vmatprep.subr.bf16.mxu0 0
  %623 = vmatpush2.bf16.msra.mxu0 %v481
  %624 = vmatprep.subr.bf16.mxu0 0
  %625 = vmatpush2.bf16.msra.mxu0 %v480
  %626 = vmatprep.subr.bf16.mxu0 0
  %627 = vmatpush2.bf16.msra.mxu0 %v479
  %628 = vmatprep.subr.bf16.mxu0 0
  %629 = vmatpush2.bf16.msra.mxu0 %v478
  %630 = vmatprep.mubr.bf16.mxu0 %v194
  %631 = vmatmul.mubr.bf16.gmra.mxu0 %v180
  %v632 = vpop.f32.mrf.mxu0
  %v633 = vadd.f32 %v155, %v632
  %v634 = vpop.f32.mrf.mxu0
  %v635 = vpop.f32.mrf.mxu0
  %v636 = vpop.f32.mrf.mxu0
  %637 = vdwg.mxu0
  %638 = vmatprep.subr.bf16.mxu0 0
  %639 = vmatpush1.bf16.msra.mxu0 %v493
  %640 = vmatprep.subr.bf16.mxu0 0
  %641 = vmatpush1.bf16.msra.mxu0 %v492
  %642 = vmatprep.subr.bf16.mxu0 0
  %643 = vmatpush1.bf16.msra.mxu0 %v491
  %644 = vmatprep.subr.bf16.mxu0 0
  %645 = vmatpush1.bf16.msra.mxu0 %v490
  %646 = vmatprep.subr.bf16.mxu0 0
  %647 = vmatpush1.bf16.msra.mxu0 %v489
  %648 = vmatprep.subr.bf16.mxu0 0
  %649 = vmatpush1.bf16.msra.mxu0 %v488
  %650 = vmatprep.subr.bf16.mxu0 0
  %651 = vmatpush1.bf16.msra.mxu0 %v487
  %652 = vmatprep.subr.bf16.mxu0 0
  %653 = vmatpush1.bf16.msra.mxu0 %v486
  %654 = vmatprep.subr.bf16.mxu0 0
  %655 = vmatpush2.bf16.msra.mxu0 %v501
  %656 = vmatprep.subr.bf16.mxu0 0
  %657 = vmatpush2.bf16.msra.mxu0 %v500
  %658 = vmatprep.subr.bf16.mxu0 0
  %659 = vmatpush2.bf16.msra.mxu0 %v499
  %660 = vmatprep.subr.bf16.mxu0 0
  %661 = vmatpush2.bf16.msra.mxu0 %v498
  %662 = vmatprep.subr.bf16.mxu0 0
  %663 = vmatpush2.bf16.msra.mxu0 %v497
  %664 = vmatprep.subr.bf16.mxu0 0
  %665 = vmatpush2.bf16.msra.mxu0 %v496
  %666 = vmatprep.subr.bf16.mxu0 0
  %667 = vmatpush2.bf16.msra.mxu0 %v495
  %668 = vmatprep.subr.bf16.mxu0 0
  %669 = vmatpush2.bf16.msra.mxu0 %v494
  %670 = vmatprep.mubr.bf16.mxu0 %v204
  %671 = vmatmul.mubr.bf16.gmra.mxu0 %v202
  %v672 = vpop.f32.mrf.mxu0
  %v673 = vadd.f32 %v633, %v672
  %v674 = vpop.f32.mrf.mxu0
  %v675 = vpop.f32.mrf.mxu0
  %v676 = vpop.f32.mrf.mxu0
  %677 = vdwg.mxu0
  %678 = vmatprep.subr.bf16.mxu0 0
  %679 = vmatpush1.bf16.msra.mxu0 %v509
  %680 = vmatprep.subr.bf16.mxu0 0
  %681 = vmatpush1.bf16.msra.mxu0 %v508
  %682 = vmatprep.subr.bf16.mxu0 0
  %683 = vmatpush1.bf16.msra.mxu0 %v507
  %684 = vmatprep.subr.bf16.mxu0 0
  %685 = vmatpush1.bf16.msra.mxu0 %v506
  %686 = vmatprep.subr.bf16.mxu0 0
  %687 = vmatpush1.bf16.msra.mxu0 %v505
  %688 = vmatprep.subr.bf16.mxu0 0
  %689 = vmatpush1.bf16.msra.mxu0 %v504
  %690 = vmatprep.subr.bf16.mxu0 0
  %691 = vmatpush1.bf16.msra.mxu0 %v503
  %692 = vmatprep.subr.bf16.mxu0 0
  %693 = vmatpush1.bf16.msra.mxu0 %v502
  %694 = vmatprep.subr.bf16.mxu0 0
  %695 = vmatpush2.bf16.msra.mxu0 %v517
  %696 = vmatprep.subr.bf16.mxu0 0
  %697 = vmatpush2.bf16.msra.mxu0 %v516
  %698 = vmatprep.subr.bf16.mxu0 0
  %699 = vmatpush2.bf16.msra.mxu0 %v515
  %700 = vmatprep.subr.bf16.mxu0 0
  %701 = vmatpush2.bf16.msra.mxu0 %v514
  %702 = vmatprep.subr.bf16.mxu0 0
  %703 = vmatpush2.bf16.msra.mxu0 %v513
  %704 = vmatprep.subr.bf16.mxu0 0
  %705 = vmatpush2.bf16.msra.mxu0 %v512
  %706 = vmatprep.subr.bf16.mxu0 0
  %707 = vmatpush2.bf16.msra.mxu0 %v511
  %708 = vmatprep.subr.bf16.mxu0 0
  %709 = vmatpush2.bf16.msra.mxu0 %v510
  %710 = vmatprep.mubr.bf16.mxu0 %v201
  %711 = vmatmul.mubr.bf16.gmra.mxu0 %v187
  %v712 = vpop.f32.mrf.mxu0
  %v713 = vadd.f32 %v673, %v712
  %v714 = vpop.f32.mrf.mxu0
  %v715 = vpop.f32.mrf.mxu0
  %v716 = vpop.f32.mrf.mxu0
  %717 = vdwg.mxu0
  %718 = vmatprep.subr.bf16.mxu0 0
  %719 = vmatpush1.bf16.msra.mxu0 %v525
  %720 = vmatprep.subr.bf16.mxu0 0
  %721 = vmatpush1.bf16.msra.mxu0 %v524
  %722 = vmatprep.subr.bf16.mxu0 0
  %723 = vmatpush1.bf16.msra.mxu0 %v523
  %724 = vmatprep.subr.bf16.mxu0 0
  %725 = vmatpush1.bf16.msra.mxu0 %v522
  %726 = vmatprep.subr.bf16.mxu0 0
  %727 = vmatpush1.bf16.msra.mxu0 %v521
  %728 = vmatprep.subr.bf16.mxu0 0
  %729 = vmatpush1.bf16.msra.mxu0 %v520
  %730 = vmatprep.subr.bf16.mxu0 0
  %731 = vmatpush1.bf16.msra.mxu0 %v519
  %732 = vmatprep.subr.bf16.mxu0 0
  %733 = vmatpush1.bf16.msra.mxu0 %v518
  %734 = vmatprep.subr.bf16.mxu0 0
  %735 = vmatpush2.bf16.msra.mxu0 %v533
  %736 = vmatprep.subr.bf16.mxu0 0
  %737 = vmatpush2.bf16.msra.mxu0 %v532
  %738 = vmatprep.subr.bf16.mxu0 0
  %739 = vmatpush2.bf16.msra.mxu0 %v531
  %740 = vmatprep.subr.bf16.mxu0 0
  %741 = vmatpush2.bf16.msra.mxu0 %v530
  %742 = vmatprep.subr.bf16.mxu0 0
  %743 = vmatpush2.bf16.msra.mxu0 %v529
  %744 = vmatprep.subr.bf16.mxu0 0
  %745 = vmatpush2.bf16.msra.mxu0 %v528
  %746 = vmatprep.subr.bf16.mxu0 0
  %747 = vmatpush2.bf16.msra.mxu0 %v527
  %748 = vmatprep.subr.bf16.mxu0 0
  %749 = vmatpush2.bf16.msra.mxu0 %v526
  %750 = vmatprep.mubr.bf16.mxu0 %v205
  %751 = vmatmul.mubr.bf16.gmra.mxu0 %v203
  %v752 = vpop.f32.mrf.mxu0
  %v753 = vadd.f32 %v713, %v752
  %v754 = vpop.f32.mrf.mxu0
  %v755 = vpop.f32.mrf.mxu0
  %v756 = vpop.f32.mrf.mxu0
  %757 = vdwg.mxu0
  %758 = vst [vmem:[%s3] sm:$0x1] %v753
  // Predicated region
  $region14: #{nlayer_discriminator_forward.9} parent=0 // pred_check
    _
  $region15: #{nlayer_discriminator_forward.9} parent=0 // pred_check_branch
    %760 = sbr.rel (0) target = $region17
  $region16: #{nlayer_discriminator_forward.9} parent=0 // pred_region
    _
  $region17: #{nlayer_discriminator_forward.9} parent=0 // pred_fallthru
    _
  // Predicated region
  $region18: #{nlayer_discriminator_forward.9} parent=0 // pred_check
    _
  $region19: #{nlayer_discriminator_forward.9} parent=0 // pred_check_branch
    %762 = sbr.rel (0) target = $region21
  $region20: #{nlayer_discriminator_forward.9} parent=0 // pred_region
    _
  $region21: #{nlayer_discriminator_forward.9} parent=0 // pred_fallthru
    _

</llo_original>
